<compile_context>
chip_gen: v5e
topology: v5e:2x2
jax: 0.10.0
libtpu: 0.0.40
codegen_flags: <defaults>
</compile_context>

<pallas_src>
import functools
import math

import jax
import jax.numpy as jnp
from jax import lax
from jax.experimental import pallas as pl
from jax.experimental.pallas import tpu as pltpu


# ----------------------------- Pallas kernel --------------------------------
def fused_lstm_encoder_kernel(*refs, n_layers, seq_len, batch_tile, hidden):
    """All LSTM layers fused and wavefront-pipelined over one diagonal loop.

    refs = (x,                                     # (S, BT, F) time-major block
            [w_ih_t, w_hh_t, bias] * n_layers,     # weights (replicated per tile)
            out, hid, cell)                        # outputs for this batch tile
    """
    S, BT, H, L = seq_len, batch_tile, hidden, n_layers
    f32 = jnp.float32
    x_ref = refs[0]
    w_refs = refs[1:1 + 3 * L]
    out_ref, hid_ref, cell_ref = refs[1 + 3 * L:4 + 3 * L]

    def wih(l):
        return w_refs[3 * l][...]

    def whh(l):
        return w_refs[3 * l + 1][...]

    def bias(l):
        return w_refs[3 * l + 2][...]

    # Hoisted layer-0 input projection (+ fused bias) for ALL timesteps: one
    # (S*BT, F) @ (F, 4H) MXU matmul off the recurrent critical path.  The
    # (S, BT, F) -> (S*BT, F) reshape is layout-free because BT is a multiple
    # of the f32 sublane count (8).  Kept as a value (no VMEM scratch round
    # trip); fall back to a VMEM scratch only if S*BT*4H outgrows vregs/VMEM.
    gx0 = jnp.dot(x_ref[...].astype(f32).reshape(S * BT, -1), wih(0),
                  preferred_element_type=f32) + bias(0)

    h = [jnp.zeros((BT, H), f32) for _ in range(L)]
    c = [jnp.zeros((BT, H), f32) for _ in range(L)]
    ys = []

    # Wavefront: at diagonal step s, layer l (if active) processes t = s - l.
    # Layer l's input at time t is layer l-1's output at time t, which is
    # exactly h[l-1] as left by the PREVIOUS diagonal step; reading from the
    # old (h, c) lists and committing into (h_new, c_new) keeps that snapshot.
    # TODO(synk): for large S, switch to lax.fori_loop(unroll=True) with
    # pl.multiple_of'd dynamic slices to bound vreg live ranges.
    for s in range(S + L - 1):
        h_new, c_new = list(h), list(c)
        for l in range(L):
            t = s - l
            if t < 0 or t >= S:
                continue
            if l == 0:
                gates = gx0[t * BT:(t + 1) * BT, :] + jnp.dot(
                    h[0], whh(0), preferred_element_type=f32)
            else:
                gates = (bias(l)
                         + jnp.dot(h[l - 1], wih(l), preferred_element_type=f32)
                         + jnp.dot(h[l], whh(l), preferred_element_type=f32))
            # Full-vreg transcendentals (gates is exactly (BT, 4H) wide),
            # then slice the i|f|g|o lane quarters.
            sg = jax.nn.sigmoid(gates)
            tg = jnp.tanh(gates)
            i_g = sg[:, 0 * H:1 * H]
            f_g = sg[:, 1 * H:2 * H]
            g_g = tg[:, 2 * H:3 * H]
            o_g = sg[:, 3 * H:4 * H]
            c_t = f_g * c[l] + i_g * g_g
            h_t = o_g * jnp.tanh(c_t)
            h_new[l], c_new[l] = h_t, c_t
            if l == L - 1:
                ys.append(h_t)          # accumulate for one batched store
        h, c = h_new, c_new

    # Single lane-dense (BT, S*H) store for the whole output sequence.
    out_ref[...] = jnp.concatenate(ys, axis=1).astype(out_ref.dtype)
    for l in range(L):
        hid_ref[l] = h[l].astype(hid_ref.dtype)
        cell_ref[l] = c[l].astype(cell_ref.dtype)


# ------------------------------ Encoder wrapper ------------------------------
def _round_up(n, m):
    return ((n + m - 1) // m) * m


def _pick_batch_tile(bp):
    """Batch tile: >=2 sublane-aligned tiles when possible (v7x dual-TC
    'parallel' split); larger tiles fill more MXU rows on v6e/v7x."""
    if bp <= 8:
        return bp
    for bt in (128, 64, 32, 16, 8):
        if bp % bt == 0 and bp // bt >= 2:
            return bt
    return 8


def init_encoder_params(key, n_features, hidden_dim, n_layers):
    """PyTorch-style uniform(-1/sqrt(H), 1/sqrt(H)) init; gate order [i,f,g,o]."""
    k = 1.0 / math.sqrt(hidden_dim)
    params = []
    for layer in range(n_layers):
        in_dim = n_features if layer == 0 else hidden_dim
        key, k1, k2, k3, k4 = jax.random.split(key, 5)
        w_ih = jax.random.uniform(k1, (4 * hidden_dim, in_dim), jnp.float32, -k, k)
        w_hh = jax.random.uniform(k2, (4 * hidden_dim, hidden_dim), jnp.float32, -k, k)
        b_ih = jax.random.uniform(k3, (4 * hidden_dim,), jnp.float32, -k, k)
        b_hh = jax.random.uniform(k4, (4 * hidden_dim,), jnp.float32, -k, k)
        params.append(dict(w_ih=w_ih, w_hh=w_hh, b_ih=b_ih, b_hh=b_hh))
    return params


@jax.jit
def encoder_forward(x, params):
    """x: (batch, seq, n_features) batch-first, as in the PyTorch module."""
    B, S, F = x.shape
    L = len(params)
    H = params[0]["w_hh"].shape[1]
    Bp = _round_up(max(B, 8), 8)          # pad batch to f32 sublane count
    BT = _pick_batch_tile(Bp)
    nbt = Bp // BT

    # time-major, batch-padded: (S, Bp, F)
    x_tm = jnp.transpose(x, (1, 0, 2))
    if Bp != B:
        x_tm = jnp.pad(x_tm, ((0, 0), (0, Bp - B), (0, 0)))

    inputs = [x_tm]
    in_specs = [pl.BlockSpec((S, BT, F), lambda b: (0, b, 0))]
    for p in params:
        Din = p["w_ih"].shape[1]
        inputs += [p["w_ih"].T,                                   # (Din, 4H)
                   p["w_hh"].T,                                   # (H, 4H)
                   (p["b_ih"] + p["b_hh"]).reshape(1, 4 * H)]     # fused bias
        in_specs += [
            pl.BlockSpec((Din, 4 * H), lambda b: (0, 0)),
            pl.BlockSpec((H, 4 * H), lambda b: (0, 0)),
            pl.BlockSpec((1, 4 * H), lambda b: (0, 0)),
        ]

    out_shapes = (
        jax.ShapeDtypeStruct((Bp, S * H), x.dtype),   # lane-dense output slab
        jax.ShapeDtypeStruct((L, Bp, H), x.dtype),    # h_N per layer
        jax.ShapeDtypeStruct((L, Bp, H), x.dtype),    # c_N per layer
    )
    out_specs = [
        pl.BlockSpec((BT, S * H), lambda b: (b, 0)),
        pl.BlockSpec((L, BT, H), lambda b: (0, b, 0)),
        pl.BlockSpec((L, BT, H), lambda b: (0, b, 0)),
    ]

    grid_spec = pltpu.PrefetchScalarGridSpec(
        num_scalar_prefetch=0,
        grid=(nbt,),                                  # parallel batch tiles
        in_specs=in_specs,
        out_specs=out_specs,
    )

    out_flat, hid_p, cell_p = pl.pallas_call(
        functools.partial(fused_lstm_encoder_kernel,
                          n_layers=L, seq_len=S, batch_tile=BT, hidden=H),
        out_shape=out_shapes,
        grid_spec=grid_spec,
        compiler_params=pltpu.CompilerParams(
            dimension_semantics=("parallel",)),
    )(*inputs)

    # (Bp, S*H) -> (B, S, H): lane dim splits directly into (S, H); no transpose.
    outputs = out_flat.reshape(Bp, S, H)[:B]
    hidden = hid_p[:, :B, :]
    cell = cell_p[:, :B, :]
    return outputs, hidden, cell


# ------------------------------ pure-JAX reference ---------------------------
def encoder_ref(x, params):
    """Standard sequential multi-layer LSTM (mathematically identical)."""
    B, S, F = x.shape
    layer_in = jnp.transpose(x, (1, 0, 2))            # (S, B, F)
    h_list, c_list = [], []
    for p in params:
        H = p["w_hh"].shape[1]
        wih_t, whh_t = p["w_ih"].T, p["w_hh"].T
        bias = (p["b_ih"] + p["b_hh"])[None, :]
        gx = jnp.einsum("sbf,fg->sbg", layer_in, wih_t) + bias

        def step(carry, gx_t):
            h, c = carry
            gates = gx_t + jnp.dot(h, whh_t)
            i = jax.nn.sigmoid(gates[:, 0 * H:1 * H])
            f = jax.nn.sigmoid(gates[:, 1 * H:2 * H])
            g = jnp.tanh(gates[:, 2 * H:3 * H])
            o = jax.nn.sigmoid(gates[:, 3 * H:4 * H])
            c_new = f * c + i * g
            h_new = o * jnp.tanh(c_new)
            return (h_new, c_new), h_new

        (h_n, c_n), out_tm = lax.scan(
            step,
            (jnp.zeros((B, H), jnp.float32), jnp.zeros((B, H), jnp.float32)),
            gx)
        h_list.append(h_n)
        c_list.append(c_n)
        layer_in = out_tm
    return (jnp.transpose(layer_in, (1, 0, 2)),
            jnp.stack(h_list, 0), jnp.stack(c_list, 0))


# ----------------------------------- main ------------------------------------
if __name__ == "__main__":
    B, S, F, H, L = 4, 8, 16, 32, 3   # batch, seq, n_features, embedding_dim, n_layers

    key = jax.random.PRNGKey(0)
    key, kx = jax.random.split(key)
    x = jax.random.normal(kx, (B, S, F), dtype=jnp.float32)
    params = init_encoder_params(key, F, H, L)

    outputs, hidden, cell = encoder_forward(x, params)
    jax.block_until_ready((outputs, hidden, cell))

    # sanity check against pure-JAX reference (tolerance sized for
    # default-precision MXU matmuls compounding over the recurrence)
    o_ref, h_ref, c_ref = encoder_ref(x, params)
    assert outputs.shape == (B, S, H)
    assert hidden.shape == (L, B, H) and cell.shape == (L, B, H)
    assert jnp.allclose(outputs, o_ref, atol=5e-3, rtol=5e-3)
    assert jnp.allclose(hidden, h_ref, atol=5e-3, rtol=5e-3)
    assert jnp.allclose(cell, c_ref, atol=5e-3, rtol=5e-3)

    print("KERNEL_OK")
</pallas_src>

<mosaic_0001>
module attributes {stable_mosaic.version = 11 : i64} {
  func.func @fused_lstm_encoder_kernel(%arg0: i32, %arg1: memref<8x8x16xf32, #tpu.memory_space<vmem>>, %arg2: memref<16x128xf32, #tpu.memory_space<vmem>>, %arg3: memref<32x128xf32, #tpu.memory_space<vmem>>, %arg4: memref<1x128xf32, #tpu.memory_space<vmem>>, %arg5: memref<32x128xf32, #tpu.memory_space<vmem>>, %arg6: memref<32x128xf32, #tpu.memory_space<vmem>>, %arg7: memref<1x128xf32, #tpu.memory_space<vmem>>, %arg8: memref<32x128xf32, #tpu.memory_space<vmem>>, %arg9: memref<32x128xf32, #tpu.memory_space<vmem>>, %arg10: memref<1x128xf32, #tpu.memory_space<vmem>>, %arg11: memref<8x256xf32, #tpu.memory_space<vmem>>, %arg12: memref<3x8x32xf32, #tpu.memory_space<vmem>>, %arg13: memref<3x8x32xf32, #tpu.memory_space<vmem>>) attributes {dimension_semantics = [#tpu.dimension_semantics<parallel>], iteration_bounds = array<i64: 1>, scalar_prefetch = 0 : i64, scratch_operands = 0 : i64, tpu.core_type = #tpu.core_type<tc>, window_params = [{transform_indices = @transform_0, window_bounds = array<i64: 8, 8, 16>}, {pipeline_mode = #tpu.pipeline_mode<synchronous>, transform_indices = @transform_1, window_bounds = array<i64: 16, 128>}, {pipeline_mode = #tpu.pipeline_mode<synchronous>, transform_indices = @transform_2, window_bounds = array<i64: 32, 128>}, {pipeline_mode = #tpu.pipeline_mode<synchronous>, transform_indices = @transform_3, window_bounds = array<i64: 1, 128>}, {pipeline_mode = #tpu.pipeline_mode<synchronous>, transform_indices = @transform_4, window_bounds = array<i64: 32, 128>}, {pipeline_mode = #tpu.pipeline_mode<synchronous>, transform_indices = @transform_5, window_bounds = array<i64: 32, 128>}, {pipeline_mode = #tpu.pipeline_mode<synchronous>, transform_indices = @transform_6, window_bounds = array<i64: 1, 128>}, {pipeline_mode = #tpu.pipeline_mode<synchronous>, transform_indices = @transform_7, window_bounds = array<i64: 32, 128>}, {pipeline_mode = #tpu.pipeline_mode<synchronous>, transform_indices = @transform_8, window_bounds = array<i64: 32, 128>}, {pipeline_mode = #tpu.pipeline_mode<synchronous>, transform_indices = @transform_9, window_bounds = array<i64: 1, 128>}, {transform_indices = @transform_10, window_bounds = array<i64: 8, 256>}, {transform_indices = @transform_11, window_bounds = array<i64: 3, 8, 32>}, {transform_indices = @transform_12, window_bounds = array<i64: 3, 8, 32>}]} {
    %c0 = arith.constant 0 : index
    %c0_0 = arith.constant 0 : index
    %c0_1 = arith.constant 0 : index
    %0 = vector.load %arg1[%c0, %c0_0, %c0_1] : memref<8x8x16xf32, #tpu.memory_space<vmem>>, vector<8x8x16xf32>
    %1 = vector.shape_cast %0 : vector<8x8x16xf32> to vector<64x16xf32>
    %c0_2 = arith.constant 0 : index
    %c0_3 = arith.constant 0 : index
    %2 = vector.load %arg2[%c0_2, %c0_3] : memref<16x128xf32, #tpu.memory_space<vmem>>, vector<16x128xf32>
    %cst = arith.constant dense<0.000000e+00> : vector<64x128xf32>
    %3 = tpu.matmul %1, %2, %cst {dimension_numbers = #tpu.dot_dimension_numbers<[1], [0], [0], [1], [0, 0, 1, 1], [], []>} : vector<64x16xf32>, vector<16x128xf32>, vector<64x128xf32> -> vector<64x128xf32>
    %c0_4 = arith.constant 0 : index
    %c0_5 = arith.constant 0 : index
    %4 = vector.load %arg4[%c0_4, %c0_5] : memref<1x128xf32, #tpu.memory_space<vmem>>, vector<1x128xf32>
    %5 = vector.broadcast %4 : vector<1x128xf32> to vector<64x128xf32>
    %6 = arith.addf %3, %5 : vector<64x128xf32>
    %cst_6 = arith.constant 0.000000e+00 : f32
    %7 = vector.broadcast %cst_6 : f32 to vector<8x32xf32>
    %cst_7 = arith.constant 0.000000e+00 : f32
    %8 = vector.broadcast %cst_7 : f32 to vector<8x32xf32>
    %cst_8 = arith.constant 0.000000e+00 : f32
    %9 = vector.broadcast %cst_8 : f32 to vector<8x32xf32>
    %cst_9 = arith.constant 0.000000e+00 : f32
    %10 = vector.broadcast %cst_9 : f32 to vector<8x32xf32>
    %cst_10 = arith.constant 0.000000e+00 : f32
    %11 = vector.broadcast %cst_10 : f32 to vector<8x32xf32>
    %cst_11 = arith.constant 0.000000e+00 : f32
    %12 = vector.broadcast %cst_11 : f32 to vector<8x32xf32>
    %13 = vector.extract_strided_slice %6 {offsets = [0, 0], sizes = [8, 128], strides = [1, 1]} : vector<64x128xf32> to vector<8x128xf32>
    %c0_12 = arith.constant 0 : index
    %c0_13 = arith.constant 0 : index
    %14 = vector.load %arg3[%c0_12, %c0_13] : memref<32x128xf32, #tpu.memory_space<vmem>>, vector<32x128xf32>
    %cst_14 = arith.constant dense<0.000000e+00> : vector<8x128xf32>
    %15 = tpu.matmul %7, %14, %cst_14 {dimension_numbers = #tpu.dot_dimension_numbers<[1], [0], [0], [1], [0, 0, 1, 1], [], []>} : vector<8x32xf32>, vector<32x128xf32>, vector<8x128xf32> -> vector<8x128xf32>
    %16 = arith.addf %13, %15 : vector<8x128xf32>
    %17 = arith.negf %16 : vector<8x128xf32>
    %18 = math.exp %17 : vector<8x128xf32>
    %cst_15 = arith.constant 1.000000e+00 : f32
    %19 = vector.broadcast %cst_15 : f32 to vector<8x128xf32>
    %20 = arith.addf %19, %18 : vector<8x128xf32>
    %21 = arith.divf %19, %20 : vector<8x128xf32>
    %22 = math.tanh %16 : vector<8x128xf32>
    %23 = vector.extract_strided_slice %21 {offsets = [0, 0], sizes = [8, 32], strides = [1, 1]} : vector<8x128xf32> to vector<8x32xf32>
    %24 = vector.extract_strided_slice %21 {offsets = [0, 32], sizes = [8, 32], strides = [1, 1]} : vector<8x128xf32> to vector<8x32xf32>
    %25 = vector.extract_strided_slice %22 {offsets = [0, 64], sizes = [8, 32], strides = [1, 1]} : vector<8x128xf32> to vector<8x32xf32>
    %26 = vector.extract_strided_slice %21 {offsets = [0, 96], sizes = [8, 32], strides = [1, 1]} : vector<8x128xf32> to vector<8x32xf32>
    %27 = arith.mulf %24, %10 : vector<8x32xf32>
    %28 = arith.mulf %23, %25 : vector<8x32xf32>
    %29 = arith.addf %27, %28 : vector<8x32xf32>
    %30 = math.tanh %29 : vector<8x32xf32>
    %31 = arith.mulf %26, %30 : vector<8x32xf32>
    %32 = vector.extract_strided_slice %6 {offsets = [8, 0], sizes = [8, 128], strides = [1, 1]} : vector<64x128xf32> to vector<8x128xf32>
    %c0_16 = arith.constant 0 : index
    %c0_17 = arith.constant 0 : index
    %33 = vector.load %arg3[%c0_16, %c0_17] : memref<32x128xf32, #tpu.memory_space<vmem>>, vector<32x128xf32>
    %cst_18 = arith.constant dense<0.000000e+00> : vector<8x128xf32>
    %34 = tpu.matmul %31, %33, %cst_18 {dimension_numbers = #tpu.dot_dimension_numbers<[1], [0], [0], [1], [0, 0, 1, 1], [], []>} : vector<8x32xf32>, vector<32x128xf32>, vector<8x128xf32> -> vector<8x128xf32>
    %35 = arith.addf %32, %34 : vector<8x128xf32>
    %36 = arith.negf %35 : vector<8x128xf32>
    %37 = math.exp %36 : vector<8x128xf32>
    %cst_19 = arith.constant 1.000000e+00 : f32
    %38 = vector.broadcast %cst_19 : f32 to vector<8x128xf32>
    %39 = arith.addf %38, %37 : vector<8x128xf32>
    %40 = arith.divf %38, %39 : vector<8x128xf32>
    %41 = math.tanh %35 : vector<8x128xf32>
    %42 = vector.extract_strided_slice %40 {offsets = [0, 0], sizes = [8, 32], strides = [1, 1]} : vector<8x128xf32> to vector<8x32xf32>
    %43 = vector.extract_strided_slice %40 {offsets = [0, 32], sizes = [8, 32], strides = [1, 1]} : vector<8x128xf32> to vector<8x32xf32>
    %44 = vector.extract_strided_slice %41 {offsets = [0, 64], sizes = [8, 32], strides = [1, 1]} : vector<8x128xf32> to vector<8x32xf32>
    %45 = vector.extract_strided_slice %40 {offsets = [0, 96], sizes = [8, 32], strides = [1, 1]} : vector<8x128xf32> to vector<8x32xf32>
    %46 = arith.mulf %43, %29 : vector<8x32xf32>
    %47 = arith.mulf %42, %44 : vector<8x32xf32>
    %48 = arith.addf %46, %47 : vector<8x32xf32>
    %49 = math.tanh %48 : vector<8x32xf32>
    %50 = arith.mulf %45, %49 : vector<8x32xf32>
    %c0_20 = arith.constant 0 : index
    %c0_21 = arith.constant 0 : index
    %51 = vector.load %arg7[%c0_20, %c0_21] : memref<1x128xf32, #tpu.memory_space<vmem>>, vector<1x128xf32>
    %c0_22 = arith.constant 0 : index
    %c0_23 = arith.constant 0 : index
    %52 = vector.load %arg5[%c0_22, %c0_23] : memref<32x128xf32, #tpu.memory_space<vmem>>, vector<32x128xf32>
    %cst_24 = arith.constant dense<0.000000e+00> : vector<8x128xf32>
    %53 = tpu.matmul %31, %52, %cst_24 {dimension_numbers = #tpu.dot_dimension_numbers<[1], [0], [0], [1], [0, 0, 1, 1], [], []>} : vector<8x32xf32>, vector<32x128xf32>, vector<8x128xf32> -> vector<8x128xf32>
    %54 = vector.broadcast %51 : vector<1x128xf32> to vector<8x128xf32>
    %55 = arith.addf %54, %53 : vector<8x128xf32>
    %c0_25 = arith.constant 0 : index
    %c0_26 = arith.constant 0 : index
    %56 = vector.load %arg6[%c0_25, %c0_26] : memref<32x128xf32, #tpu.memory_space<vmem>>, vector<32x128xf32>
    %cst_27 = arith.constant dense<0.000000e+00> : vector<8x128xf32>
    %57 = tpu.matmul %8, %56, %cst_27 {dimension_numbers = #tpu.dot_dimension_numbers<[1], [0], [0], [1], [0, 0, 1, 1], [], []>} : vector<8x32xf32>, vector<32x128xf32>, vector<8x128xf32> -> vector<8x128xf32>
    %58 = arith.addf %55, %57 : vector<8x128xf32>
    %59 = arith.negf %58 : vector<8x128xf32>
    %60 = math.exp %59 : vector<8x128xf32>
    %cst_28 = arith.constant 1.000000e+00 : f32
    %61 = vector.broadcast %cst_28 : f32 to vector<8x128xf32>
    %62 = arith.addf %61, %60 : vector<8x128xf32>
    %63 = arith.divf %61, %62 : vector<8x128xf32>
    %64 = math.tanh %58 : vector<8x128xf32>
    %65 = vector.extract_strided_slice %63 {offsets = [0, 0], sizes = [8, 32], strides = [1, 1]} : vector<8x128xf32> to vector<8x32xf32>
    %66 = vector.extract_strided_slice %63 {offsets = [0, 32], sizes = [8, 32], strides = [1, 1]} : vector<8x128xf32> to vector<8x32xf32>
    %67 = vector.extract_strided_slice %64 {offsets = [0, 64], sizes = [8, 32], strides = [1, 1]} : vector<8x128xf32> to vector<8x32xf32>
    %68 = vector.extract_strided_slice %63 {offsets = [0, 96], sizes = [8, 32], strides = [1, 1]} : vector<8x128xf32> to vector<8x32xf32>
    %69 = arith.mulf %66, %11 : vector<8x32xf32>
    %70 = arith.mulf %65, %67 : vector<8x32xf32>
    %71 = arith.addf %69, %70 : vector<8x32xf32>
    %72 = math.tanh %71 : vector<8x32xf32>
    %73 = arith.mulf %68, %72 : vector<8x32xf32>
    %74 = vector.extract_strided_slice %6 {offsets = [16, 0], sizes = [8, 128], strides = [1, 1]} : vector<64x128xf32> to vector<8x128xf32>
    %c0_29 = arith.constant 0 : index
    %c0_30 = arith.constant 0 : index
    %75 = vector.load %arg3[%c0_29, %c0_30] : memref<32x128xf32, #tpu.memory_space<vmem>>, vector<32x128xf32>
    %cst_31 = arith.constant dense<0.000000e+00> : vector<8x128xf32>
    %76 = tpu.matmul %50, %75, %cst_31 {dimension_numbers = #tpu.dot_dimension_numbers<[1], [0], [0], [1], [0, 0, 1, 1], [], []>} : vector<8x32xf32>, vector<32x128xf32>, vector<8x128xf32> -> vector<8x128xf32>
    %77 = arith.addf %74, %76 : vector<8x128xf32>
    %78 = arith.negf %77 : vector<8x128xf32>
    %79 = math.exp %78 : vector<8x128xf32>
    %cst_32 = arith.constant 1.000000e+00 : f32
    %80 = vector.broadcast %cst_32 : f32 to vector<8x128xf32>
    %81 = arith.addf %80, %79 : vector<8x128xf32>
    %82 = arith.divf %80, %81 : vector<8x128xf32>
    %83 = math.tanh %77 : vector<8x128xf32>
    %84 = vector.extract_strided_slice %82 {offsets = [0, 0], sizes = [8, 32], strides = [1, 1]} : vector<8x128xf32> to vector<8x32xf32>
    %85 = vector.extract_strided_slice %82 {offsets = [0, 32], sizes = [8, 32], strides = [1, 1]} : vector<8x128xf32> to vector<8x32xf32>
    %86 = vector.extract_strided_slice %83 {offsets = [0, 64], sizes = [8, 32], strides = [1, 1]} : vector<8x128xf32> to vector<8x32xf32>
    %87 = vector.extract_strided_slice %82 {offsets = [0, 96], sizes = [8, 32], strides = [1, 1]} : vector<8x128xf32> to vector<8x32xf32>
    %88 = arith.mulf %85, %48 : vector<8x32xf32>
    %89 = arith.mulf %84, %86 : vector<8x32xf32>
    %90 = arith.addf %88, %89 : vector<8x32xf32>
    %91 = math.tanh %90 : vector<8x32xf32>
    %92 = arith.mulf %87, %91 : vector<8x32xf32>
    %c0_33 = arith.constant 0 : index
    %c0_34 = arith.constant 0 : index
    %93 = vector.load %arg7[%c0_33, %c0_34] : memref<1x128xf32, #tpu.memory_space<vmem>>, vector<1x128xf32>
    %c0_35 = arith.constant 0 : index
    %c0_36 = arith.constant 0 : index
    %94 = vector.load %arg5[%c0_35, %c0_36] : memref<32x128xf32, #tpu.memory_space<vmem>>, vector<32x128xf32>
    %cst_37 = arith.constant dense<0.000000e+00> : vector<8x128xf32>
    %95 = tpu.matmul %50, %94, %cst_37 {dimension_numbers = #tpu.dot_dimension_numbers<[1], [0], [0], [1], [0, 0, 1, 1], [], []>} : vector<8x32xf32>, vector<32x128xf32>, vector<8x128xf32> -> vector<8x128xf32>
    %96 = vector.broadcast %93 : vector<1x128xf32> to vector<8x128xf32>
    %97 = arith.addf %96, %95 : vector<8x128xf32>
    %c0_38 = arith.constant 0 : index
    %c0_39 = arith.constant 0 : index
    %98 = vector.load %arg6[%c0_38, %c0_39] : memref<32x128xf32, #tpu.memory_space<vmem>>, vector<32x128xf32>
    %cst_40 = arith.constant dense<0.000000e+00> : vector<8x128xf32>
    %99 = tpu.matmul %73, %98, %cst_40 {dimension_numbers = #tpu.dot_dimension_numbers<[1], [0], [0], [1], [0, 0, 1, 1], [], []>} : vector<8x32xf32>, vector<32x128xf32>, vector<8x128xf32> -> vector<8x128xf32>
    %100 = arith.addf %97, %99 : vector<8x128xf32>
    %101 = arith.negf %100 : vector<8x128xf32>
    %102 = math.exp %101 : vector<8x128xf32>
    %cst_41 = arith.constant 1.000000e+00 : f32
    %103 = vector.broadcast %cst_41 : f32 to vector<8x128xf32>
    %104 = arith.addf %103, %102 : vector<8x128xf32>
    %105 = arith.divf %103, %104 : vector<8x128xf32>
    %106 = math.tanh %100 : vector<8x128xf32>
    %107 = vector.extract_strided_slice %105 {offsets = [0, 0], sizes = [8, 32], strides = [1, 1]} : vector<8x128xf32> to vector<8x32xf32>
    %108 = vector.extract_strided_slice %105 {offsets = [0, 32], sizes = [8, 32], strides = [1, 1]} : vector<8x128xf32> to vector<8x32xf32>
    %109 = vector.extract_strided_slice %106 {offsets = [0, 64], sizes = [8, 32], strides = [1, 1]} : vector<8x128xf32> to vector<8x32xf32>
    %110 = vector.extract_strided_slice %105 {offsets = [0, 96], sizes = [8, 32], strides = [1, 1]} : vector<8x128xf32> to vector<8x32xf32>
    %111 = arith.mulf %108, %71 : vector<8x32xf32>
    %112 = arith.mulf %107, %109 : vector<8x32xf32>
    %113 = arith.addf %111, %112 : vector<8x32xf32>
    %114 = math.tanh %113 : vector<8x32xf32>
    %115 = arith.mulf %110, %114 : vector<8x32xf32>
    %c0_42 = arith.constant 0 : index
    %c0_43 = arith.constant 0 : index
    %116 = vector.load %arg10[%c0_42, %c0_43] : memref<1x128xf32, #tpu.memory_space<vmem>>, vector<1x128xf32>
    %c0_44 = arith.constant 0 : index
    %c0_45 = arith.constant 0 : index
    %117 = vector.load %arg8[%c0_44, %c0_45] : memref<32x128xf32, #tpu.memory_space<vmem>>, vector<32x128xf32>
    %cst_46 = arith.constant dense<0.000000e+00> : vector<8x128xf32>
    %118 = tpu.matmul %73, %117, %cst_46 {dimension_numbers = #tpu.dot_dimension_numbers<[1], [0], [0], [1], [0, 0, 1, 1], [], []>} : vector<8x32xf32>, vector<32x128xf32>, vector<8x128xf32> -> vector<8x128xf32>
    %119 = vector.broadcast %116 : vector<1x128xf32> to vector<8x128xf32>
    %120 = arith.addf %119, %118 : vector<8x128xf32>
    %c0_47 = arith.constant 0 : index
    %c0_48 = arith.constant 0 : index
    %121 = vector.load %arg9[%c0_47, %c0_48] : memref<32x128xf32, #tpu.memory_space<vmem>>, vector<32x128xf32>
    %cst_49 = arith.constant dense<0.000000e+00> : vector<8x128xf32>
    %122 = tpu.matmul %9, %121, %cst_49 {dimension_numbers = #tpu.dot_dimension_numbers<[1], [0], [0], [1], [0, 0, 1, 1], [], []>} : vector<8x32xf32>, vector<32x128xf32>, vector<8x128xf32> -> vector<8x128xf32>
    %123 = arith.addf %120, %122 : vector<8x128xf32>
    %124 = arith.negf %123 : vector<8x128xf32>
    %125 = math.exp %124 : vector<8x128xf32>
    %cst_50 = arith.constant 1.000000e+00 : f32
    %126 = vector.broadcast %cst_50 : f32 to vector<8x128xf32>
    %127 = arith.addf %126, %125 : vector<8x128xf32>
    %128 = arith.divf %126, %127 : vector<8x128xf32>
    %129 = math.tanh %123 : vector<8x128xf32>
    %130 = vector.extract_strided_slice %128 {offsets = [0, 0], sizes = [8, 32], strides = [1, 1]} : vector<8x128xf32> to vector<8x32xf32>
    %131 = vector.extract_strided_slice %128 {offsets = [0, 32], sizes = [8, 32], strides = [1, 1]} : vector<8x128xf32> to vector<8x32xf32>
    %132 = vector.extract_strided_slice %129 {offsets = [0, 64], sizes = [8, 32], strides = [1, 1]} : vector<8x128xf32> to vector<8x32xf32>
    %133 = vector.extract_strided_slice %128 {offsets = [0, 96], sizes = [8, 32], strides = [1, 1]} : vector<8x128xf32> to vector<8x32xf32>
    %134 = arith.mulf %131, %12 : vector<8x32xf32>
    %135 = arith.mulf %130, %132 : vector<8x32xf32>
    %136 = arith.addf %134, %135 : vector<8x32xf32>
    %137 = math.tanh %136 : vector<8x32xf32>
    %138 = arith.mulf %133, %137 : vector<8x32xf32>
    %139 = vector.extract_strided_slice %6 {offsets = [24, 0], sizes = [8, 128], strides = [1, 1]} : vector<64x128xf32> to vector<8x128xf32>
    %c0_51 = arith.constant 0 : index
    %c0_52 = arith.constant 0 : index
    %140 = vector.load %arg3[%c0_51, %c0_52] : memref<32x128xf32, #tpu.memory_space<vmem>>, vector<32x128xf32>
    %cst_53 = arith.constant dense<0.000000e+00> : vector<8x128xf32>
    %141 = tpu.matmul %92, %140, %cst_53 {dimension_numbers = #tpu.dot_dimension_numbers<[1], [0], [0], [1], [0, 0, 1, 1], [], []>} : vector<8x32xf32>, vector<32x128xf32>, vector<8x128xf32> -> vector<8x128xf32>
    %142 = arith.addf %139, %141 : vector<8x128xf32>
    %143 = arith.negf %142 : vector<8x128xf32>
    %144 = math.exp %143 : vector<8x128xf32>
    %cst_54 = arith.constant 1.000000e+00 : f32
    %145 = vector.broadcast %cst_54 : f32 to vector<8x128xf32>
    %146 = arith.addf %145, %144 : vector<8x128xf32>
    %147 = arith.divf %145, %146 : vector<8x128xf32>
    %148 = math.tanh %142 : vector<8x128xf32>
    %149 = vector.extract_strided_slice %147 {offsets = [0, 0], sizes = [8, 32], strides = [1, 1]} : vector<8x128xf32> to vector<8x32xf32>
    %150 = vector.extract_strided_slice %147 {offsets = [0, 32], sizes = [8, 32], strides = [1, 1]} : vector<8x128xf32> to vector<8x32xf32>
    %151 = vector.extract_strided_slice %148 {offsets = [0, 64], sizes = [8, 32], strides = [1, 1]} : vector<8x128xf32> to vector<8x32xf32>
    %152 = vector.extract_strided_slice %147 {offsets = [0, 96], sizes = [8, 32], strides = [1, 1]} : vector<8x128xf32> to vector<8x32xf32>
    %153 = arith.mulf %150, %90 : vector<8x32xf32>
    %154 = arith.mulf %149, %151 : vector<8x32xf32>
    %155 = arith.addf %153, %154 : vector<8x32xf32>
    %156 = math.tanh %155 : vector<8x32xf32>
    %157 = arith.mulf %152, %156 : vector<8x32xf32>
    %c0_55 = arith.constant 0 : index
    %c0_56 = arith.constant 0 : index
    %158 = vector.load %arg7[%c0_55, %c0_56] : memref<1x128xf32, #tpu.memory_space<vmem>>, vector<1x128xf32>
    %c0_57 = arith.constant 0 : index
    %c0_58 = arith.constant 0 : index
    %159 = vector.load %arg5[%c0_57, %c0_58] : memref<32x128xf32, #tpu.memory_space<vmem>>, vector<32x128xf32>
    %cst_59 = arith.constant dense<0.000000e+00> : vector<8x128xf32>
    %160 = tpu.matmul %92, %159, %cst_59 {dimension_numbers = #tpu.dot_dimension_numbers<[1], [0], [0], [1], [0, 0, 1, 1], [], []>} : vector<8x32xf32>, vector<32x128xf32>, vector<8x128xf32> -> vector<8x128xf32>
    %161 = vector.broadcast %158 : vector<1x128xf32> to vector<8x128xf32>
    %162 = arith.addf %161, %160 : vector<8x128xf32>
    %c0_60 = arith.constant 0 : index
    %c0_61 = arith.constant 0 : index
    %163 = vector.load %arg6[%c0_60, %c0_61] : memref<32x128xf32, #tpu.memory_space<vmem>>, vector<32x128xf32>
    %cst_62 = arith.constant dense<0.000000e+00> : vector<8x128xf32>
    %164 = tpu.matmul %115, %163, %cst_62 {dimension_numbers = #tpu.dot_dimension_numbers<[1], [0], [0], [1], [0, 0, 1, 1], [], []>} : vector<8x32xf32>, vector<32x128xf32>, vector<8x128xf32> -> vector<8x128xf32>
    %165 = arith.addf %162, %164 : vector<8x128xf32>
    %166 = arith.negf %165 : vector<8x128xf32>
    %167 = math.exp %166 : vector<8x128xf32>
    %cst_63 = arith.constant 1.000000e+00 : f32
    %168 = vector.broadcast %cst_63 : f32 to vector<8x128xf32>
    %169 = arith.addf %168, %167 : vector<8x128xf32>
    %170 = arith.divf %168, %169 : vector<8x128xf32>
    %171 = math.tanh %165 : vector<8x128xf32>
    %172 = vector.extract_strided_slice %170 {offsets = [0, 0], sizes = [8, 32], strides = [1, 1]} : vector<8x128xf32> to vector<8x32xf32>
    %173 = vector.extract_strided_slice %170 {offsets = [0, 32], sizes = [8, 32], strides = [1, 1]} : vector<8x128xf32> to vector<8x32xf32>
    %174 = vector.extract_strided_slice %171 {offsets = [0, 64], sizes = [8, 32], strides = [1, 1]} : vector<8x128xf32> to vector<8x32xf32>
    %175 = vector.extract_strided_slice %170 {offsets = [0, 96], sizes = [8, 32], strides = [1, 1]} : vector<8x128xf32> to vector<8x32xf32>
    %176 = arith.mulf %173, %113 : vector<8x32xf32>
    %177 = arith.mulf %172, %174 : vector<8x32xf32>
    %178 = arith.addf %176, %177 : vector<8x32xf32>
    %179 = math.tanh %178 : vector<8x32xf32>
    %180 = arith.mulf %175, %179 : vector<8x32xf32>
    %c0_64 = arith.constant 0 : index
    %c0_65 = arith.constant 0 : index
    %181 = vector.load %arg10[%c0_64, %c0_65] : memref<1x128xf32, #tpu.memory_space<vmem>>, vector<1x128xf32>
    %c0_66 = arith.constant 0 : index
    %c0_67 = arith.constant 0 : index
    %182 = vector.load %arg8[%c0_66, %c0_67] : memref<32x128xf32, #tpu.memory_space<vmem>>, vector<32x128xf32>
    %cst_68 = arith.constant dense<0.000000e+00> : vector<8x128xf32>
    %183 = tpu.matmul %115, %182, %cst_68 {dimension_numbers = #tpu.dot_dimension_numbers<[1], [0], [0], [1], [0, 0, 1, 1], [], []>} : vector<8x32xf32>, vector<32x128xf32>, vector<8x128xf32> -> vector<8x128xf32>
    %184 = vector.broadcast %181 : vector<1x128xf32> to vector<8x128xf32>
    %185 = arith.addf %184, %183 : vector<8x128xf32>
    %c0_69 = arith.constant 0 : index
    %c0_70 = arith.constant 0 : index
    %186 = vector.load %arg9[%c0_69, %c0_70] : memref<32x128xf32, #tpu.memory_space<vmem>>, vector<32x128xf32>
    %cst_71 = arith.constant dense<0.000000e+00> : vector<8x128xf32>
    %187 = tpu.matmul %138, %186, %cst_71 {dimension_numbers = #tpu.dot_dimension_numbers<[1], [0], [0], [1], [0, 0, 1, 1], [], []>} : vector<8x32xf32>, vector<32x128xf32>, vector<8x128xf32> -> vector<8x128xf32>
    %188 = arith.addf %185, %187 : vector<8x128xf32>
    %189 = arith.negf %188 : vector<8x128xf32>
    %190 = math.exp %189 : vector<8x128xf32>
    %cst_72 = arith.constant 1.000000e+00 : f32
    %191 = vector.broadcast %cst_72 : f32 to vector<8x128xf32>
    %192 = arith.addf %191, %190 : vector<8x128xf32>
    %193 = arith.divf %191, %192 : vector<8x128xf32>
    %194 = math.tanh %188 : vector<8x128xf32>
    %195 = vector.extract_strided_slice %193 {offsets = [0, 0], sizes = [8, 32], strides = [1, 1]} : vector<8x128xf32> to vector<8x32xf32>
    %196 = vector.extract_strided_slice %193 {offsets = [0, 32], sizes = [8, 32], strides = [1, 1]} : vector<8x128xf32> to vector<8x32xf32>
    %197 = vector.extract_strided_slice %194 {offsets = [0, 64], sizes = [8, 32], strides = [1, 1]} : vector<8x128xf32> to vector<8x32xf32>
    %198 = vector.extract_strided_slice %193 {offsets = [0, 96], sizes = [8, 32], strides = [1, 1]} : vector<8x128xf32> to vector<8x32xf32>
    %199 = arith.mulf %196, %136 : vector<8x32xf32>
    %200 = arith.mulf %195, %197 : vector<8x32xf32>
    %201 = arith.addf %199, %200 : vector<8x32xf32>
    %202 = math.tanh %201 : vector<8x32xf32>
    %203 = arith.mulf %198, %202 : vector<8x32xf32>
    %204 = vector.extract_strided_slice %6 {offsets = [32, 0], sizes = [8, 128], strides = [1, 1]} : vector<64x128xf32> to vector<8x128xf32>
    %c0_73 = arith.constant 0 : index
    %c0_74 = arith.constant 0 : index
    %205 = vector.load %arg3[%c0_73, %c0_74] : memref<32x128xf32, #tpu.memory_space<vmem>>, vector<32x128xf32>
    %cst_75 = arith.constant dense<0.000000e+00> : vector<8x128xf32>
    %206 = tpu.matmul %157, %205, %cst_75 {dimension_numbers = #tpu.dot_dimension_numbers<[1], [0], [0], [1], [0, 0, 1, 1], [], []>} : vector<8x32xf32>, vector<32x128xf32>, vector<8x128xf32> -> vector<8x128xf32>
    %207 = arith.addf %204, %206 : vector<8x128xf32>
    %208 = arith.negf %207 : vector<8x128xf32>
    %209 = math.exp %208 : vector<8x128xf32>
    %cst_76 = arith.constant 1.000000e+00 : f32
    %210 = vector.broadcast %cst_76 : f32 to vector<8x128xf32>
    %211 = arith.addf %210, %209 : vector<8x128xf32>
    %212 = arith.divf %210, %211 : vector<8x128xf32>
    %213 = math.tanh %207 : vector<8x128xf32>
    %214 = vector.extract_strided_slice %212 {offsets = [0, 0], sizes = [8, 32], strides = [1, 1]} : vector<8x128xf32> to vector<8x32xf32>
    %215 = vector.extract_strided_slice %212 {offsets = [0, 32], sizes = [8, 32], strides = [1, 1]} : vector<8x128xf32> to vector<8x32xf32>
    %216 = vector.extract_strided_slice %213 {offsets = [0, 64], sizes = [8, 32], strides = [1, 1]} : vector<8x128xf32> to vector<8x32xf32>
    %217 = vector.extract_strided_slice %212 {offsets = [0, 96], sizes = [8, 32], strides = [1, 1]} : vector<8x128xf32> to vector<8x32xf32>
    %218 = arith.mulf %215, %155 : vector<8x32xf32>
    %219 = arith.mulf %214, %216 : vector<8x32xf32>
    %220 = arith.addf %218, %219 : vector<8x32xf32>
    %221 = math.tanh %220 : vector<8x32xf32>
    %222 = arith.mulf %217, %221 : vector<8x32xf32>
    %c0_77 = arith.constant 0 : index
    %c0_78 = arith.constant 0 : index
    %223 = vector.load %arg7[%c0_77, %c0_78] : memref<1x128xf32, #tpu.memory_space<vmem>>, vector<1x128xf32>
    %c0_79 = arith.constant 0 : index
    %c0_80 = arith.constant 0 : index
    %224 = vector.load %arg5[%c0_79, %c0_80] : memref<32x128xf32, #tpu.memory_space<vmem>>, vector<32x128xf32>
    %cst_81 = arith.constant dense<0.000000e+00> : vector<8x128xf32>
    %225 = tpu.matmul %157, %224, %cst_81 {dimension_numbers = #tpu.dot_dimension_numbers<[1], [0], [0], [1], [0, 0, 1, 1], [], []>} : vector<8x32xf32>, vector<32x128xf32>, vector<8x128xf32> -> vector<8x128xf32>
    %226 = vector.broadcast %223 : vector<1x128xf32> to vector<8x128xf32>
    %227 = arith.addf %226, %225 : vector<8x128xf32>
    %c0_82 = arith.constant 0 : index
    %c0_83 = arith.constant 0 : index
    %228 = vector.load %arg6[%c0_82, %c0_83] : memref<32x128xf32, #tpu.memory_space<vmem>>, vector<32x128xf32>
    %cst_84 = arith.constant dense<0.000000e+00> : vector<8x128xf32>
    %229 = tpu.matmul %180, %228, %cst_84 {dimension_numbers = #tpu.dot_dimension_numbers<[1], [0], [0], [1], [0, 0, 1, 1], [], []>} : vector<8x32xf32>, vector<32x128xf32>, vector<8x128xf32> -> vector<8x128xf32>
    %230 = arith.addf %227, %229 : vector<8x128xf32>
    %231 = arith.negf %230 : vector<8x128xf32>
    %232 = math.exp %231 : vector<8x128xf32>
    %cst_85 = arith.constant 1.000000e+00 : f32
    %233 = vector.broadcast %cst_85 : f32 to vector<8x128xf32>
    %234 = arith.addf %233, %232 : vector<8x128xf32>
    %235 = arith.divf %233, %234 : vector<8x128xf32>
    %236 = math.tanh %230 : vector<8x128xf32>
    %237 = vector.extract_strided_slice %235 {offsets = [0, 0], sizes = [8, 32], strides = [1, 1]} : vector<8x128xf32> to vector<8x32xf32>
    %238 = vector.extract_strided_slice %235 {offsets = [0, 32], sizes = [8, 32], strides = [1, 1]} : vector<8x128xf32> to vector<8x32xf32>
    %239 = vector.extract_strided_slice %236 {offsets = [0, 64], sizes = [8, 32], strides = [1, 1]} : vector<8x128xf32> to vector<8x32xf32>
    %240 = vector.extract_strided_slice %235 {offsets = [0, 96], sizes = [8, 32], strides = [1, 1]} : vector<8x128xf32> to vector<8x32xf32>
    %241 = arith.mulf %238, %178 : vector<8x32xf32>
    %242 = arith.mulf %237, %239 : vector<8x32xf32>
    %243 = arith.addf %241, %242 : vector<8x32xf32>
    %244 = math.tanh %243 : vector<8x32xf32>
    %245 = arith.mulf %240, %244 : vector<8x32xf32>
    %c0_86 = arith.constant 0 : index
    %c0_87 = arith.constant 0 : index
    %246 = vector.load %arg10[%c0_86, %c0_87] : memref<1x128xf32, #tpu.memory_space<vmem>>, vector<1x128xf32>
    %c0_88 = arith.constant 0 : index
    %c0_89 = arith.constant 0 : index
    %247 = vector.load %arg8[%c0_88, %c0_89] : memref<32x128xf32, #tpu.memory_space<vmem>>, vector<32x128xf32>
    %cst_90 = arith.constant dense<0.000000e+00> : vector<8x128xf32>
    %248 = tpu.matmul %180, %247, %cst_90 {dimension_numbers = #tpu.dot_dimension_numbers<[1], [0], [0], [1], [0, 0, 1, 1], [], []>} : vector<8x32xf32>, vector<32x128xf32>, vector<8x128xf32> -> vector<8x128xf32>
    %249 = vector.broadcast %246 : vector<1x128xf32> to vector<8x128xf32>
    %250 = arith.addf %249, %248 : vector<8x128xf32>
    %c0_91 = arith.constant 0 : index
    %c0_92 = arith.constant 0 : index
    %251 = vector.load %arg9[%c0_91, %c0_92] : memref<32x128xf32, #tpu.memory_space<vmem>>, vector<32x128xf32>
    %cst_93 = arith.constant dense<0.000000e+00> : vector<8x128xf32>
    %252 = tpu.matmul %203, %251, %cst_93 {dimension_numbers = #tpu.dot_dimension_numbers<[1], [0], [0], [1], [0, 0, 1, 1], [], []>} : vector<8x32xf32>, vector<32x128xf32>, vector<8x128xf32> -> vector<8x128xf32>
    %253 = arith.addf %250, %252 : vector<8x128xf32>
    %254 = arith.negf %253 : vector<8x128xf32>
    %255 = math.exp %254 : vector<8x128xf32>
    %cst_94 = arith.constant 1.000000e+00 : f32
    %256 = vector.broadcast %cst_94 : f32 to vector<8x128xf32>
    %257 = arith.addf %256, %255 : vector<8x128xf32>
    %258 = arith.divf %256, %257 : vector<8x128xf32>
    %259 = math.tanh %253 : vector<8x128xf32>
    %260 = vector.extract_strided_slice %258 {offsets = [0, 0], sizes = [8, 32], strides = [1, 1]} : vector<8x128xf32> to vector<8x32xf32>
    %261 = vector.extract_strided_slice %258 {offsets = [0, 32], sizes = [8, 32], strides = [1, 1]} : vector<8x128xf32> to vector<8x32xf32>
    %262 = vector.extract_strided_slice %259 {offsets = [0, 64], sizes = [8, 32], strides = [1, 1]} : vector<8x128xf32> to vector<8x32xf32>
    %263 = vector.extract_strided_slice %258 {offsets = [0, 96], sizes = [8, 32], strides = [1, 1]} : vector<8x128xf32> to vector<8x32xf32>
    %264 = arith.mulf %261, %201 : vector<8x32xf32>
    %265 = arith.mulf %260, %262 : vector<8x32xf32>
    %266 = arith.addf %264, %265 : vector<8x32xf32>
    %267 = math.tanh %266 : vector<8x32xf32>
    %268 = arith.mulf %263, %267 : vector<8x32xf32>
    %269 = vector.extract_strided_slice %6 {offsets = [40, 0], sizes = [8, 128], strides = [1, 1]} : vector<64x128xf32> to vector<8x128xf32>
    %c0_95 = arith.constant 0 : index
    %c0_96 = arith.constant 0 : index
    %270 = vector.load %arg3[%c0_95, %c0_96] : memref<32x128xf32, #tpu.memory_space<vmem>>, vector<32x128xf32>
    %cst_97 = arith.constant dense<0.000000e+00> : vector<8x128xf32>
    %271 = tpu.matmul %222, %270, %cst_97 {dimension_numbers = #tpu.dot_dimension_numbers<[1], [0], [0], [1], [0, 0, 1, 1], [], []>} : vector<8x32xf32>, vector<32x128xf32>, vector<8x128xf32> -> vector<8x128xf32>
    %272 = arith.addf %269, %271 : vector<8x128xf32>
    %273 = arith.negf %272 : vector<8x128xf32>
    %274 = math.exp %273 : vector<8x128xf32>
    %cst_98 = arith.constant 1.000000e+00 : f32
    %275 = vector.broadcast %cst_98 : f32 to vector<8x128xf32>
    %276 = arith.addf %275, %274 : vector<8x128xf32>
    %277 = arith.divf %275, %276 : vector<8x128xf32>
    %278 = math.tanh %272 : vector<8x128xf32>
    %279 = vector.extract_strided_slice %277 {offsets = [0, 0], sizes = [8, 32], strides = [1, 1]} : vector<8x128xf32> to vector<8x32xf32>
    %280 = vector.extract_strided_slice %277 {offsets = [0, 32], sizes = [8, 32], strides = [1, 1]} : vector<8x128xf32> to vector<8x32xf32>
    %281 = vector.extract_strided_slice %278 {offsets = [0, 64], sizes = [8, 32], strides = [1, 1]} : vector<8x128xf32> to vector<8x32xf32>
    %282 = vector.extract_strided_slice %277 {offsets = [0, 96], sizes = [8, 32], strides = [1, 1]} : vector<8x128xf32> to vector<8x32xf32>
    %283 = arith.mulf %280, %220 : vector<8x32xf32>
    %284 = arith.mulf %279, %281 : vector<8x32xf32>
    %285 = arith.addf %283, %284 : vector<8x32xf32>
    %286 = math.tanh %285 : vector<8x32xf32>
    %287 = arith.mulf %282, %286 : vector<8x32xf32>
    %c0_99 = arith.constant 0 : index
    %c0_100 = arith.constant 0 : index
    %288 = vector.load %arg7[%c0_99, %c0_100] : memref<1x128xf32, #tpu.memory_space<vmem>>, vector<1x128xf32>
    %c0_101 = arith.constant 0 : index
    %c0_102 = arith.constant 0 : index
    %289 = vector.load %arg5[%c0_101, %c0_102] : memref<32x128xf32, #tpu.memory_space<vmem>>, vector<32x128xf32>
    %cst_103 = arith.constant dense<0.000000e+00> : vector<8x128xf32>
    %290 = tpu.matmul %222, %289, %cst_103 {dimension_numbers = #tpu.dot_dimension_numbers<[1], [0], [0], [1], [0, 0, 1, 1], [], []>} : vector<8x32xf32>, vector<32x128xf32>, vector<8x128xf32> -> vector<8x128xf32>
    %291 = vector.broadcast %288 : vector<1x128xf32> to vector<8x128xf32>
    %292 = arith.addf %291, %290 : vector<8x128xf32>
    %c0_104 = arith.constant 0 : index
    %c0_105 = arith.constant 0 : index
    %293 = vector.load %arg6[%c0_104, %c0_105] : memref<32x128xf32, #tpu.memory_space<vmem>>, vector<32x128xf32>
    %cst_106 = arith.constant dense<0.000000e+00> : vector<8x128xf32>
    %294 = tpu.matmul %245, %293, %cst_106 {dimension_numbers = #tpu.dot_dimension_numbers<[1], [0], [0], [1], [0, 0, 1, 1], [], []>} : vector<8x32xf32>, vector<32x128xf32>, vector<8x128xf32> -> vector<8x128xf32>
    %295 = arith.addf %292, %294 : vector<8x128xf32>
    %296 = arith.negf %295 : vector<8x128xf32>
    %297 = math.exp %296 : vector<8x128xf32>
    %cst_107 = arith.constant 1.000000e+00 : f32
    %298 = vector.broadcast %cst_107 : f32 to vector<8x128xf32>
    %299 = arith.addf %298, %297 : vector<8x128xf32>
    %300 = arith.divf %298, %299 : vector<8x128xf32>
    %301 = math.tanh %295 : vector<8x128xf32>
    %302 = vector.extract_strided_slice %300 {offsets = [0, 0], sizes = [8, 32], strides = [1, 1]} : vector<8x128xf32> to vector<8x32xf32>
    %303 = vector.extract_strided_slice %300 {offsets = [0, 32], sizes = [8, 32], strides = [1, 1]} : vector<8x128xf32> to vector<8x32xf32>
    %304 = vector.extract_strided_slice %301 {offsets = [0, 64], sizes = [8, 32], strides = [1, 1]} : vector<8x128xf32> to vector<8x32xf32>
    %305 = vector.extract_strided_slice %300 {offsets = [0, 96], sizes = [8, 32], strides = [1, 1]} : vector<8x128xf32> to vector<8x32xf32>
    %306 = arith.mulf %303, %243 : vector<8x32xf32>
    %307 = arith.mulf %302, %304 : vector<8x32xf32>
    %308 = arith.addf %306, %307 : vector<8x32xf32>
    %309 = math.tanh %308 : vector<8x32xf32>
    %310 = arith.mulf %305, %309 : vector<8x32xf32>
    %c0_108 = arith.constant 0 : index
    %c0_109 = arith.constant 0 : index
    %311 = vector.load %arg10[%c0_108, %c0_109] : memref<1x128xf32, #tpu.memory_space<vmem>>, vector<1x128xf32>
    %c0_110 = arith.constant 0 : index
    %c0_111 = arith.constant 0 : index
    %312 = vector.load %arg8[%c0_110, %c0_111] : memref<32x128xf32, #tpu.memory_space<vmem>>, vector<32x128xf32>
    %cst_112 = arith.constant dense<0.000000e+00> : vector<8x128xf32>
    %313 = tpu.matmul %245, %312, %cst_112 {dimension_numbers = #tpu.dot_dimension_numbers<[1], [0], [0], [1], [0, 0, 1, 1], [], []>} : vector<8x32xf32>, vector<32x128xf32>, vector<8x128xf32> -> vector<8x128xf32>
    %314 = vector.broadcast %311 : vector<1x128xf32> to vector<8x128xf32>
    %315 = arith.addf %314, %313 : vector<8x128xf32>
    %c0_113 = arith.constant 0 : index
    %c0_114 = arith.constant 0 : index
    %316 = vector.load %arg9[%c0_113, %c0_114] : memref<32x128xf32, #tpu.memory_space<vmem>>, vector<32x128xf32>
    %cst_115 = arith.constant dense<0.000000e+00> : vector<8x128xf32>
    %317 = tpu.matmul %268, %316, %cst_115 {dimension_numbers = #tpu.dot_dimension_numbers<[1], [0], [0], [1], [0, 0, 1, 1], [], []>} : vector<8x32xf32>, vector<32x128xf32>, vector<8x128xf32> -> vector<8x128xf32>
    %318 = arith.addf %315, %317 : vector<8x128xf32>
    %319 = arith.negf %318 : vector<8x128xf32>
    %320 = math.exp %319 : vector<8x128xf32>
    %cst_116 = arith.constant 1.000000e+00 : f32
    %321 = vector.broadcast %cst_116 : f32 to vector<8x128xf32>
    %322 = arith.addf %321, %320 : vector<8x128xf32>
    %323 = arith.divf %321, %322 : vector<8x128xf32>
    %324 = math.tanh %318 : vector<8x128xf32>
    %325 = vector.extract_strided_slice %323 {offsets = [0, 0], sizes = [8, 32], strides = [1, 1]} : vector<8x128xf32> to vector<8x32xf32>
    %326 = vector.extract_strided_slice %323 {offsets = [0, 32], sizes = [8, 32], strides = [1, 1]} : vector<8x128xf32> to vector<8x32xf32>
    %327 = vector.extract_strided_slice %324 {offsets = [0, 64], sizes = [8, 32], strides = [1, 1]} : vector<8x128xf32> to vector<8x32xf32>
    %328 = vector.extract_strided_slice %323 {offsets = [0, 96], sizes = [8, 32], strides = [1, 1]} : vector<8x128xf32> to vector<8x32xf32>
    %329 = arith.mulf %326, %266 : vector<8x32xf32>
    %330 = arith.mulf %325, %327 : vector<8x32xf32>
    %331 = arith.addf %329, %330 : vector<8x32xf32>
    %332 = math.tanh %331 : vector<8x32xf32>
    %333 = arith.mulf %328, %332 : vector<8x32xf32>
    %334 = vector.extract_strided_slice %6 {offsets = [48, 0], sizes = [8, 128], strides = [1, 1]} : vector<64x128xf32> to vector<8x128xf32>
    %c0_117 = arith.constant 0 : index
    %c0_118 = arith.constant 0 : index
    %335 = vector.load %arg3[%c0_117, %c0_118] : memref<32x128xf32, #tpu.memory_space<vmem>>, vector<32x128xf32>
    %cst_119 = arith.constant dense<0.000000e+00> : vector<8x128xf32>
    %336 = tpu.matmul %287, %335, %cst_119 {dimension_numbers = #tpu.dot_dimension_numbers<[1], [0], [0], [1], [0, 0, 1, 1], [], []>} : vector<8x32xf32>, vector<32x128xf32>, vector<8x128xf32> -> vector<8x128xf32>
    %337 = arith.addf %334, %336 : vector<8x128xf32>
    %338 = arith.negf %337 : vector<8x128xf32>
    %339 = math.exp %338 : vector<8x128xf32>
    %cst_120 = arith.constant 1.000000e+00 : f32
    %340 = vector.broadcast %cst_120 : f32 to vector<8x128xf32>
    %341 = arith.addf %340, %339 : vector<8x128xf32>
    %342 = arith.divf %340, %341 : vector<8x128xf32>
    %343 = math.tanh %337 : vector<8x128xf32>
    %344 = vector.extract_strided_slice %342 {offsets = [0, 0], sizes = [8, 32], strides = [1, 1]} : vector<8x128xf32> to vector<8x32xf32>
    %345 = vector.extract_strided_slice %342 {offsets = [0, 32], sizes = [8, 32], strides = [1, 1]} : vector<8x128xf32> to vector<8x32xf32>
    %346 = vector.extract_strided_slice %343 {offsets = [0, 64], sizes = [8, 32], strides = [1, 1]} : vector<8x128xf32> to vector<8x32xf32>
    %347 = vector.extract_strided_slice %342 {offsets = [0, 96], sizes = [8, 32], strides = [1, 1]} : vector<8x128xf32> to vector<8x32xf32>
    %348 = arith.mulf %345, %285 : vector<8x32xf32>
    %349 = arith.mulf %344, %346 : vector<8x32xf32>
    %350 = arith.addf %348, %349 : vector<8x32xf32>
    %351 = math.tanh %350 : vector<8x32xf32>
    %352 = arith.mulf %347, %351 : vector<8x32xf32>
    %c0_121 = arith.constant 0 : index
    %c0_122 = arith.constant 0 : index
    %353 = vector.load %arg7[%c0_121, %c0_122] : memref<1x128xf32, #tpu.memory_space<vmem>>, vector<1x128xf32>
    %c0_123 = arith.constant 0 : index
    %c0_124 = arith.constant 0 : index
    %354 = vector.load %arg5[%c0_123, %c0_124] : memref<32x128xf32, #tpu.memory_space<vmem>>, vector<32x128xf32>
    %cst_125 = arith.constant dense<0.000000e+00> : vector<8x128xf32>
    %355 = tpu.matmul %287, %354, %cst_125 {dimension_numbers = #tpu.dot_dimension_numbers<[1], [0], [0], [1], [0, 0, 1, 1], [], []>} : vector<8x32xf32>, vector<32x128xf32>, vector<8x128xf32> -> vector<8x128xf32>
    %356 = vector.broadcast %353 : vector<1x128xf32> to vector<8x128xf32>
    %357 = arith.addf %356, %355 : vector<8x128xf32>
    %c0_126 = arith.constant 0 : index
    %c0_127 = arith.constant 0 : index
    %358 = vector.load %arg6[%c0_126, %c0_127] : memref<32x128xf32, #tpu.memory_space<vmem>>, vector<32x128xf32>
    %cst_128 = arith.constant dense<0.000000e+00> : vector<8x128xf32>
    %359 = tpu.matmul %310, %358, %cst_128 {dimension_numbers = #tpu.dot_dimension_numbers<[1], [0], [0], [1], [0, 0, 1, 1], [], []>} : vector<8x32xf32>, vector<32x128xf32>, vector<8x128xf32> -> vector<8x128xf32>
    %360 = arith.addf %357, %359 : vector<8x128xf32>
    %361 = arith.negf %360 : vector<8x128xf32>
    %362 = math.exp %361 : vector<8x128xf32>
    %cst_129 = arith.constant 1.000000e+00 : f32
    %363 = vector.broadcast %cst_129 : f32 to vector<8x128xf32>
    %364 = arith.addf %363, %362 : vector<8x128xf32>
    %365 = arith.divf %363, %364 : vector<8x128xf32>
    %366 = math.tanh %360 : vector<8x128xf32>
    %367 = vector.extract_strided_slice %365 {offsets = [0, 0], sizes = [8, 32], strides = [1, 1]} : vector<8x128xf32> to vector<8x32xf32>
    %368 = vector.extract_strided_slice %365 {offsets = [0, 32], sizes = [8, 32], strides = [1, 1]} : vector<8x128xf32> to vector<8x32xf32>
    %369 = vector.extract_strided_slice %366 {offsets = [0, 64], sizes = [8, 32], strides = [1, 1]} : vector<8x128xf32> to vector<8x32xf32>
    %370 = vector.extract_strided_slice %365 {offsets = [0, 96], sizes = [8, 32], strides = [1, 1]} : vector<8x128xf32> to vector<8x32xf32>
    %371 = arith.mulf %368, %308 : vector<8x32xf32>
    %372 = arith.mulf %367, %369 : vector<8x32xf32>
    %373 = arith.addf %371, %372 : vector<8x32xf32>
    %374 = math.tanh %373 : vector<8x32xf32>
    %375 = arith.mulf %370, %374 : vector<8x32xf32>
    %c0_130 = arith.constant 0 : index
    %c0_131 = arith.constant 0 : index
    %376 = vector.load %arg10[%c0_130, %c0_131] : memref<1x128xf32, #tpu.memory_space<vmem>>, vector<1x128xf32>
    %c0_132 = arith.constant 0 : index
    %c0_133 = arith.constant 0 : index
    %377 = vector.load %arg8[%c0_132, %c0_133] : memref<32x128xf32, #tpu.memory_space<vmem>>, vector<32x128xf32>
    %cst_134 = arith.constant dense<0.000000e+00> : vector<8x128xf32>
    %378 = tpu.matmul %310, %377, %cst_134 {dimension_numbers = #tpu.dot_dimension_numbers<[1], [0], [0], [1], [0, 0, 1, 1], [], []>} : vector<8x32xf32>, vector<32x128xf32>, vector<8x128xf32> -> vector<8x128xf32>
    %379 = vector.broadcast %376 : vector<1x128xf32> to vector<8x128xf32>
    %380 = arith.addf %379, %378 : vector<8x128xf32>
    %c0_135 = arith.constant 0 : index
    %c0_136 = arith.constant 0 : index
    %381 = vector.load %arg9[%c0_135, %c0_136] : memref<32x128xf32, #tpu.memory_space<vmem>>, vector<32x128xf32>
    %cst_137 = arith.constant dense<0.000000e+00> : vector<8x128xf32>
    %382 = tpu.matmul %333, %381, %cst_137 {dimension_numbers = #tpu.dot_dimension_numbers<[1], [0], [0], [1], [0, 0, 1, 1], [], []>} : vector<8x32xf32>, vector<32x128xf32>, vector<8x128xf32> -> vector<8x128xf32>
    %383 = arith.addf %380, %382 : vector<8x128xf32>
    %384 = arith.negf %383 : vector<8x128xf32>
    %385 = math.exp %384 : vector<8x128xf32>
    %cst_138 = arith.constant 1.000000e+00 : f32
    %386 = vector.broadcast %cst_138 : f32 to vector<8x128xf32>
    %387 = arith.addf %386, %385 : vector<8x128xf32>
    %388 = arith.divf %386, %387 : vector<8x128xf32>
    %389 = math.tanh %383 : vector<8x128xf32>
    %390 = vector.extract_strided_slice %388 {offsets = [0, 0], sizes = [8, 32], strides = [1, 1]} : vector<8x128xf32> to vector<8x32xf32>
    %391 = vector.extract_strided_slice %388 {offsets = [0, 32], sizes = [8, 32], strides = [1, 1]} : vector<8x128xf32> to vector<8x32xf32>
    %392 = vector.extract_strided_slice %389 {offsets = [0, 64], sizes = [8, 32], strides = [1, 1]} : vector<8x128xf32> to vector<8x32xf32>
    %393 = vector.extract_strided_slice %388 {offsets = [0, 96], sizes = [8, 32], strides = [1, 1]} : vector<8x128xf32> to vector<8x32xf32>
    %394 = arith.mulf %391, %331 : vector<8x32xf32>
    %395 = arith.mulf %390, %392 : vector<8x32xf32>
    %396 = arith.addf %394, %395 : vector<8x32xf32>
    %397 = math.tanh %396 : vector<8x32xf32>
    %398 = arith.mulf %393, %397 : vector<8x32xf32>
    %399 = vector.extract_strided_slice %6 {offsets = [56, 0], sizes = [8, 128], strides = [1, 1]} : vector<64x128xf32> to vector<8x128xf32>
    %c0_139 = arith.constant 0 : index
    %c0_140 = arith.constant 0 : index
    %400 = vector.load %arg3[%c0_139, %c0_140] : memref<32x128xf32, #tpu.memory_space<vmem>>, vector<32x128xf32>
    %cst_141 = arith.constant dense<0.000000e+00> : vector<8x128xf32>
    %401 = tpu.matmul %352, %400, %cst_141 {dimension_numbers = #tpu.dot_dimension_numbers<[1], [0], [0], [1], [0, 0, 1, 1], [], []>} : vector<8x32xf32>, vector<32x128xf32>, vector<8x128xf32> -> vector<8x128xf32>
    %402 = arith.addf %399, %401 : vector<8x128xf32>
    %403 = arith.negf %402 : vector<8x128xf32>
    %404 = math.exp %403 : vector<8x128xf32>
    %cst_142 = arith.constant 1.000000e+00 : f32
    %405 = vector.broadcast %cst_142 : f32 to vector<8x128xf32>
    %406 = arith.addf %405, %404 : vector<8x128xf32>
    %407 = arith.divf %405, %406 : vector<8x128xf32>
    %408 = math.tanh %402 : vector<8x128xf32>
    %409 = vector.extract_strided_slice %407 {offsets = [0, 0], sizes = [8, 32], strides = [1, 1]} : vector<8x128xf32> to vector<8x32xf32>
    %410 = vector.extract_strided_slice %407 {offsets = [0, 32], sizes = [8, 32], strides = [1, 1]} : vector<8x128xf32> to vector<8x32xf32>
    %411 = vector.extract_strided_slice %408 {offsets = [0, 64], sizes = [8, 32], strides = [1, 1]} : vector<8x128xf32> to vector<8x32xf32>
    %412 = vector.extract_strided_slice %407 {offsets = [0, 96], sizes = [8, 32], strides = [1, 1]} : vector<8x128xf32> to vector<8x32xf32>
    %413 = arith.mulf %410, %350 : vector<8x32xf32>
    %414 = arith.mulf %409, %411 : vector<8x32xf32>
    %415 = arith.addf %413, %414 : vector<8x32xf32>
    %416 = math.tanh %415 : vector<8x32xf32>
    %417 = arith.mulf %412, %416 : vector<8x32xf32>
    %c0_143 = arith.constant 0 : index
    %c0_144 = arith.constant 0 : index
    %418 = vector.load %arg7[%c0_143, %c0_144] : memref<1x128xf32, #tpu.memory_space<vmem>>, vector<1x128xf32>
    %c0_145 = arith.constant 0 : index
    %c0_146 = arith.constant 0 : index
    %419 = vector.load %arg5[%c0_145, %c0_146] : memref<32x128xf32, #tpu.memory_space<vmem>>, vector<32x128xf32>
    %cst_147 = arith.constant dense<0.000000e+00> : vector<8x128xf32>
    %420 = tpu.matmul %352, %419, %cst_147 {dimension_numbers = #tpu.dot_dimension_numbers<[1], [0], [0], [1], [0, 0, 1, 1], [], []>} : vector<8x32xf32>, vector<32x128xf32>, vector<8x128xf32> -> vector<8x128xf32>
    %421 = vector.broadcast %418 : vector<1x128xf32> to vector<8x128xf32>
    %422 = arith.addf %421, %420 : vector<8x128xf32>
    %c0_148 = arith.constant 0 : index
    %c0_149 = arith.constant 0 : index
    %423 = vector.load %arg6[%c0_148, %c0_149] : memref<32x128xf32, #tpu.memory_space<vmem>>, vector<32x128xf32>
    %cst_150 = arith.constant dense<0.000000e+00> : vector<8x128xf32>
    %424 = tpu.matmul %375, %423, %cst_150 {dimension_numbers = #tpu.dot_dimension_numbers<[1], [0], [0], [1], [0, 0, 1, 1], [], []>} : vector<8x32xf32>, vector<32x128xf32>, vector<8x128xf32> -> vector<8x128xf32>
    %425 = arith.addf %422, %424 : vector<8x128xf32>
    %426 = arith.negf %425 : vector<8x128xf32>
    %427 = math.exp %426 : vector<8x128xf32>
    %cst_151 = arith.constant 1.000000e+00 : f32
    %428 = vector.broadcast %cst_151 : f32 to vector<8x128xf32>
    %429 = arith.addf %428, %427 : vector<8x128xf32>
    %430 = arith.divf %428, %429 : vector<8x128xf32>
    %431 = math.tanh %425 : vector<8x128xf32>
    %432 = vector.extract_strided_slice %430 {offsets = [0, 0], sizes = [8, 32], strides = [1, 1]} : vector<8x128xf32> to vector<8x32xf32>
    %433 = vector.extract_strided_slice %430 {offsets = [0, 32], sizes = [8, 32], strides = [1, 1]} : vector<8x128xf32> to vector<8x32xf32>
    %434 = vector.extract_strided_slice %431 {offsets = [0, 64], sizes = [8, 32], strides = [1, 1]} : vector<8x128xf32> to vector<8x32xf32>
    %435 = vector.extract_strided_slice %430 {offsets = [0, 96], sizes = [8, 32], strides = [1, 1]} : vector<8x128xf32> to vector<8x32xf32>
    %436 = arith.mulf %433, %373 : vector<8x32xf32>
    %437 = arith.mulf %432, %434 : vector<8x32xf32>
    %438 = arith.addf %436, %437 : vector<8x32xf32>
    %439 = math.tanh %438 : vector<8x32xf32>
    %440 = arith.mulf %435, %439 : vector<8x32xf32>
    %c0_152 = arith.constant 0 : index
    %c0_153 = arith.constant 0 : index
    %441 = vector.load %arg10[%c0_152, %c0_153] : memref<1x128xf32, #tpu.memory_space<vmem>>, vector<1x128xf32>
    %c0_154 = arith.constant 0 : index
    %c0_155 = arith.constant 0 : index
    %442 = vector.load %arg8[%c0_154, %c0_155] : memref<32x128xf32, #tpu.memory_space<vmem>>, vector<32x128xf32>
    %cst_156 = arith.constant dense<0.000000e+00> : vector<8x128xf32>
    %443 = tpu.matmul %375, %442, %cst_156 {dimension_numbers = #tpu.dot_dimension_numbers<[1], [0], [0], [1], [0, 0, 1, 1], [], []>} : vector<8x32xf32>, vector<32x128xf32>, vector<8x128xf32> -> vector<8x128xf32>
    %444 = vector.broadcast %441 : vector<1x128xf32> to vector<8x128xf32>
    %445 = arith.addf %444, %443 : vector<8x128xf32>
    %c0_157 = arith.constant 0 : index
    %c0_158 = arith.constant 0 : index
    %446 = vector.load %arg9[%c0_157, %c0_158] : memref<32x128xf32, #tpu.memory_space<vmem>>, vector<32x128xf32>
    %cst_159 = arith.constant dense<0.000000e+00> : vector<8x128xf32>
    %447 = tpu.matmul %398, %446, %cst_159 {dimension_numbers = #tpu.dot_dimension_numbers<[1], [0], [0], [1], [0, 0, 1, 1], [], []>} : vector<8x32xf32>, vector<32x128xf32>, vector<8x128xf32> -> vector<8x128xf32>
    %448 = arith.addf %445, %447 : vector<8x128xf32>
    %449 = arith.negf %448 : vector<8x128xf32>
    %450 = math.exp %449 : vector<8x128xf32>
    %cst_160 = arith.constant 1.000000e+00 : f32
    %451 = vector.broadcast %cst_160 : f32 to vector<8x128xf32>
    %452 = arith.addf %451, %450 : vector<8x128xf32>
    %453 = arith.divf %451, %452 : vector<8x128xf32>
    %454 = math.tanh %448 : vector<8x128xf32>
    %455 = vector.extract_strided_slice %453 {offsets = [0, 0], sizes = [8, 32], strides = [1, 1]} : vector<8x128xf32> to vector<8x32xf32>
    %456 = vector.extract_strided_slice %453 {offsets = [0, 32], sizes = [8, 32], strides = [1, 1]} : vector<8x128xf32> to vector<8x32xf32>
    %457 = vector.extract_strided_slice %454 {offsets = [0, 64], sizes = [8, 32], strides = [1, 1]} : vector<8x128xf32> to vector<8x32xf32>
    %458 = vector.extract_strided_slice %453 {offsets = [0, 96], sizes = [8, 32], strides = [1, 1]} : vector<8x128xf32> to vector<8x32xf32>
    %459 = arith.mulf %456, %396 : vector<8x32xf32>
    %460 = arith.mulf %455, %457 : vector<8x32xf32>
    %461 = arith.addf %459, %460 : vector<8x32xf32>
    %462 = math.tanh %461 : vector<8x32xf32>
    %463 = arith.mulf %458, %462 : vector<8x32xf32>
    %c0_161 = arith.constant 0 : index
    %c0_162 = arith.constant 0 : index
    %464 = vector.load %arg7[%c0_161, %c0_162] : memref<1x128xf32, #tpu.memory_space<vmem>>, vector<1x128xf32>
    %c0_163 = arith.constant 0 : index
    %c0_164 = arith.constant 0 : index
    %465 = vector.load %arg5[%c0_163, %c0_164] : memref<32x128xf32, #tpu.memory_space<vmem>>, vector<32x128xf32>
    %cst_165 = arith.constant dense<0.000000e+00> : vector<8x128xf32>
    %466 = tpu.matmul %417, %465, %cst_165 {dimension_numbers = #tpu.dot_dimension_numbers<[1], [0], [0], [1], [0, 0, 1, 1], [], []>} : vector<8x32xf32>, vector<32x128xf32>, vector<8x128xf32> -> vector<8x128xf32>
    %467 = vector.broadcast %464 : vector<1x128xf32> to vector<8x128xf32>
    %468 = arith.addf %467, %466 : vector<8x128xf32>
    %c0_166 = arith.constant 0 : index
    %c0_167 = arith.constant 0 : index
    %469 = vector.load %arg6[%c0_166, %c0_167] : memref<32x128xf32, #tpu.memory_space<vmem>>, vector<32x128xf32>
    %cst_168 = arith.constant dense<0.000000e+00> : vector<8x128xf32>
    %470 = tpu.matmul %440, %469, %cst_168 {dimension_numbers = #tpu.dot_dimension_numbers<[1], [0], [0], [1], [0, 0, 1, 1], [], []>} : vector<8x32xf32>, vector<32x128xf32>, vector<8x128xf32> -> vector<8x128xf32>
    %471 = arith.addf %468, %470 : vector<8x128xf32>
    %472 = arith.negf %471 : vector<8x128xf32>
    %473 = math.exp %472 : vector<8x128xf32>
    %cst_169 = arith.constant 1.000000e+00 : f32
    %474 = vector.broadcast %cst_169 : f32 to vector<8x128xf32>
    %475 = arith.addf %474, %473 : vector<8x128xf32>
    %476 = arith.divf %474, %475 : vector<8x128xf32>
    %477 = math.tanh %471 : vector<8x128xf32>
    %478 = vector.extract_strided_slice %476 {offsets = [0, 0], sizes = [8, 32], strides = [1, 1]} : vector<8x128xf32> to vector<8x32xf32>
    %479 = vector.extract_strided_slice %476 {offsets = [0, 32], sizes = [8, 32], strides = [1, 1]} : vector<8x128xf32> to vector<8x32xf32>
    %480 = vector.extract_strided_slice %477 {offsets = [0, 64], sizes = [8, 32], strides = [1, 1]} : vector<8x128xf32> to vector<8x32xf32>
    %481 = vector.extract_strided_slice %476 {offsets = [0, 96], sizes = [8, 32], strides = [1, 1]} : vector<8x128xf32> to vector<8x32xf32>
    %482 = arith.mulf %479, %438 : vector<8x32xf32>
    %483 = arith.mulf %478, %480 : vector<8x32xf32>
    %484 = arith.addf %482, %483 : vector<8x32xf32>
    %485 = math.tanh %484 : vector<8x32xf32>
    %486 = arith.mulf %481, %485 : vector<8x32xf32>
    %c0_170 = arith.constant 0 : index
    %c0_171 = arith.constant 0 : index
    %487 = vector.load %arg10[%c0_170, %c0_171] : memref<1x128xf32, #tpu.memory_space<vmem>>, vector<1x128xf32>
    %c0_172 = arith.constant 0 : index
    %c0_173 = arith.constant 0 : index
    %488 = vector.load %arg8[%c0_172, %c0_173] : memref<32x128xf32, #tpu.memory_space<vmem>>, vector<32x128xf32>
    %cst_174 = arith.constant dense<0.000000e+00> : vector<8x128xf32>
    %489 = tpu.matmul %440, %488, %cst_174 {dimension_numbers = #tpu.dot_dimension_numbers<[1], [0], [0], [1], [0, 0, 1, 1], [], []>} : vector<8x32xf32>, vector<32x128xf32>, vector<8x128xf32> -> vector<8x128xf32>
    %490 = vector.broadcast %487 : vector<1x128xf32> to vector<8x128xf32>
    %491 = arith.addf %490, %489 : vector<8x128xf32>
    %c0_175 = arith.constant 0 : index
    %c0_176 = arith.constant 0 : index
    %492 = vector.load %arg9[%c0_175, %c0_176] : memref<32x128xf32, #tpu.memory_space<vmem>>, vector<32x128xf32>
    %cst_177 = arith.constant dense<0.000000e+00> : vector<8x128xf32>
    %493 = tpu.matmul %463, %492, %cst_177 {dimension_numbers = #tpu.dot_dimension_numbers<[1], [0], [0], [1], [0, 0, 1, 1], [], []>} : vector<8x32xf32>, vector<32x128xf32>, vector<8x128xf32> -> vector<8x128xf32>
    %494 = arith.addf %491, %493 : vector<8x128xf32>
    %495 = arith.negf %494 : vector<8x128xf32>
    %496 = math.exp %495 : vector<8x128xf32>
    %cst_178 = arith.constant 1.000000e+00 : f32
    %497 = vector.broadcast %cst_178 : f32 to vector<8x128xf32>
    %498 = arith.addf %497, %496 : vector<8x128xf32>
    %499 = arith.divf %497, %498 : vector<8x128xf32>
    %500 = math.tanh %494 : vector<8x128xf32>
    %501 = vector.extract_strided_slice %499 {offsets = [0, 0], sizes = [8, 32], strides = [1, 1]} : vector<8x128xf32> to vector<8x32xf32>
    %502 = vector.extract_strided_slice %499 {offsets = [0, 32], sizes = [8, 32], strides = [1, 1]} : vector<8x128xf32> to vector<8x32xf32>
    %503 = vector.extract_strided_slice %500 {offsets = [0, 64], sizes = [8, 32], strides = [1, 1]} : vector<8x128xf32> to vector<8x32xf32>
    %504 = vector.extract_strided_slice %499 {offsets = [0, 96], sizes = [8, 32], strides = [1, 1]} : vector<8x128xf32> to vector<8x32xf32>
    %505 = arith.mulf %502, %461 : vector<8x32xf32>
    %506 = arith.mulf %501, %503 : vector<8x32xf32>
    %507 = arith.addf %505, %506 : vector<8x32xf32>
    %508 = math.tanh %507 : vector<8x32xf32>
    %509 = arith.mulf %504, %508 : vector<8x32xf32>
    %c0_179 = arith.constant 0 : index
    %c0_180 = arith.constant 0 : index
    %510 = vector.load %arg10[%c0_179, %c0_180] : memref<1x128xf32, #tpu.memory_space<vmem>>, vector<1x128xf32>
    %c0_181 = arith.constant 0 : index
    %c0_182 = arith.constant 0 : index
    %511 = vector.load %arg8[%c0_181, %c0_182] : memref<32x128xf32, #tpu.memory_space<vmem>>, vector<32x128xf32>
    %cst_183 = arith.constant dense<0.000000e+00> : vector<8x128xf32>
    %512 = tpu.matmul %486, %511, %cst_183 {dimension_numbers = #tpu.dot_dimension_numbers<[1], [0], [0], [1], [0, 0, 1, 1], [], []>} : vector<8x32xf32>, vector<32x128xf32>, vector<8x128xf32> -> vector<8x128xf32>
    %513 = vector.broadcast %510 : vector<1x128xf32> to vector<8x128xf32>
    %514 = arith.addf %513, %512 : vector<8x128xf32>
    %c0_184 = arith.constant 0 : index
    %c0_185 = arith.constant 0 : index
    %515 = vector.load %arg9[%c0_184, %c0_185] : memref<32x128xf32, #tpu.memory_space<vmem>>, vector<32x128xf32>
    %cst_186 = arith.constant dense<0.000000e+00> : vector<8x128xf32>
    %516 = tpu.matmul %509, %515, %cst_186 {dimension_numbers = #tpu.dot_dimension_numbers<[1], [0], [0], [1], [0, 0, 1, 1], [], []>} : vector<8x32xf32>, vector<32x128xf32>, vector<8x128xf32> -> vector<8x128xf32>
    %517 = arith.addf %514, %516 : vector<8x128xf32>
    %518 = arith.negf %517 : vector<8x128xf32>
    %519 = math.exp %518 : vector<8x128xf32>
    %cst_187 = arith.constant 1.000000e+00 : f32
    %520 = vector.broadcast %cst_187 : f32 to vector<8x128xf32>
    %521 = arith.addf %520, %519 : vector<8x128xf32>
    %522 = arith.divf %520, %521 : vector<8x128xf32>
    %523 = math.tanh %517 : vector<8x128xf32>
    %524 = vector.extract_strided_slice %522 {offsets = [0, 0], sizes = [8, 32], strides = [1, 1]} : vector<8x128xf32> to vector<8x32xf32>
    %525 = vector.extract_strided_slice %522 {offsets = [0, 32], sizes = [8, 32], strides = [1, 1]} : vector<8x128xf32> to vector<8x32xf32>
    %526 = vector.extract_strided_slice %523 {offsets = [0, 64], sizes = [8, 32], strides = [1, 1]} : vector<8x128xf32> to vector<8x32xf32>
    %527 = vector.extract_strided_slice %522 {offsets = [0, 96], sizes = [8, 32], strides = [1, 1]} : vector<8x128xf32> to vector<8x32xf32>
    %528 = arith.mulf %525, %507 : vector<8x32xf32>
    %529 = arith.mulf %524, %526 : vector<8x32xf32>
    %530 = arith.addf %528, %529 : vector<8x32xf32>
    %531 = math.tanh %530 : vector<8x32xf32>
    %532 = arith.mulf %527, %531 : vector<8x32xf32>
    %533 = tpu.concatenate %138, %203, %268, %333, %398, %463, %509, %532 in 1 : vector<8x32xf32>, vector<8x32xf32>, vector<8x32xf32>, vector<8x32xf32>, vector<8x32xf32>, vector<8x32xf32>, vector<8x32xf32>, vector<8x32xf32> -> vector<8x256xf32>
    %c0_188 = arith.constant 0 : index
    %c0_189 = arith.constant 0 : index
    %534 = vector.load %arg11[%c0_188, %c0_189] : memref<8x256xf32, #tpu.memory_space<vmem>>, vector<8x256xf32>
    tpu.vector_store %arg11[%c0_188, %c0_189], %533 {strides = array<i32>} : memref<8x256xf32, #tpu.memory_space<vmem>>, vector<8x256xf32>,
    %c0_190 = arith.constant 0 : index
    %c0_191 = arith.constant 0 : index
    %c0_192 = arith.constant 0 : index
    %535 = vector.load %arg12[%c0_190, %c0_191, %c0_192] : memref<3x8x32xf32, #tpu.memory_space<vmem>>, vector<1x8x32xf32>
    %536 = vector.shape_cast %535 : vector<1x8x32xf32> to vector<8x32xf32>
    %537 = vector.shape_cast %417 : vector<8x32xf32> to vector<1x8x32xf32>
    tpu.vector_store %arg12[%c0_190, %c0_191, %c0_192], %537 {strides = array<i32>} : memref<3x8x32xf32, #tpu.memory_space<vmem>>, vector<1x8x32xf32>,
    %c0_193 = arith.constant 0 : index
    %c0_194 = arith.constant 0 : index
    %c0_195 = arith.constant 0 : index
    %538 = vector.load %arg13[%c0_193, %c0_194, %c0_195] : memref<3x8x32xf32, #tpu.memory_space<vmem>>, vector<1x8x32xf32>
    %539 = vector.shape_cast %538 : vector<1x8x32xf32> to vector<8x32xf32>
    %540 = vector.shape_cast %415 : vector<8x32xf32> to vector<1x8x32xf32>
    tpu.vector_store %arg13[%c0_193, %c0_194, %c0_195], %540 {strides = array<i32>} : memref<3x8x32xf32, #tpu.memory_space<vmem>>, vector<1x8x32xf32>,
    %c1 = arith.constant 1 : index
    %c0_196 = arith.constant 0 : index
    %c0_197 = arith.constant 0 : index
    %541 = vector.load %arg12[%c1, %c0_196, %c0_197] : memref<3x8x32xf32, #tpu.memory_space<vmem>>, vector<1x8x32xf32>
    %542 = vector.shape_cast %541 : vector<1x8x32xf32> to vector<8x32xf32>
    %543 = vector.shape_cast %486 : vector<8x32xf32> to vector<1x8x32xf32>
    tpu.vector_store %arg12[%c1, %c0_196, %c0_197], %543 {strides = array<i32>} : memref<3x8x32xf32, #tpu.memory_space<vmem>>, vector<1x8x32xf32>,
    %c1_198 = arith.constant 1 : index
    %c0_199 = arith.constant 0 : index
    %c0_200 = arith.constant 0 : index
    %544 = vector.load %arg13[%c1_198, %c0_199, %c0_200] : memref<3x8x32xf32, #tpu.memory_space<vmem>>, vector<1x8x32xf32>
    %545 = vector.shape_cast %544 : vector<1x8x32xf32> to vector<8x32xf32>
    %546 = vector.shape_cast %484 : vector<8x32xf32> to vector<1x8x32xf32>
    tpu.vector_store %arg13[%c1_198, %c0_199, %c0_200], %546 {strides = array<i32>} : memref<3x8x32xf32, #tpu.memory_space<vmem>>, vector<1x8x32xf32>,
    %c2 = arith.constant 2 : index
    %c0_201 = arith.constant 0 : index
    %c0_202 = arith.constant 0 : index
    %547 = vector.load %arg12[%c2, %c0_201, %c0_202] : memref<3x8x32xf32, #tpu.memory_space<vmem>>, vector<1x8x32xf32>
    %548 = vector.shape_cast %547 : vector<1x8x32xf32> to vector<8x32xf32>
    %549 = vector.shape_cast %532 : vector<8x32xf32> to vector<1x8x32xf32>
    tpu.vector_store %arg12[%c2, %c0_201, %c0_202], %549 {strides = array<i32>} : memref<3x8x32xf32, #tpu.memory_space<vmem>>, vector<1x8x32xf32>,
    %c2_203 = arith.constant 2 : index
    %c0_204 = arith.constant 0 : index
    %c0_205 = arith.constant 0 : index
    %550 = vector.load %arg13[%c2_203, %c0_204, %c0_205] : memref<3x8x32xf32, #tpu.memory_space<vmem>>, vector<1x8x32xf32>
    %551 = vector.shape_cast %550 : vector<1x8x32xf32> to vector<8x32xf32>
    %552 = vector.shape_cast %530 : vector<8x32xf32> to vector<1x8x32xf32>
    tpu.vector_store %arg13[%c2_203, %c0_204, %c0_205], %552 {strides = array<i32>} : memref<3x8x32xf32, #tpu.memory_space<vmem>>, vector<1x8x32xf32>,
    return
  }
  func.func @transform_0(%arg0: i32) -> (i32, i32, i32) {
    %c0_i32 = arith.constant 0 : i32
    %c0_i32_0 = arith.constant 0 : i32
    %c0_i32_1 = arith.constant 0 : i32
    return %c0_i32, %arg0, %c0_i32_0 : i32, i32, i32
  }
  func.func @transform_1(%arg0: i32) -> (i32, i32) {
    %c0_i32 = arith.constant 0 : i32
    %c0_i32_0 = arith.constant 0 : i32
    %c0_i32_1 = arith.constant 0 : i32
    return %c0_i32, %c0_i32_0 : i32, i32
  }
  func.func @transform_2(%arg0: i32) -> (i32, i32) {
    %c0_i32 = arith.constant 0 : i32
    %c0_i32_0 = arith.constant 0 : i32
    %c0_i32_1 = arith.constant 0 : i32
    return %c0_i32, %c0_i32_0 : i32, i32
  }
  func.func @transform_3(%arg0: i32) -> (i32, i32) {
    %c0_i32 = arith.constant 0 : i32
    %c0_i32_0 = arith.constant 0 : i32
    %c0_i32_1 = arith.constant 0 : i32
    return %c0_i32, %c0_i32_0 : i32, i32
  }
  func.func @transform_4(%arg0: i32) -> (i32, i32) {
    %c0_i32 = arith.constant 0 : i32
    %c0_i32_0 = arith.constant 0 : i32
    %c0_i32_1 = arith.constant 0 : i32
    return %c0_i32, %c0_i32_0 : i32, i32
  }
  func.func @transform_5(%arg0: i32) -> (i32, i32) {
    %c0_i32 = arith.constant 0 : i32
    %c0_i32_0 = arith.constant 0 : i32
    %c0_i32_1 = arith.constant 0 : i32
    return %c0_i32, %c0_i32_0 : i32, i32
  }
  func.func @transform_6(%arg0: i32) -> (i32, i32) {
    %c0_i32 = arith.constant 0 : i32
    %c0_i32_0 = arith.constant 0 : i32
    %c0_i32_1 = arith.constant 0 : i32
    return %c0_i32, %c0_i32_0 : i32, i32
  }
  func.func @transform_7(%arg0: i32) -> (i32, i32) {
    %c0_i32 = arith.constant 0 : i32
    %c0_i32_0 = arith.constant 0 : i32
    %c0_i32_1 = arith.constant 0 : i32
    return %c0_i32, %c0_i32_0 : i32, i32
  }
  func.func @transform_8(%arg0: i32) -> (i32, i32) {
    %c0_i32 = arith.constant 0 : i32
    %c0_i32_0 = arith.constant 0 : i32
    %c0_i32_1 = arith.constant 0 : i32
    return %c0_i32, %c0_i32_0 : i32, i32
  }
  func.func @transform_9(%arg0: i32) -> (i32, i32) {
    %c0_i32 = arith.constant 0 : i32
    %c0_i32_0 = arith.constant 0 : i32
    %c0_i32_1 = arith.constant 0 : i32
    return %c0_i32, %c0_i32_0 : i32, i32
  }
  func.func @transform_10(%arg0: i32) -> (i32, i32) {
    %c0_i32 = arith.constant 0 : i32
    %c0_i32_0 = arith.constant 0 : i32
    return %arg0, %c0_i32 : i32, i32
  }
  func.func @transform_11(%arg0: i32) -> (i32, i32, i32) {
    %c0_i32 = arith.constant 0 : i32
    %c0_i32_0 = arith.constant 0 : i32
    %c0_i32_1 = arith.constant 0 : i32
    return %c0_i32, %arg0, %c0_i32_0 : i32, i32, i32
  }
  func.func @transform_12(%arg0: i32) -> (i32, i32, i32) {
    %c0_i32 = arith.constant 0 : i32
    %c0_i32_0 = arith.constant 0 : i32
    %c0_i32_1 = arith.constant 0 : i32
    return %c0_i32, %arg0, %c0_i32_0 : i32, i32, i32
  }
}

</mosaic_0001>

<llo_original>
// kernel: encoder_forward.1
$region0: #{encoder_forward.1}
  #allocation0 [shape = 'u32[]', space=smem, size = 0x4, offset = 0x4, fixed_abs, tag = 'smem constant byte address 0x4 - core index']
  #allocation1 [shape = 'u32[72,128]{1,0:T(1,128)}', space=vmem, size = 0x9000, scoped, tag = 'internal scratch']
  %s0 = inlined_call_operand.vmem [shape: f32[8,8,16], index: 0, kind: input, shape index: {}]
  %s1 = inlined_call_operand.hbm [shape: f32[16,128], index: 1, kind: input, shape index: {}]
  %s2 = inlined_call_operand.vmem [shape: f32[32,128], index: 2, kind: input, shape index: {}]
  %s3 = inlined_call_operand.vmem [shape: f32[1,128], index: 3, kind: input, shape index: {}]
  %s4 = inlined_call_operand.vmem [shape: f32[32,128], index: 4, kind: input, shape index: {}]
  %s5 = inlined_call_operand.vmem [shape: f32[32,128], index: 5, kind: input, shape index: {}]
  %s6 = inlined_call_operand.vmem [shape: f32[1,128], index: 6, kind: input, shape index: {}]
  %s7 = inlined_call_operand.vmem [shape: f32[32,128], index: 7, kind: input, shape index: {}]
  %s8 = inlined_call_operand.vmem [shape: f32[32,128], index: 8, kind: input, shape index: {}]
  %s9 = inlined_call_operand.vmem [shape: f32[1,128], index: 9, kind: input, shape index: {}]
  %s10 = inlined_call_operand.vmem [shape: f32[8,256], index: 10, kind: output, shape index: {0}]
  %s11 = inlined_call_operand.vmem [shape: f32[3,8,32], index: 11, kind: output, shape index: {1}]
  %s12 = inlined_call_operand.vmem [shape: f32[3,8,32], index: 12, kind: output, shape index: {2}]
  %13 = xla_tuple %s10, %s11, %s12
  %s14 = sld [smem:[#allocation0]]
  $region70: #{encoder_forward.1} parent=0
    _
  %s16 = ssub.s32 1, %s14
  %s17 = scalar_select 0, %s16, %s14
  $region1: #{encoder_forward.1} parent=0
    #allocation2 [shape = 'u8[8192]{0}', space=vmem, size = 0x2000, scoped, tag = 'input window, operand 1, single buffered']
    #allocation3 [shape = 's32[1]{0}', space=sflag, size = 0x4, scoped, tag = 'scoped memory for encoder_forward.1']
    %18 = vsyncpa [#allocation3], 0
    // Predicated region
    $region2: #{encoder_forward.1} parent=1 // pred_check
      _
    $region3: #{encoder_forward.1} parent=1 // pred_check_branch
      %20 = sbr.rel (0) target = $region5
    $region4: #{encoder_forward.1} parent=1 // pred_region
      _
    $region5: #{encoder_forward.1} parent=1 // pred_fallthru
      _
    // Predicated region
    $region6: #{encoder_forward.1} parent=1 // pred_check
      _
    $region7: #{encoder_forward.1} parent=1 // pred_check_branch
      %22 = sbr.rel (0) target = $region9
    $region8: #{encoder_forward.1} parent=1 // pred_region
      %24 = vsyncadd [#allocation3], 0
      %s25 = sshll.u32 %s1, 4
      %s26 = int_to_ptr.hbm [resolvable:$true] %s25
      %s27 = sshll.u32 [#allocation2], 4
      %s28 = int_to_ptr.vmem [resolvable:$true] %s27
      %33 = dma.hbm_to_vmem [thread:$0]  %s26, 256, %s28, [#allocation3], 128, 128, 8
    $region9: #{encoder_forward.1} parent=1 // pred_fallthru
      _
    // Predicated region
    $region10: #{encoder_forward.1} parent=1 // pred_check
      _
    $region11: #{encoder_forward.1} parent=1 // pred_check_branch
      %35 = sbr.rel (0) target = $region13
    $region12: #{encoder_forward.1} parent=1 // pred_region
      _
    $region13: #{encoder_forward.1} parent=1 // pred_fallthru
      _
    // Predicated region
    $region14: #{encoder_forward.1} parent=1 // pred_check
      _
    $region15: #{encoder_forward.1} parent=1 // pred_check_branch
      %37 = sbr.rel (0) target = $region17
    $region16: #{encoder_forward.1} parent=1 // pred_region
      _
    $region17: #{encoder_forward.1} parent=1 // pred_fallthru
      _
    // Predicated region
    $region18: #{encoder_forward.1} parent=1 // pred_check
      _
    $region19: #{encoder_forward.1} parent=1 // pred_check_branch
      %39 = sbr.rel (0) target = $region21
    $region20: #{encoder_forward.1} parent=1 // pred_region
      _
    $region21: #{encoder_forward.1} parent=1 // pred_fallthru
      _
    // Predicated region
    $region22: #{encoder_forward.1} parent=1 // pred_check
      _
    $region23: #{encoder_forward.1} parent=1 // pred_check_branch
      %41 = sbr.rel (0) target = $region25
    $region24: #{encoder_forward.1} parent=1 // pred_region
      _
    $region25: #{encoder_forward.1} parent=1 // pred_fallthru
      _
    // Predicated region
    $region26: #{encoder_forward.1} parent=1 // pred_check
      _
    $region27: #{encoder_forward.1} parent=1 // pred_check_branch
      %43 = sbr.rel (0) target = $region29
    $region28: #{encoder_forward.1} parent=1 // pred_region
      _
    $region29: #{encoder_forward.1} parent=1 // pred_fallthru
      _
    // Predicated region
    $region30: #{encoder_forward.1} parent=1 // pred_check
      _
    $region31: #{encoder_forward.1} parent=1 // pred_check_branch
      %45 = sbr.rel (0) target = $region33
    $region32: #{encoder_forward.1} parent=1 // pred_region
      _
    $region33: #{encoder_forward.1} parent=1 // pred_fallthru
      _
    // Predicated region
    $region34: #{encoder_forward.1} parent=1 // pred_check
      _
    $region35: #{encoder_forward.1} parent=1 // pred_check_branch
      %47 = sbr.rel (0) target = $region37
    $region36: #{encoder_forward.1} parent=1 // pred_region
      _
    $region37: #{encoder_forward.1} parent=1 // pred_fallthru
      _
    // Predicated region
    $region38: #{encoder_forward.1} parent=1 // pred_check
      _
    $region39: #{encoder_forward.1} parent=1 // pred_check_branch
      %49 = sbr.rel (0) target = $region41
    $region40: #{encoder_forward.1} parent=1 // pred_region
      _
    $region41: #{encoder_forward.1} parent=1 // pred_fallthru
      _
    // Predicated region
    $region42: #{encoder_forward.1} parent=1 // pred_check
      _
    $region43: #{encoder_forward.1} parent=1 // pred_check_branch
      %51 = sbr.rel (0) target = $region45
    $region44: #{encoder_forward.1} parent=1 // pred_region
      %53 = dma.done [#allocation3], 256
    $region45: #{encoder_forward.1} parent=1 // pred_fallthru
      _
    %v54 = vld [vmem:[%s0] sm:$0xff]
    %v55 = vld [vmem:[%s0 + $0x8] sm:$0xff]
    %v56 = vld [vmem:[%s0 + $0x10] sm:$0xff]
    %v57 = vld [vmem:[%s0 + $0x18] sm:$0xff]
    %v58 = vld [vmem:[%s0 + $0x20] sm:$0xff]
    %v59 = vld [vmem:[%s0 + $0x28] sm:$0xff]
    %v60 = vld [vmem:[%s0 + $0x30] sm:$0xff]
    %v61 = vld [vmem:[%s0 + $0x38] sm:$0xff]
    %v62 = vld [vmem:[#allocation2] sm:$0xff]
    %v63 = vld [vmem:[#allocation2 + $0x8] sm:$0xff]
    %v64 = vld [vmem:[%s3] sm:$0x1]
    %v66 = vperm.slane %v64, 0
    %vm68 = vcmask 130048
    %v70 = vsel %vm68, %v54, 0
    %v73 = vsel %vm68, %v55, 0
    %v76 = vsel %vm68, %v56, 0
    %v79 = vsel %vm68, %v57, 0
    %v82 = vsel %vm68, %v58, 0
    %v85 = vsel %vm68, %v59, 0
    %v88 = vsel %vm68, %v60, 0
    %v91 = vsel %vm68, %v61, 0
    %93 = vmatpush.msra.mxu0 0.0
    %94 = vmatpush.msra.mxu0 0.0
    %95 = vmatpush.msra.mxu0 0.0
    %96 = vmatpush.msra.mxu0 0.0
    %97 = vmatpush.msra.mxu0 0.0
    %98 = vmatpush.msra.mxu0 0.0
    %99 = vmatpush.msra.mxu0 0.0
    %100 = vmatpush.msra.mxu0 0.0
    %101 = vmatpush.msra.mxu0 0.0
    %102 = vmatpush.msra.mxu0 0.0
    %103 = vmatpush.msra.mxu0 0.0
    %104 = vmatpush.msra.mxu0 0.0
    %105 = vmatpush.msra.mxu0 0.0
    %106 = vmatpush.msra.mxu0 0.0
    %107 = vmatpush.msra.mxu0 %v63
    %108 = vmatpush.msra.mxu0 %v62
    %109 = vmatmul.f32.gmra.mxu0 %v70
    %v110 = vpop.f32.mrf.mxu0
    %v111 = vadd.f32 %v66, %v110
    %112 = vmatmul.f32.gmra.mxu0 %v73
    %v113 = vpop.f32.mrf.mxu0
    %v114 = vadd.f32 %v66, %v113
    %115 = vmatmul.f32.gmra.mxu0 %v76
    %v116 = vpop.f32.mrf.mxu0
    %v117 = vadd.f32 %v66, %v116
    %118 = vmatmul.f32.gmra.mxu0 %v79
    %v119 = vpop.f32.mrf.mxu0
    %v120 = vadd.f32 %v66, %v119
    %121 = vmatmul.f32.gmra.mxu0 %v82
    %v122 = vpop.f32.mrf.mxu0
    %v123 = vadd.f32 %v66, %v122
    %124 = vmatmul.f32.gmra.mxu0 %v85
    %v125 = vpop.f32.mrf.mxu0
    %v126 = vadd.f32 %v66, %v125
    %127 = vmatmul.f32.gmra.mxu0 %v88
    %v128 = vpop.f32.mrf.mxu0
    %v129 = vadd.f32 %v66, %v128
    %130 = vmatmul.f32.gmra.mxu0 %v91
    %v131 = vpop.f32.mrf.mxu0
    %v132 = vadd.f32 %v66, %v131
    %133 = vdwg.mxu0
    %v134 = vld [vmem:[%s2] sm:$0xff]
    %v135 = vld [vmem:[%s2 + $0x8] sm:$0xff]
    %v136 = vld [vmem:[%s2 + $0x10] sm:$0xff]
    %v137 = vld [vmem:[%s2 + $0x18] sm:$0xff]
    %vm138 = vcmask 261120
    %v140 = vsel %vm138, 0.0, 0
    %142 = vmatpush.msra.mxu0 0.0
    %143 = vmatpush.msra.mxu0 0.0
    %144 = vmatpush.msra.mxu0 0.0
    %145 = vmatpush.msra.mxu0 0.0
    %146 = vmatpush.msra.mxu0 0.0
    %147 = vmatpush.msra.mxu0 0.0
    %148 = vmatpush.msra.mxu0 0.0
    %149 = vmatpush.msra.mxu0 0.0
    %150 = vmatpush.msra.mxu0 0.0
    %151 = vmatpush.msra.mxu0 0.0
    %152 = vmatpush.msra.mxu0 0.0
    %153 = vmatpush.msra.mxu0 0.0
    %154 = vmatpush.msra.mxu0 %v137
    %155 = vmatpush.msra.mxu0 %v136
    %156 = vmatpush.msra.mxu0 %v135
    %157 = vmatpush.msra.mxu0 %v134
    %158 = vmatmul.f32.gmra.mxu0 %v140
    %v159 = vpop.f32.mrf.mxu0
    %v160 = vadd.f32 0.0, %v159
    %161 = vdwg.mxu0
    %v162 = vadd.f32 %v111, %v160
    %v163 = vxor.u32 %v162, 2147483648
    %v164 = vmul.f32 %v163, 1.442695
    %v165 = vpow.pop %v164
    %v166 = vadd.f32 %v165, 1.0
    %v167 = vrcp.pop %v166
    %v168 = vmul.f32 %v166, %v167
    %v169 = vsub.f32 1.0, %v168
    %v170 = vmul.f32 %v167, %v169
    %v171 = vadd.f32 %v167, %v170
    %vm172 = vweird.f32 %v166
    %vm173 = vweird.f32 %v167
    %vm174 = vmor %vm172, %vm173
    %v175 = vsel %vm174, %v167, %v171
    %v176 = vand.u32 2147483647, %v166
    %vm177 = vcmp.eq.f32.partialorder %v176, 8.507059e+37
    %v178 = vand.u32 %v166, 2147483648
    %v179 = vor.u32 1.1754944e-38, %v178
    %v180 = vsel %vm177, %v179, %v175
    %v181 = vmul.f32 1.0, %v180
    %v182 = vtanh.pop %v162
    %v183 = vmul.f32 %v181, 0.0
    %185 = vrot.lane.b32.xlu0 %v182, 64
    %v186 = vpop.permute.xlu0 %185
    %v188 = vmul.f32 %v181, %v186
    %190 = vrot.lane.b32.xlu0 %v188, 32
    %v191 = vpop.permute.xlu0 %190
    %v193 = vadd.f32 %v183, %v191
    %v194 = vtanh.pop %v193
    %196 = vrot.lane.b32.xlu0 %v194, 64
    %v197 = vpop.permute.xlu0 %196
    %v199 = vmul.f32 %v181, %v197
    %201 = vrot.lane.b32.xlu0 %v199, 32
    %v202 = vpop.permute.xlu0 %201
    %v203 = vsel %vm138, %v202, 0
    %205 = vmatpush.msra.mxu0 0.0
    %206 = vmatpush.msra.mxu0 0.0
    %207 = vmatpush.msra.mxu0 0.0
    %208 = vmatpush.msra.mxu0 0.0
    %209 = vmatpush.msra.mxu0 0.0
    %210 = vmatpush.msra.mxu0 0.0
    %211 = vmatpush.msra.mxu0 0.0
    %212 = vmatpush.msra.mxu0 0.0
    %213 = vmatpush.msra.mxu0 0.0
    %214 = vmatpush.msra.mxu0 0.0
    %215 = vmatpush.msra.mxu0 0.0
    %216 = vmatpush.msra.mxu0 0.0
    %217 = vmatpush.msra.mxu0 %v137
    %218 = vmatpush.msra.mxu0 %v136
    %219 = vmatpush.msra.mxu0 %v135
    %220 = vmatpush.msra.mxu0 %v134
    %221 = vmatmul.f32.gmra.mxu0 %v203
    %v222 = vpop.f32.mrf.mxu0
    %v223 = vadd.f32 0.0, %v222
    %224 = vdwg.mxu0
    %v225 = vadd.f32 %v114, %v223
    %v226 = vxor.u32 %v225, 2147483648
    %v227 = vmul.f32 %v226, 1.442695
    %v228 = vpow.pop %v227
    %v229 = vadd.f32 %v228, 1.0
    %v230 = vrcp.pop %v229
    %v231 = vmul.f32 %v229, %v230
    %v232 = vsub.f32 1.0, %v231
    %v233 = vmul.f32 %v230, %v232
    %v234 = vadd.f32 %v230, %v233
    %vm235 = vweird.f32 %v229
    %vm236 = vweird.f32 %v230
    %vm237 = vmor %vm235, %vm236
    %v238 = vsel %vm237, %v230, %v234
    %v239 = vand.u32 2147483647, %v229
    %vm240 = vcmp.eq.f32.partialorder %v239, 8.507059e+37
    %v241 = vand.u32 %v229, 2147483648
    %v242 = vor.u32 1.1754944e-38, %v241
    %v243 = vsel %vm240, %v242, %v238
    %v244 = vmul.f32 1.0, %v243
    %v245 = vtanh.pop %v225
    %v246 = vmul.f32 %v244, %v193
    %248 = vrot.lane.b32.xlu0 %v245, 64
    %v249 = vpop.permute.xlu0 %248
    %v251 = vmul.f32 %v244, %v249
    %253 = vrot.lane.b32.xlu0 %v251, 32
    %v254 = vpop.permute.xlu0 %253
    %v256 = vadd.f32 %v246, %v254
    %v257 = vtanh.pop %v256
    %259 = vrot.lane.b32.xlu0 %v257, 64
    %v260 = vpop.permute.xlu0 %259
    %v262 = vmul.f32 %v244, %v260
    %v263 = vld [vmem:[%s6] sm:$0x1]
    %v264 = vld [vmem:[%s4] sm:$0xff]
    %v265 = vld [vmem:[%s4 + $0x8] sm:$0xff]
    %v266 = vld [vmem:[%s4 + $0x10] sm:$0xff]
    %v267 = vld [vmem:[%s4 + $0x18] sm:$0xff]
    %268 = vmatpush.msra.mxu0 0.0
    %269 = vmatpush.msra.mxu0 0.0
    %270 = vmatpush.msra.mxu0 0.0
    %271 = vmatpush.msra.mxu0 0.0
    %272 = vmatpush.msra.mxu0 0.0
    %273 = vmatpush.msra.mxu0 0.0
    %274 = vmatpush.msra.mxu0 0.0
    %275 = vmatpush.msra.mxu0 0.0
    %276 = vmatpush.msra.mxu0 0.0
    %277 = vmatpush.msra.mxu0 0.0
    %278 = vmatpush.msra.mxu0 0.0
    %279 = vmatpush.msra.mxu0 0.0
    %280 = vmatpush.msra.mxu0 %v267
    %281 = vmatpush.msra.mxu0 %v266
    %282 = vmatpush.msra.mxu0 %v265
    %283 = vmatpush.msra.mxu0 %v264
    %284 = vmatmul.f32.gmra.mxu0 %v203
    %v285 = vpop.f32.mrf.mxu0
    %v286 = vadd.f32 0.0, %v285
    %287 = vdwg.mxu0
    %v289 = vperm.slane %v263, 0
    %v291 = vadd.f32 %v289, %v286
    %v292 = vld [vmem:[%s5] sm:$0xff]
    %v293 = vld [vmem:[%s5 + $0x8] sm:$0xff]
    %v294 = vld [vmem:[%s5 + $0x10] sm:$0xff]
    %v295 = vld [vmem:[%s5 + $0x18] sm:$0xff]
    %296 = vmatpush.msra.mxu0 0.0
    %297 = vmatpush.msra.mxu0 0.0
    %298 = vmatpush.msra.mxu0 0.0
    %299 = vmatpush.msra.mxu0 0.0
    %300 = vmatpush.msra.mxu0 0.0
    %301 = vmatpush.msra.mxu0 0.0
    %302 = vmatpush.msra.mxu0 0.0
    %303 = vmatpush.msra.mxu0 0.0
    %304 = vmatpush.msra.mxu0 0.0
    %305 = vmatpush.msra.mxu0 0.0
    %306 = vmatpush.msra.mxu0 0.0
    %307 = vmatpush.msra.mxu0 0.0
    %308 = vmatpush.msra.mxu0 %v295
    %309 = vmatpush.msra.mxu0 %v294
    %310 = vmatpush.msra.mxu0 %v293
    %311 = vmatpush.msra.mxu0 %v292
    %312 = vmatmul.f32.gmra.mxu0 %v140
    %v313 = vpop.f32.mrf.mxu0
    %v314 = vadd.f32 0.0, %v313
    %315 = vdwg.mxu0
    %v316 = vadd.f32 %v291, %v314
    %v317 = vxor.u32 %v316, 2147483648
    %v318 = vmul.f32 %v317, 1.442695
    %v319 = vpow.pop %v318
    %v320 = vadd.f32 %v319, 1.0
    %v321 = vrcp.pop %v320
    %v322 = vmul.f32 %v320, %v321
    %v323 = vsub.f32 1.0, %v322
    %v324 = vmul.f32 %v321, %v323
    %v325 = vadd.f32 %v321, %v324
    %vm326 = vweird.f32 %v320
    %vm327 = vweird.f32 %v321
    %vm328 = vmor %vm326, %vm327
    %v329 = vsel %vm328, %v321, %v325
    %v330 = vand.u32 2147483647, %v320
    %vm331 = vcmp.eq.f32.partialorder %v330, 8.507059e+37
    %v332 = vand.u32 %v320, 2147483648
    %v333 = vor.u32 1.1754944e-38, %v332
    %v334 = vsel %vm331, %v333, %v329
    %v335 = vmul.f32 1.0, %v334
    %v336 = vtanh.pop %v316
    %v337 = vmul.f32 %v335, 0.0
    %339 = vrot.lane.b32.xlu0 %v336, 64
    %v340 = vpop.permute.xlu0 %339
    %v342 = vmul.f32 %v335, %v340
    %344 = vrot.lane.b32.xlu0 %v342, 32
    %v345 = vpop.permute.xlu0 %344
    %v347 = vadd.f32 %v337, %v345
    %v348 = vtanh.pop %v347
    %350 = vrot.lane.b32.xlu0 %v348, 64
    %v351 = vpop.permute.xlu0 %350
    %v353 = vmul.f32 %v335, %v351
    %355 = vrot.lane.b32.xlu0 %v262, 32
    %v356 = vpop.permute.xlu0 %355
    %v357 = vsel %vm138, %v356, 0
    %359 = vmatpush.msra.mxu0 0.0
    %360 = vmatpush.msra.mxu0 0.0
    %361 = vmatpush.msra.mxu0 0.0
    %362 = vmatpush.msra.mxu0 0.0
    %363 = vmatpush.msra.mxu0 0.0
    %364 = vmatpush.msra.mxu0 0.0
    %365 = vmatpush.msra.mxu0 0.0
    %366 = vmatpush.msra.mxu0 0.0
    %367 = vmatpush.msra.mxu0 0.0
    %368 = vmatpush.msra.mxu0 0.0
    %369 = vmatpush.msra.mxu0 0.0
    %370 = vmatpush.msra.mxu0 0.0
    %371 = vmatpush.msra.mxu0 %v137
    %372 = vmatpush.msra.mxu0 %v136
    %373 = vmatpush.msra.mxu0 %v135
    %374 = vmatpush.msra.mxu0 %v134
    %375 = vmatmul.f32.gmra.mxu0 %v357
    %v376 = vpop.f32.mrf.mxu0
    %v377 = vadd.f32 0.0, %v376
    %378 = vdwg.mxu0
    %v379 = vadd.f32 %v117, %v377
    %v380 = vxor.u32 %v379, 2147483648
    %v381 = vmul.f32 %v380, 1.442695
    %v382 = vpow.pop %v381
    %v383 = vadd.f32 %v382, 1.0
    %v384 = vrcp.pop %v383
    %v385 = vmul.f32 %v383, %v384
    %v386 = vsub.f32 1.0, %v385
    %v387 = vmul.f32 %v384, %v386
    %v388 = vadd.f32 %v384, %v387
    %vm389 = vweird.f32 %v383
    %vm390 = vweird.f32 %v384
    %vm391 = vmor %vm389, %vm390
    %v392 = vsel %vm391, %v384, %v388
    %v393 = vand.u32 2147483647, %v383
    %vm394 = vcmp.eq.f32.partialorder %v393, 8.507059e+37
    %v395 = vand.u32 %v383, 2147483648
    %v396 = vor.u32 1.1754944e-38, %v395
    %v397 = vsel %vm394, %v396, %v392
    %v398 = vmul.f32 1.0, %v397
    %v399 = vtanh.pop %v379
    %v400 = vmul.f32 %v398, %v256
    %402 = vrot.lane.b32.xlu0 %v399, 64
    %v403 = vpop.permute.xlu0 %402
    %v405 = vmul.f32 %v398, %v403
    %407 = vrot.lane.b32.xlu0 %v405, 32
    %v408 = vpop.permute.xlu0 %407
    %v410 = vadd.f32 %v400, %v408
    %v411 = vtanh.pop %v410
    %413 = vrot.lane.b32.xlu0 %v411, 64
    %v414 = vpop.permute.xlu0 %413
    %v416 = vmul.f32 %v398, %v414
    %417 = vmatpush.msra.mxu0 0.0
    %418 = vmatpush.msra.mxu0 0.0
    %419 = vmatpush.msra.mxu0 0.0
    %420 = vmatpush.msra.mxu0 0.0
    %421 = vmatpush.msra.mxu0 0.0
    %422 = vmatpush.msra.mxu0 0.0
    %423 = vmatpush.msra.mxu0 0.0
    %424 = vmatpush.msra.mxu0 0.0
    %425 = vmatpush.msra.mxu0 0.0
    %426 = vmatpush.msra.mxu0 0.0
    %427 = vmatpush.msra.mxu0 0.0
    %428 = vmatpush.msra.mxu0 0.0
    %429 = vmatpush.msra.mxu0 %v267
    %430 = vmatpush.msra.mxu0 %v266
    %431 = vmatpush.msra.mxu0 %v265
    %432 = vmatpush.msra.mxu0 %v264
    %433 = vmatmul.f32.gmra.mxu0 %v357
    %v434 = vpop.f32.mrf.mxu0
    %v435 = vadd.f32 0.0, %v434
    %436 = vdwg.mxu0
    %v437 = vadd.f32 %v289, %v435
    %439 = vrot.lane.b32.xlu0 %v353, 32
    %v440 = vpop.permute.xlu0 %439
    %v441 = vsel %vm138, %v440, 0
    %443 = vmatpush.msra.mxu0 0.0
    %444 = vmatpush.msra.mxu0 0.0
    %445 = vmatpush.msra.mxu0 0.0
    %446 = vmatpush.msra.mxu0 0.0
    %447 = vmatpush.msra.mxu0 0.0
    %448 = vmatpush.msra.mxu0 0.0
    %449 = vmatpush.msra.mxu0 0.0
    %450 = vmatpush.msra.mxu0 0.0
    %451 = vmatpush.msra.mxu0 0.0
    %452 = vmatpush.msra.mxu0 0.0
    %453 = vmatpush.msra.mxu0 0.0
    %454 = vmatpush.msra.mxu0 0.0
    %455 = vmatpush.msra.mxu0 %v295
    %456 = vmatpush.msra.mxu0 %v294
    %457 = vmatpush.msra.mxu0 %v293
    %458 = vmatpush.msra.mxu0 %v292
    %459 = vmatmul.f32.gmra.mxu0 %v441
    %v460 = vpop.f32.mrf.mxu0
    %v461 = vadd.f32 0.0, %v460
    %462 = vdwg.mxu0
    %v463 = vadd.f32 %v437, %v461
    %v464 = vxor.u32 %v463, 2147483648
    %v465 = vmul.f32 %v464, 1.442695
    %v466 = vpow.pop %v465
    %v467 = vadd.f32 %v466, 1.0
    %v468 = vrcp.pop %v467
    %v469 = vmul.f32 %v467, %v468
    %v470 = vsub.f32 1.0, %v469
    %v471 = vmul.f32 %v468, %v470
    %v472 = vadd.f32 %v468, %v471
    %vm473 = vweird.f32 %v467
    %vm474 = vweird.f32 %v468
    %vm475 = vmor %vm473, %vm474
    %v476 = vsel %vm475, %v468, %v472
    %v477 = vand.u32 2147483647, %v467
    %vm478 = vcmp.eq.f32.partialorder %v477, 8.507059e+37
    %v479 = vand.u32 %v467, 2147483648
    %v480 = vor.u32 1.1754944e-38, %v479
    %v481 = vsel %vm478, %v480, %v476
    %v482 = vmul.f32 1.0, %v481
    %v483 = vtanh.pop %v463
    %v484 = vmul.f32 %v482, %v347
    %486 = vrot.lane.b32.xlu0 %v483, 64
    %v487 = vpop.permute.xlu0 %486
    %v489 = vmul.f32 %v482, %v487
    %491 = vrot.lane.b32.xlu0 %v489, 32
    %v492 = vpop.permute.xlu0 %491
    %v494 = vadd.f32 %v484, %v492
    %v495 = vtanh.pop %v494
    %497 = vrot.lane.b32.xlu0 %v495, 64
    %v498 = vpop.permute.xlu0 %497
    %v500 = vmul.f32 %v482, %v498
    %v501 = vld [vmem:[%s9] sm:$0x1]
    %v502 = vld [vmem:[%s7] sm:$0xff]
    %v503 = vld [vmem:[%s7 + $0x8] sm:$0xff]
    %v504 = vld [vmem:[%s7 + $0x10] sm:$0xff]
    %v505 = vld [vmem:[%s7 + $0x18] sm:$0xff]
    %506 = vmatpush.msra.mxu0 0.0
    %507 = vmatpush.msra.mxu0 0.0
    %508 = vmatpush.msra.mxu0 0.0
    %509 = vmatpush.msra.mxu0 0.0
    %510 = vmatpush.msra.mxu0 0.0
    %511 = vmatpush.msra.mxu0 0.0
    %512 = vmatpush.msra.mxu0 0.0
    %513 = vmatpush.msra.mxu0 0.0
    %514 = vmatpush.msra.mxu0 0.0
    %515 = vmatpush.msra.mxu0 0.0
    %516 = vmatpush.msra.mxu0 0.0
    %517 = vmatpush.msra.mxu0 0.0
    %518 = vmatpush.msra.mxu0 %v505
    %519 = vmatpush.msra.mxu0 %v504
    %520 = vmatpush.msra.mxu0 %v503
    %521 = vmatpush.msra.mxu0 %v502
    %522 = vmatmul.f32.gmra.mxu0 %v441
    %v523 = vpop.f32.mrf.mxu0
    %v524 = vadd.f32 0.0, %v523
    %525 = vdwg.mxu0
    %v527 = vperm.slane %v501, 0
    %v529 = vadd.f32 %v527, %v524
    %v530 = vld [vmem:[%s8] sm:$0xff]
    %v531 = vld [vmem:[%s8 + $0x8] sm:$0xff]
    %v532 = vld [vmem:[%s8 + $0x10] sm:$0xff]
    %v533 = vld [vmem:[%s8 + $0x18] sm:$0xff]
    %534 = vmatpush.msra.mxu0 0.0
    %535 = vmatpush.msra.mxu0 0.0
    %536 = vmatpush.msra.mxu0 0.0
    %537 = vmatpush.msra.mxu0 0.0
    %538 = vmatpush.msra.mxu0 0.0
    %539 = vmatpush.msra.mxu0 0.0
    %540 = vmatpush.msra.mxu0 0.0
    %541 = vmatpush.msra.mxu0 0.0
    %542 = vmatpush.msra.mxu0 0.0
    %543 = vmatpush.msra.mxu0 0.0
    %544 = vmatpush.msra.mxu0 0.0
    %545 = vmatpush.msra.mxu0 0.0
    %546 = vmatpush.msra.mxu0 %v533
    %547 = vmatpush.msra.mxu0 %v532
    %548 = vmatpush.msra.mxu0 %v531
    %549 = vmatpush.msra.mxu0 %v530
    %550 = vmatmul.f32.gmra.mxu0 %v140
    %v551 = vpop.f32.mrf.mxu0
    %v552 = vadd.f32 0.0, %v551
    %553 = vdwg.mxu0
    %v554 = vadd.f32 %v529, %v552
    %v555 = vxor.u32 %v554, 2147483648
    %v556 = vmul.f32 %v555, 1.442695
    %v557 = vpow.pop %v556
    %v558 = vadd.f32 %v557, 1.0
    %v559 = vrcp.pop %v558
    %v560 = vmul.f32 %v558, %v559
    %v561 = vsub.f32 1.0, %v560
    %v562 = vmul.f32 %v559, %v561
    %v563 = vadd.f32 %v559, %v562
    %vm564 = vweird.f32 %v558
    %vm565 = vweird.f32 %v559
    %vm566 = vmor %vm564, %vm565
    %v567 = vsel %vm566, %v559, %v563
    %v568 = vand.u32 2147483647, %v558
    %vm569 = vcmp.eq.f32.partialorder %v568, 8.507059e+37
    %v570 = vand.u32 %v558, 2147483648
    %v571 = vor.u32 1.1754944e-38, %v570
    %v572 = vsel %vm569, %v571, %v567
    %v573 = vmul.f32 1.0, %v572
    %v574 = vtanh.pop %v554
    %v575 = vmul.f32 %v573, 0.0
    %577 = vrot.lane.b32.xlu0 %v574, 64
    %v578 = vpop.permute.xlu0 %577
    %v580 = vmul.f32 %v573, %v578
    %582 = vrot.lane.b32.xlu0 %v580, 32
    %v583 = vpop.permute.xlu0 %582
    %v585 = vadd.f32 %v575, %v583
    %v586 = vtanh.pop %v585
    %588 = vrot.lane.b32.xlu0 %v586, 64
    %v589 = vpop.permute.xlu0 %588
    %v591 = vmul.f32 %v573, %v589
    %593 = vrot.lane.b32.xlu0 %v416, 32
    %v594 = vpop.permute.xlu0 %593
    %v595 = vsel %vm138, %v594, 0
    %597 = vmatpush.msra.mxu0 0.0
    %598 = vmatpush.msra.mxu0 0.0
    %599 = vmatpush.msra.mxu0 0.0
    %600 = vmatpush.msra.mxu0 0.0
    %601 = vmatpush.msra.mxu0 0.0
    %602 = vmatpush.msra.mxu0 0.0
    %603 = vmatpush.msra.mxu0 0.0
    %604 = vmatpush.msra.mxu0 0.0
    %605 = vmatpush.msra.mxu0 0.0
    %606 = vmatpush.msra.mxu0 0.0
    %607 = vmatpush.msra.mxu0 0.0
    %608 = vmatpush.msra.mxu0 0.0
    %609 = vmatpush.msra.mxu0 %v137
    %610 = vmatpush.msra.mxu0 %v136
    %611 = vmatpush.msra.mxu0 %v135
    %612 = vmatpush.msra.mxu0 %v134
    %613 = vmatmul.f32.gmra.mxu0 %v595
    %v614 = vpop.f32.mrf.mxu0
    %v615 = vadd.f32 0.0, %v614
    %616 = vdwg.mxu0
    %v617 = vadd.f32 %v120, %v615
    %v618 = vxor.u32 %v617, 2147483648
    %v619 = vmul.f32 %v618, 1.442695
    %v620 = vpow.pop %v619
    %v621 = vadd.f32 %v620, 1.0
    %v622 = vrcp.pop %v621
    %v623 = vmul.f32 %v621, %v622
    %v624 = vsub.f32 1.0, %v623
    %v625 = vmul.f32 %v622, %v624
    %v626 = vadd.f32 %v622, %v625
    %vm627 = vweird.f32 %v621
    %vm628 = vweird.f32 %v622
    %vm629 = vmor %vm627, %vm628
    %v630 = vsel %vm629, %v622, %v626
    %v631 = vand.u32 2147483647, %v621
    %vm632 = vcmp.eq.f32.partialorder %v631, 8.507059e+37
    %v633 = vand.u32 %v621, 2147483648
    %v634 = vor.u32 1.1754944e-38, %v633
    %v635 = vsel %vm632, %v634, %v630
    %v636 = vmul.f32 1.0, %v635
    %v637 = vtanh.pop %v617
    %v638 = vmul.f32 %v636, %v410
    %640 = vrot.lane.b32.xlu0 %v637, 64
    %v641 = vpop.permute.xlu0 %640
    %v643 = vmul.f32 %v636, %v641
    %645 = vrot.lane.b32.xlu0 %v643, 32
    %v646 = vpop.permute.xlu0 %645
    %v648 = vadd.f32 %v638, %v646
    %v649 = vtanh.pop %v648
    %651 = vrot.lane.b32.xlu0 %v649, 64
    %v652 = vpop.permute.xlu0 %651
    %v654 = vmul.f32 %v636, %v652
    %655 = vmatpush.msra.mxu0 0.0
    %656 = vmatpush.msra.mxu0 0.0
    %657 = vmatpush.msra.mxu0 0.0
    %658 = vmatpush.msra.mxu0 0.0
    %659 = vmatpush.msra.mxu0 0.0
    %660 = vmatpush.msra.mxu0 0.0
    %661 = vmatpush.msra.mxu0 0.0
    %662 = vmatpush.msra.mxu0 0.0
    %663 = vmatpush.msra.mxu0 0.0
    %664 = vmatpush.msra.mxu0 0.0
    %665 = vmatpush.msra.mxu0 0.0
    %666 = vmatpush.msra.mxu0 0.0
    %667 = vmatpush.msra.mxu0 %v267
    %668 = vmatpush.msra.mxu0 %v266
    %669 = vmatpush.msra.mxu0 %v265
    %670 = vmatpush.msra.mxu0 %v264
    %671 = vmatmul.f32.gmra.mxu0 %v595
    %v672 = vpop.f32.mrf.mxu0
    %v673 = vadd.f32 0.0, %v672
    %674 = vdwg.mxu0
    %v675 = vadd.f32 %v289, %v673
    %677 = vrot.lane.b32.xlu0 %v500, 32
    %v678 = vpop.permute.xlu0 %677
    %v679 = vsel %vm138, %v678, 0
    %681 = vmatpush.msra.mxu0 0.0
    %682 = vmatpush.msra.mxu0 0.0
    %683 = vmatpush.msra.mxu0 0.0
    %684 = vmatpush.msra.mxu0 0.0
    %685 = vmatpush.msra.mxu0 0.0
    %686 = vmatpush.msra.mxu0 0.0
    %687 = vmatpush.msra.mxu0 0.0
    %688 = vmatpush.msra.mxu0 0.0
    %689 = vmatpush.msra.mxu0 0.0
    %690 = vmatpush.msra.mxu0 0.0
    %691 = vmatpush.msra.mxu0 0.0
    %692 = vmatpush.msra.mxu0 0.0
    %693 = vmatpush.msra.mxu0 %v295
    %694 = vmatpush.msra.mxu0 %v294
    %695 = vmatpush.msra.mxu0 %v293
    %696 = vmatpush.msra.mxu0 %v292
    %697 = vmatmul.f32.gmra.mxu0 %v679
    %v698 = vpop.f32.mrf.mxu0
    %v699 = vadd.f32 0.0, %v698
    %700 = vdwg.mxu0
    %v701 = vadd.f32 %v675, %v699
    %v702 = vxor.u32 %v701, 2147483648
    %v703 = vmul.f32 %v702, 1.442695
    %v704 = vpow.pop %v703
    %v705 = vadd.f32 %v704, 1.0
    %v706 = vrcp.pop %v705
    %v707 = vmul.f32 %v705, %v706
    %v708 = vsub.f32 1.0, %v707
    %v709 = vmul.f32 %v706, %v708
    %v710 = vadd.f32 %v706, %v709
    %vm711 = vweird.f32 %v705
    %vm712 = vweird.f32 %v706
    %vm713 = vmor %vm711, %vm712
    %v714 = vsel %vm713, %v706, %v710
    %v715 = vand.u32 2147483647, %v705
    %vm716 = vcmp.eq.f32.partialorder %v715, 8.507059e+37
    %v717 = vand.u32 %v705, 2147483648
    %v718 = vor.u32 1.1754944e-38, %v717
    %v719 = vsel %vm716, %v718, %v714
    %v720 = vmul.f32 1.0, %v719
    %v721 = vtanh.pop %v701
    %v722 = vmul.f32 %v720, %v494
    %724 = vrot.lane.b32.xlu0 %v721, 64
    %v725 = vpop.permute.xlu0 %724
    %v727 = vmul.f32 %v720, %v725
    %729 = vrot.lane.b32.xlu0 %v727, 32
    %v730 = vpop.permute.xlu0 %729
    %v732 = vadd.f32 %v722, %v730
    %v733 = vtanh.pop %v732
    %735 = vrot.lane.b32.xlu0 %v733, 64
    %v736 = vpop.permute.xlu0 %735
    %v738 = vmul.f32 %v720, %v736
    %739 = vmatpush.msra.mxu0 0.0
    %740 = vmatpush.msra.mxu0 0.0
    %741 = vmatpush.msra.mxu0 0.0
    %742 = vmatpush.msra.mxu0 0.0
    %743 = vmatpush.msra.mxu0 0.0
    %744 = vmatpush.msra.mxu0 0.0
    %745 = vmatpush.msra.mxu0 0.0
    %746 = vmatpush.msra.mxu0 0.0
    %747 = vmatpush.msra.mxu0 0.0
    %748 = vmatpush.msra.mxu0 0.0
    %749 = vmatpush.msra.mxu0 0.0
    %750 = vmatpush.msra.mxu0 0.0
    %751 = vmatpush.msra.mxu0 %v505
    %752 = vmatpush.msra.mxu0 %v504
    %753 = vmatpush.msra.mxu0 %v503
    %754 = vmatpush.msra.mxu0 %v502
    %755 = vmatmul.f32.gmra.mxu0 %v679
    %v756 = vpop.f32.mrf.mxu0
    %v757 = vadd.f32 0.0, %v756
    %758 = vdwg.mxu0
    %v759 = vadd.f32 %v527, %v757
    %761 = vrot.lane.b32.xlu0 %v591, 32
    %v762 = vpop.permute.xlu0 %761
    %v763 = vsel %vm138, %v762, 0
    %765 = vmatpush.msra.mxu0 0.0
    %766 = vmatpush.msra.mxu0 0.0
    %767 = vmatpush.msra.mxu0 0.0
    %768 = vmatpush.msra.mxu0 0.0
    %769 = vmatpush.msra.mxu0 0.0
    %770 = vmatpush.msra.mxu0 0.0
    %771 = vmatpush.msra.mxu0 0.0
    %772 = vmatpush.msra.mxu0 0.0
    %773 = vmatpush.msra.mxu0 0.0
    %774 = vmatpush.msra.mxu0 0.0
    %775 = vmatpush.msra.mxu0 0.0
    %776 = vmatpush.msra.mxu0 0.0
    %777 = vmatpush.msra.mxu0 %v533
    %778 = vmatpush.msra.mxu0 %v532
    %779 = vmatpush.msra.mxu0 %v531
    %780 = vmatpush.msra.mxu0 %v530
    %781 = vmatmul.f32.gmra.mxu0 %v763
    %v782 = vpop.f32.mrf.mxu0
    %v783 = vadd.f32 0.0, %v782
    %784 = vdwg.mxu0
    %v785 = vadd.f32 %v759, %v783
    %v786 = vxor.u32 %v785, 2147483648
    %v787 = vmul.f32 %v786, 1.442695
    %v788 = vpow.pop %v787
    %v789 = vadd.f32 %v788, 1.0
    %v790 = vrcp.pop %v789
    %v791 = vmul.f32 %v789, %v790
    %v792 = vsub.f32 1.0, %v791
    %v793 = vmul.f32 %v790, %v792
    %v794 = vadd.f32 %v790, %v793
    %vm795 = vweird.f32 %v789
    %vm796 = vweird.f32 %v790
    %vm797 = vmor %vm795, %vm796
    %v798 = vsel %vm797, %v790, %v794
    %v799 = vand.u32 2147483647, %v789
    %vm800 = vcmp.eq.f32.partialorder %v799, 8.507059e+37
    %v801 = vand.u32 %v789, 2147483648
    %v802 = vor.u32 1.1754944e-38, %v801
    %v803 = vsel %vm800, %v802, %v798
    %v804 = vmul.f32 1.0, %v803
    %v805 = vtanh.pop %v785
    %v806 = vmul.f32 %v804, %v585
    %808 = vrot.lane.b32.xlu0 %v805, 64
    %v809 = vpop.permute.xlu0 %808
    %v811 = vmul.f32 %v804, %v809
    %813 = vrot.lane.b32.xlu0 %v811, 32
    %v814 = vpop.permute.xlu0 %813
    %v816 = vadd.f32 %v806, %v814
    %v817 = vtanh.pop %v816
    %819 = vrot.lane.b32.xlu0 %v817, 64
    %v820 = vpop.permute.xlu0 %819
    %v822 = vmul.f32 %v804, %v820
    %824 = vrot.lane.b32.xlu0 %v654, 32
    %v825 = vpop.permute.xlu0 %824
    %v826 = vsel %vm138, %v825, 0
    %828 = vmatpush.msra.mxu0 0.0
    %829 = vmatpush.msra.mxu0 0.0
    %830 = vmatpush.msra.mxu0 0.0
    %831 = vmatpush.msra.mxu0 0.0
    %832 = vmatpush.msra.mxu0 0.0
    %833 = vmatpush.msra.mxu0 0.0
    %834 = vmatpush.msra.mxu0 0.0
    %835 = vmatpush.msra.mxu0 0.0
    %836 = vmatpush.msra.mxu0 0.0
    %837 = vmatpush.msra.mxu0 0.0
    %838 = vmatpush.msra.mxu0 0.0
    %839 = vmatpush.msra.mxu0 0.0
    %840 = vmatpush.msra.mxu0 %v137
    %841 = vmatpush.msra.mxu0 %v136
    %842 = vmatpush.msra.mxu0 %v135
    %843 = vmatpush.msra.mxu0 %v134
    %844 = vmatmul.f32.gmra.mxu0 %v826
    %v845 = vpop.f32.mrf.mxu0
    %v846 = vadd.f32 0.0, %v845
    %847 = vdwg.mxu0
    %v848 = vadd.f32 %v123, %v846
    %v849 = vxor.u32 %v848, 2147483648
    %v850 = vmul.f32 %v849, 1.442695
    %v851 = vpow.pop %v850
    %v852 = vadd.f32 %v851, 1.0
    %v853 = vrcp.pop %v852
    %v854 = vmul.f32 %v852, %v853
    %v855 = vsub.f32 1.0, %v854
    %v856 = vmul.f32 %v853, %v855
    %v857 = vadd.f32 %v853, %v856
    %vm858 = vweird.f32 %v852
    %vm859 = vweird.f32 %v853
    %vm860 = vmor %vm858, %vm859
    %v861 = vsel %vm860, %v853, %v857
    %v862 = vand.u32 2147483647, %v852
    %vm863 = vcmp.eq.f32.partialorder %v862, 8.507059e+37
    %v864 = vand.u32 %v852, 2147483648
    %v865 = vor.u32 1.1754944e-38, %v864
    %v866 = vsel %vm863, %v865, %v861
    %v867 = vmul.f32 1.0, %v866
    %v868 = vtanh.pop %v848
    %v869 = vmul.f32 %v867, %v648
    %871 = vrot.lane.b32.xlu0 %v868, 64
    %v872 = vpop.permute.xlu0 %871
    %v874 = vmul.f32 %v867, %v872
    %876 = vrot.lane.b32.xlu0 %v874, 32
    %v877 = vpop.permute.xlu0 %876
    %v879 = vadd.f32 %v869, %v877
    %v880 = vtanh.pop %v879
    %882 = vrot.lane.b32.xlu0 %v880, 64
    %v883 = vpop.permute.xlu0 %882
    %v885 = vmul.f32 %v867, %v883
    %886 = vmatpush.msra.mxu0 0.0
    %887 = vmatpush.msra.mxu0 0.0
    %888 = vmatpush.msra.mxu0 0.0
    %889 = vmatpush.msra.mxu0 0.0
    %890 = vmatpush.msra.mxu0 0.0
    %891 = vmatpush.msra.mxu0 0.0
    %892 = vmatpush.msra.mxu0 0.0
    %893 = vmatpush.msra.mxu0 0.0
    %894 = vmatpush.msra.mxu0 0.0
    %895 = vmatpush.msra.mxu0 0.0
    %896 = vmatpush.msra.mxu0 0.0
    %897 = vmatpush.msra.mxu0 0.0
    %898 = vmatpush.msra.mxu0 %v267
    %899 = vmatpush.msra.mxu0 %v266
    %900 = vmatpush.msra.mxu0 %v265
    %901 = vmatpush.msra.mxu0 %v264
    %902 = vmatmul.f32.gmra.mxu0 %v826
    %v903 = vpop.f32.mrf.mxu0
    %v904 = vadd.f32 0.0, %v903
    %905 = vdwg.mxu0
    %v906 = vadd.f32 %v289, %v904
    %908 = vrot.lane.b32.xlu0 %v738, 32
    %v909 = vpop.permute.xlu0 %908
    %v910 = vsel %vm138, %v909, 0
    %912 = vmatpush.msra.mxu0 0.0
    %913 = vmatpush.msra.mxu0 0.0
    %914 = vmatpush.msra.mxu0 0.0
    %915 = vmatpush.msra.mxu0 0.0
    %916 = vmatpush.msra.mxu0 0.0
    %917 = vmatpush.msra.mxu0 0.0
    %918 = vmatpush.msra.mxu0 0.0
    %919 = vmatpush.msra.mxu0 0.0
    %920 = vmatpush.msra.mxu0 0.0
    %921 = vmatpush.msra.mxu0 0.0
    %922 = vmatpush.msra.mxu0 0.0
    %923 = vmatpush.msra.mxu0 0.0
    %924 = vmatpush.msra.mxu0 %v295
    %925 = vmatpush.msra.mxu0 %v294
    %926 = vmatpush.msra.mxu0 %v293
    %927 = vmatpush.msra.mxu0 %v292
    %928 = vmatmul.f32.gmra.mxu0 %v910
    %v929 = vpop.f32.mrf.mxu0
    %v930 = vadd.f32 0.0, %v929
    %931 = vdwg.mxu0
    %v932 = vadd.f32 %v906, %v930
    %v933 = vxor.u32 %v932, 2147483648
    %v934 = vmul.f32 %v933, 1.442695
    %v935 = vpow.pop %v934
    %v936 = vadd.f32 %v935, 1.0
    %v937 = vrcp.pop %v936
    %v938 = vmul.f32 %v936, %v937
    %v939 = vsub.f32 1.0, %v938
    %v940 = vmul.f32 %v937, %v939
    %v941 = vadd.f32 %v937, %v940
    %vm942 = vweird.f32 %v936
    %vm943 = vweird.f32 %v937
    %vm944 = vmor %vm942, %vm943
    %v945 = vsel %vm944, %v937, %v941
    %v946 = vand.u32 2147483647, %v936
    %vm947 = vcmp.eq.f32.partialorder %v946, 8.507059e+37
    %v948 = vand.u32 %v936, 2147483648
    %v949 = vor.u32 1.1754944e-38, %v948
    %v950 = vsel %vm947, %v949, %v945
    %v951 = vmul.f32 1.0, %v950
    %v952 = vtanh.pop %v932
    %v953 = vmul.f32 %v951, %v732
    %955 = vrot.lane.b32.xlu0 %v952, 64
    %v956 = vpop.permute.xlu0 %955
    %v958 = vmul.f32 %v951, %v956
    %960 = vrot.lane.b32.xlu0 %v958, 32
    %v961 = vpop.permute.xlu0 %960
    %v963 = vadd.f32 %v953, %v961
    %v964 = vtanh.pop %v963
    %966 = vrot.lane.b32.xlu0 %v964, 64
    %v967 = vpop.permute.xlu0 %966
    %v969 = vmul.f32 %v951, %v967
    %970 = vmatpush.msra.mxu0 0.0
    %971 = vmatpush.msra.mxu0 0.0
    %972 = vmatpush.msra.mxu0 0.0
    %973 = vmatpush.msra.mxu0 0.0
    %974 = vmatpush.msra.mxu0 0.0
    %975 = vmatpush.msra.mxu0 0.0
    %976 = vmatpush.msra.mxu0 0.0
    %977 = vmatpush.msra.mxu0 0.0
    %978 = vmatpush.msra.mxu0 0.0
    %979 = vmatpush.msra.mxu0 0.0
    %980 = vmatpush.msra.mxu0 0.0
    %981 = vmatpush.msra.mxu0 0.0
    %982 = vmatpush.msra.mxu0 %v505
    %983 = vmatpush.msra.mxu0 %v504
    %984 = vmatpush.msra.mxu0 %v503
    %985 = vmatpush.msra.mxu0 %v502
    %986 = vmatmul.f32.gmra.mxu0 %v910
    %v987 = vpop.f32.mrf.mxu0
    %v988 = vadd.f32 0.0, %v987
    %989 = vdwg.mxu0
    %v990 = vadd.f32 %v527, %v988
    %992 = vrot.lane.b32.xlu0 %v822, 32
    %v993 = vpop.permute.xlu0 %992
    %v994 = vsel %vm138, %v993, 0
    %996 = vmatpush.msra.mxu0 0.0
    %997 = vmatpush.msra.mxu0 0.0
    %998 = vmatpush.msra.mxu0 0.0
    %999 = vmatpush.msra.mxu0 0.0
    %1000 = vmatpush.msra.mxu0 0.0
    %1001 = vmatpush.msra.mxu0 0.0
    %1002 = vmatpush.msra.mxu0 0.0
    %1003 = vmatpush.msra.mxu0 0.0
    %1004 = vmatpush.msra.mxu0 0.0
    %1005 = vmatpush.msra.mxu0 0.0
    %1006 = vmatpush.msra.mxu0 0.0
    %1007 = vmatpush.msra.mxu0 0.0
    %1008 = vmatpush.msra.mxu0 %v533
    %1009 = vmatpush.msra.mxu0 %v532
    %1010 = vmatpush.msra.mxu0 %v531
    %1011 = vmatpush.msra.mxu0 %v530
    %1012 = vmatmul.f32.gmra.mxu0 %v994
    %v1013 = vpop.f32.mrf.mxu0
    %v1014 = vadd.f32 0.0, %v1013
    %1015 = vdwg.mxu0
    %v1016 = vadd.f32 %v990, %v1014
    %v1017 = vxor.u32 %v1016, 2147483648
    %v1018 = vmul.f32 %v1017, 1.442695
    %v1019 = vpow.pop %v1018
    %v1020 = vadd.f32 %v1019, 1.0
    %v1021 = vrcp.pop %v1020
    %v1022 = vmul.f32 %v1020, %v1021
    %v1023 = vsub.f32 1.0, %v1022
    %v1024 = vmul.f32 %v1021, %v1023
    %v1025 = vadd.f32 %v1021, %v1024
    %vm1026 = vweird.f32 %v1020
    %vm1027 = vweird.f32 %v1021
    %vm1028 = vmor %vm1026, %vm1027
    %v1029 = vsel %vm1028, %v1021, %v1025
    %v1030 = vand.u32 2147483647, %v1020
    %vm1031 = vcmp.eq.f32.partialorder %v1030, 8.507059e+37
    %v1032 = vand.u32 %v1020, 2147483648
    %v1033 = vor.u32 1.1754944e-38, %v1032
    %v1034 = vsel %vm1031, %v1033, %v1029
    %v1035 = vmul.f32 1.0, %v1034
    %v1036 = vtanh.pop %v1016
    %v1037 = vmul.f32 %v1035, %v816
    %1039 = vrot.lane.b32.xlu0 %v1036, 64
    %v1040 = vpop.permute.xlu0 %1039
    %v1042 = vmul.f32 %v1035, %v1040
    %1044 = vrot.lane.b32.xlu0 %v1042, 32
    %v1045 = vpop.permute.xlu0 %1044
    %v1047 = vadd.f32 %v1037, %v1045
    %v1048 = vtanh.pop %v1047
    %1050 = vrot.lane.b32.xlu0 %v1048, 64
    %v1051 = vpop.permute.xlu0 %1050
    %v1053 = vmul.f32 %v1035, %v1051
    %1055 = vrot.lane.b32.xlu0 %v885, 32
    %v1056 = vpop.permute.xlu0 %1055
    %v1057 = vsel %vm138, %v1056, 0
    %1059 = vmatpush.msra.mxu0 0.0
    %1060 = vmatpush.msra.mxu0 0.0
    %1061 = vmatpush.msra.mxu0 0.0
    %1062 = vmatpush.msra.mxu0 0.0
    %1063 = vmatpush.msra.mxu0 0.0
    %1064 = vmatpush.msra.mxu0 0.0
    %1065 = vmatpush.msra.mxu0 0.0
    %1066 = vmatpush.msra.mxu0 0.0
    %1067 = vmatpush.msra.mxu0 0.0
    %1068 = vmatpush.msra.mxu0 0.0
    %1069 = vmatpush.msra.mxu0 0.0
    %1070 = vmatpush.msra.mxu0 0.0
    %1071 = vmatpush.msra.mxu0 %v137
    %1072 = vmatpush.msra.mxu0 %v136
    %1073 = vmatpush.msra.mxu0 %v135
    %1074 = vmatpush.msra.mxu0 %v134
    %1075 = vmatmul.f32.gmra.mxu0 %v1057
    %v1076 = vpop.f32.mrf.mxu0
    %v1077 = vadd.f32 0.0, %v1076
    %1078 = vdwg.mxu0
    %v1079 = vadd.f32 %v126, %v1077
    %v1080 = vxor.u32 %v1079, 2147483648
    %v1081 = vmul.f32 %v1080, 1.442695
    %v1082 = vpow.pop %v1081
    %v1083 = vadd.f32 %v1082, 1.0
    %v1084 = vrcp.pop %v1083
    %v1085 = vmul.f32 %v1083, %v1084
    %v1086 = vsub.f32 1.0, %v1085
    %v1087 = vmul.f32 %v1084, %v1086
    %v1088 = vadd.f32 %v1084, %v1087
    %vm1089 = vweird.f32 %v1083
    %vm1090 = vweird.f32 %v1084
    %vm1091 = vmor %vm1089, %vm1090
    %v1092 = vsel %vm1091, %v1084, %v1088
    %v1093 = vand.u32 2147483647, %v1083
    %vm1094 = vcmp.eq.f32.partialorder %v1093, 8.507059e+37
    %v1095 = vand.u32 %v1083, 2147483648
    %v1096 = vor.u32 1.1754944e-38, %v1095
    %v1097 = vsel %vm1094, %v1096, %v1092
    %v1098 = vmul.f32 1.0, %v1097
    %v1099 = vtanh.pop %v1079
    %v1100 = vmul.f32 %v1098, %v879
    %1102 = vrot.lane.b32.xlu0 %v1099, 64
    %v1103 = vpop.permute.xlu0 %1102
    %v1105 = vmul.f32 %v1098, %v1103
    %1107 = vrot.lane.b32.xlu0 %v1105, 32
    %v1108 = vpop.permute.xlu0 %1107
    %v1110 = vadd.f32 %v1100, %v1108
    %v1111 = vtanh.pop %v1110
    %1113 = vrot.lane.b32.xlu0 %v1111, 64
    %v1114 = vpop.permute.xlu0 %1113
    %v1116 = vmul.f32 %v1098, %v1114
    %1117 = vmatpush.msra.mxu0 0.0
    %1118 = vmatpush.msra.mxu0 0.0
    %1119 = vmatpush.msra.mxu0 0.0
    %1120 = vmatpush.msra.mxu0 0.0
    %1121 = vmatpush.msra.mxu0 0.0
    %1122 = vmatpush.msra.mxu0 0.0
    %1123 = vmatpush.msra.mxu0 0.0
    %1124 = vmatpush.msra.mxu0 0.0
    %1125 = vmatpush.msra.mxu0 0.0
    %1126 = vmatpush.msra.mxu0 0.0
    %1127 = vmatpush.msra.mxu0 0.0
    %1128 = vmatpush.msra.mxu0 0.0
    %1129 = vmatpush.msra.mxu0 %v267
    %1130 = vmatpush.msra.mxu0 %v266
    %1131 = vmatpush.msra.mxu0 %v265
    %1132 = vmatpush.msra.mxu0 %v264
    %1133 = vmatmul.f32.gmra.mxu0 %v1057
    %v1134 = vpop.f32.mrf.mxu0
    %v1135 = vadd.f32 0.0, %v1134
    %1136 = vdwg.mxu0
    %v1137 = vadd.f32 %v289, %v1135
    %1139 = vrot.lane.b32.xlu0 %v969, 32
    %v1140 = vpop.permute.xlu0 %1139
    %v1141 = vsel %vm138, %v1140, 0
    %1143 = vmatpush.msra.mxu0 0.0
    %1144 = vmatpush.msra.mxu0 0.0
    %1145 = vmatpush.msra.mxu0 0.0
    %1146 = vmatpush.msra.mxu0 0.0
    %1147 = vmatpush.msra.mxu0 0.0
    %1148 = vmatpush.msra.mxu0 0.0
    %1149 = vmatpush.msra.mxu0 0.0
    %1150 = vmatpush.msra.mxu0 0.0
    %1151 = vmatpush.msra.mxu0 0.0
    %1152 = vmatpush.msra.mxu0 0.0
    %1153 = vmatpush.msra.mxu0 0.0
    %1154 = vmatpush.msra.mxu0 0.0
    %1155 = vmatpush.msra.mxu0 %v295
    %1156 = vmatpush.msra.mxu0 %v294
    %1157 = vmatpush.msra.mxu0 %v293
    %1158 = vmatpush.msra.mxu0 %v292
    %1159 = vmatmul.f32.gmra.mxu0 %v1141
    %v1160 = vpop.f32.mrf.mxu0
    %v1161 = vadd.f32 0.0, %v1160
    %1162 = vdwg.mxu0
    %v1163 = vadd.f32 %v1137, %v1161
    %v1164 = vxor.u32 %v1163, 2147483648
    %v1165 = vmul.f32 %v1164, 1.442695
    %v1166 = vpow.pop %v1165
    %v1167 = vadd.f32 %v1166, 1.0
    %v1168 = vrcp.pop %v1167
    %v1169 = vmul.f32 %v1167, %v1168
    %v1170 = vsub.f32 1.0, %v1169
    %v1171 = vmul.f32 %v1168, %v1170
    %v1172 = vadd.f32 %v1168, %v1171
    %vm1173 = vweird.f32 %v1167
    %vm1174 = vweird.f32 %v1168
    %vm1175 = vmor %vm1173, %vm1174
    %v1176 = vsel %vm1175, %v1168, %v1172
    %v1177 = vand.u32 2147483647, %v1167
    %vm1178 = vcmp.eq.f32.partialorder %v1177, 8.507059e+37
    %v1179 = vand.u32 %v1167, 2147483648
    %v1180 = vor.u32 1.1754944e-38, %v1179
    %v1181 = vsel %vm1178, %v1180, %v1176
    %v1182 = vmul.f32 1.0, %v1181
    %v1183 = vtanh.pop %v1163
    %v1184 = vmul.f32 %v1182, %v963
    %1186 = vrot.lane.b32.xlu0 %v1183, 64
    %v1187 = vpop.permute.xlu0 %1186
    %v1189 = vmul.f32 %v1182, %v1187
    %1191 = vrot.lane.b32.xlu0 %v1189, 32
    %v1192 = vpop.permute.xlu0 %1191
    %v1194 = vadd.f32 %v1184, %v1192
    %v1195 = vtanh.pop %v1194
    %1197 = vrot.lane.b32.xlu0 %v1195, 64
    %v1198 = vpop.permute.xlu0 %1197
    %v1200 = vmul.f32 %v1182, %v1198
    %1201 = vmatpush.msra.mxu0 0.0
    %1202 = vmatpush.msra.mxu0 0.0
    %1203 = vmatpush.msra.mxu0 0.0
    %1204 = vmatpush.msra.mxu0 0.0
    %1205 = vmatpush.msra.mxu0 0.0
    %1206 = vmatpush.msra.mxu0 0.0
    %1207 = vmatpush.msra.mxu0 0.0
    %1208 = vmatpush.msra.mxu0 0.0
    %1209 = vmatpush.msra.mxu0 0.0
    %1210 = vmatpush.msra.mxu0 0.0
    %1211 = vmatpush.msra.mxu0 0.0
    %1212 = vmatpush.msra.mxu0 0.0
    %1213 = vmatpush.msra.mxu0 %v505
    %1214 = vmatpush.msra.mxu0 %v504
    %1215 = vmatpush.msra.mxu0 %v503
    %1216 = vmatpush.msra.mxu0 %v502
    %1217 = vmatmul.f32.gmra.mxu0 %v1141
    %v1218 = vpop.f32.mrf.mxu0
    %v1219 = vadd.f32 0.0, %v1218
    %1220 = vdwg.mxu0
    %v1221 = vadd.f32 %v527, %v1219
    %1223 = vrot.lane.b32.xlu0 %v1053, 32
    %v1224 = vpop.permute.xlu0 %1223
    %v1225 = vsel %vm138, %v1224, 0
    %1227 = vmatpush.msra.mxu0 0.0
    %1228 = vmatpush.msra.mxu0 0.0
    %1229 = vmatpush.msra.mxu0 0.0
    %1230 = vmatpush.msra.mxu0 0.0
    %1231 = vmatpush.msra.mxu0 0.0
    %1232 = vmatpush.msra.mxu0 0.0
    %1233 = vmatpush.msra.mxu0 0.0
    %1234 = vmatpush.msra.mxu0 0.0
    %1235 = vmatpush.msra.mxu0 0.0
    %1236 = vmatpush.msra.mxu0 0.0
    %1237 = vmatpush.msra.mxu0 0.0
    %1238 = vmatpush.msra.mxu0 0.0
    %1239 = vmatpush.msra.mxu0 %v533
    %1240 = vmatpush.msra.mxu0 %v532
    %1241 = vmatpush.msra.mxu0 %v531
    %1242 = vmatpush.msra.mxu0 %v530
    %1243 = vmatmul.f32.gmra.mxu0 %v1225
    %v1244 = vpop.f32.mrf.mxu0
    %v1245 = vadd.f32 0.0, %v1244
    %1246 = vdwg.mxu0
    %v1247 = vadd.f32 %v1221, %v1245
    %v1248 = vxor.u32 %v1247, 2147483648
    %v1249 = vmul.f32 %v1248, 1.442695
    %v1250 = vpow.pop %v1249
    %v1251 = vadd.f32 %v1250, 1.0
    %v1252 = vrcp.pop %v1251
    %v1253 = vmul.f32 %v1251, %v1252
    %v1254 = vsub.f32 1.0, %v1253
    %v1255 = vmul.f32 %v1252, %v1254
    %v1256 = vadd.f32 %v1252, %v1255
    %vm1257 = vweird.f32 %v1251
    %vm1258 = vweird.f32 %v1252
    %vm1259 = vmor %vm1257, %vm1258
    %v1260 = vsel %vm1259, %v1252, %v1256
    %v1261 = vand.u32 2147483647, %v1251
    %vm1262 = vcmp.eq.f32.partialorder %v1261, 8.507059e+37
    %v1263 = vand.u32 %v1251, 2147483648
    %v1264 = vor.u32 1.1754944e-38, %v1263
    %v1265 = vsel %vm1262, %v1264, %v1260
    %v1266 = vmul.f32 1.0, %v1265
    %v1267 = vtanh.pop %v1247
    %v1268 = vmul.f32 %v1266, %v1047
    %1270 = vrot.lane.b32.xlu0 %v1267, 64
    %v1271 = vpop.permute.xlu0 %1270
    %v1273 = vmul.f32 %v1266, %v1271
    %1275 = vrot.lane.b32.xlu0 %v1273, 32
    %v1276 = vpop.permute.xlu0 %1275
    %v1278 = vadd.f32 %v1268, %v1276
    %v1279 = vtanh.pop %v1278
    %1281 = vrot.lane.b32.xlu0 %v1279, 64
    %v1282 = vpop.permute.xlu0 %1281
    %v1284 = vmul.f32 %v1266, %v1282
    %1286 = vrot.lane.b32.xlu0 %v1116, 32
    %v1287 = vpop.permute.xlu0 %1286
    %v1288 = vsel %vm138, %v1287, 0
    %1290 = vmatpush.msra.mxu0 0.0
    %1291 = vmatpush.msra.mxu0 0.0
    %1292 = vmatpush.msra.mxu0 0.0
    %1293 = vmatpush.msra.mxu0 0.0
    %1294 = vmatpush.msra.mxu0 0.0
    %1295 = vmatpush.msra.mxu0 0.0
    %1296 = vmatpush.msra.mxu0 0.0
    %1297 = vmatpush.msra.mxu0 0.0
    %1298 = vmatpush.msra.mxu0 0.0
    %1299 = vmatpush.msra.mxu0 0.0
    %1300 = vmatpush.msra.mxu0 0.0
    %1301 = vmatpush.msra.mxu0 0.0
    %1302 = vmatpush.msra.mxu0 %v137
    %1303 = vmatpush.msra.mxu0 %v136
    %1304 = vmatpush.msra.mxu0 %v135
    %1305 = vmatpush.msra.mxu0 %v134
    %1306 = vmatmul.f32.gmra.mxu0 %v1288
    %v1307 = vpop.f32.mrf.mxu0
    %v1308 = vadd.f32 0.0, %v1307
    %1309 = vdwg.mxu0
    %v1310 = vadd.f32 %v129, %v1308
    %v1311 = vxor.u32 %v1310, 2147483648
    %v1312 = vmul.f32 %v1311, 1.442695
    %v1313 = vpow.pop %v1312
    %v1314 = vadd.f32 %v1313, 1.0
    %v1315 = vrcp.pop %v1314
    %v1316 = vmul.f32 %v1314, %v1315
    %v1317 = vsub.f32 1.0, %v1316
    %v1318 = vmul.f32 %v1315, %v1317
    %v1319 = vadd.f32 %v1315, %v1318
    %vm1320 = vweird.f32 %v1314
    %vm1321 = vweird.f32 %v1315
    %vm1322 = vmor %vm1320, %vm1321
    %v1323 = vsel %vm1322, %v1315, %v1319
    %v1324 = vand.u32 2147483647, %v1314
    %vm1325 = vcmp.eq.f32.partialorder %v1324, 8.507059e+37
    %v1326 = vand.u32 %v1314, 2147483648
    %v1327 = vor.u32 1.1754944e-38, %v1326
    %v1328 = vsel %vm1325, %v1327, %v1323
    %v1329 = vmul.f32 1.0, %v1328
    %v1330 = vtanh.pop %v1310
    %v1331 = vmul.f32 %v1329, %v1110
    %1333 = vrot.lane.b32.xlu0 %v1330, 64
    %v1334 = vpop.permute.xlu0 %1333
    %v1336 = vmul.f32 %v1329, %v1334
    %1338 = vrot.lane.b32.xlu0 %v1336, 32
    %v1339 = vpop.permute.xlu0 %1338
    %v1341 = vadd.f32 %v1331, %v1339
    %v1342 = vtanh.pop %v1341
    %1344 = vrot.lane.b32.xlu0 %v1342, 64
    %v1345 = vpop.permute.xlu0 %1344
    %v1347 = vmul.f32 %v1329, %v1345
    %1348 = vmatpush.msra.mxu0 0.0
    %1349 = vmatpush.msra.mxu0 0.0
    %1350 = vmatpush.msra.mxu0 0.0
    %1351 = vmatpush.msra.mxu0 0.0
    %1352 = vmatpush.msra.mxu0 0.0
    %1353 = vmatpush.msra.mxu0 0.0
    %1354 = vmatpush.msra.mxu0 0.0
    %1355 = vmatpush.msra.mxu0 0.0
    %1356 = vmatpush.msra.mxu0 0.0
    %1357 = vmatpush.msra.mxu0 0.0
    %1358 = vmatpush.msra.mxu0 0.0
    %1359 = vmatpush.msra.mxu0 0.0
    %1360 = vmatpush.msra.mxu0 %v267
    %1361 = vmatpush.msra.mxu0 %v266
    %1362 = vmatpush.msra.mxu0 %v265
    %1363 = vmatpush.msra.mxu0 %v264
    %1364 = vmatmul.f32.gmra.mxu0 %v1288
    %v1365 = vpop.f32.mrf.mxu0
    %v1366 = vadd.f32 0.0, %v1365
    %1367 = vdwg.mxu0
    %v1368 = vadd.f32 %v289, %v1366
    %1370 = vrot.lane.b32.xlu0 %v1200, 32
    %v1371 = vpop.permute.xlu0 %1370
    %v1372 = vsel %vm138, %v1371, 0
    %1374 = vmatpush.msra.mxu0 0.0
    %1375 = vmatpush.msra.mxu0 0.0
    %1376 = vmatpush.msra.mxu0 0.0
    %1377 = vmatpush.msra.mxu0 0.0
    %1378 = vmatpush.msra.mxu0 0.0
    %1379 = vmatpush.msra.mxu0 0.0
    %1380 = vmatpush.msra.mxu0 0.0
    %1381 = vmatpush.msra.mxu0 0.0
    %1382 = vmatpush.msra.mxu0 0.0
    %1383 = vmatpush.msra.mxu0 0.0
    %1384 = vmatpush.msra.mxu0 0.0
    %1385 = vmatpush.msra.mxu0 0.0
    %1386 = vmatpush.msra.mxu0 %v295
    %1387 = vmatpush.msra.mxu0 %v294
    %1388 = vmatpush.msra.mxu0 %v293
    %1389 = vmatpush.msra.mxu0 %v292
    %1390 = vmatmul.f32.gmra.mxu0 %v1372
    %v1391 = vpop.f32.mrf.mxu0
    %v1392 = vadd.f32 0.0, %v1391
    %1393 = vdwg.mxu0
    %v1394 = vadd.f32 %v1368, %v1392
    %v1395 = vxor.u32 %v1394, 2147483648
    %v1396 = vmul.f32 %v1395, 1.442695
    %v1397 = vpow.pop %v1396
    %v1398 = vadd.f32 %v1397, 1.0
    %v1399 = vrcp.pop %v1398
    %v1400 = vmul.f32 %v1398, %v1399
    %v1401 = vsub.f32 1.0, %v1400
    %v1402 = vmul.f32 %v1399, %v1401
    %v1403 = vadd.f32 %v1399, %v1402
    %vm1404 = vweird.f32 %v1398
    %vm1405 = vweird.f32 %v1399
    %vm1406 = vmor %vm1404, %vm1405
    %v1407 = vsel %vm1406, %v1399, %v1403
    %v1408 = vand.u32 2147483647, %v1398
    %vm1409 = vcmp.eq.f32.partialorder %v1408, 8.507059e+37
    %v1410 = vand.u32 %v1398, 2147483648
    %v1411 = vor.u32 1.1754944e-38, %v1410
    %v1412 = vsel %vm1409, %v1411, %v1407
    %v1413 = vmul.f32 1.0, %v1412
    %v1414 = vtanh.pop %v1394
    %v1415 = vmul.f32 %v1413, %v1194
    %1417 = vrot.lane.b32.xlu0 %v1414, 64
    %v1418 = vpop.permute.xlu0 %1417
    %v1420 = vmul.f32 %v1413, %v1418
    %1422 = vrot.lane.b32.xlu0 %v1420, 32
    %v1423 = vpop.permute.xlu0 %1422
    %v1425 = vadd.f32 %v1415, %v1423
    %v1426 = vtanh.pop %v1425
    %1428 = vrot.lane.b32.xlu0 %v1426, 64
    %v1429 = vpop.permute.xlu0 %1428
    %v1431 = vmul.f32 %v1413, %v1429
    %1432 = vmatpush.msra.mxu0 0.0
    %1433 = vmatpush.msra.mxu0 0.0
    %1434 = vmatpush.msra.mxu0 0.0
    %1435 = vmatpush.msra.mxu0 0.0
    %1436 = vmatpush.msra.mxu0 0.0
    %1437 = vmatpush.msra.mxu0 0.0
    %1438 = vmatpush.msra.mxu0 0.0
    %1439 = vmatpush.msra.mxu0 0.0
    %1440 = vmatpush.msra.mxu0 0.0
    %1441 = vmatpush.msra.mxu0 0.0
    %1442 = vmatpush.msra.mxu0 0.0
    %1443 = vmatpush.msra.mxu0 0.0
    %1444 = vmatpush.msra.mxu0 %v505
    %1445 = vmatpush.msra.mxu0 %v504
    %1446 = vmatpush.msra.mxu0 %v503
    %1447 = vmatpush.msra.mxu0 %v502
    %1448 = vmatmul.f32.gmra.mxu0 %v1372
    %v1449 = vpop.f32.mrf.mxu0
    %v1450 = vadd.f32 0.0, %v1449
    %1451 = vdwg.mxu0
    %v1452 = vadd.f32 %v527, %v1450
    %1454 = vrot.lane.b32.xlu0 %v1284, 32
    %v1455 = vpop.permute.xlu0 %1454
    %v1456 = vsel %vm138, %v1455, 0
    %1458 = vmatpush.msra.mxu0 0.0
    %1459 = vmatpush.msra.mxu0 0.0
    %1460 = vmatpush.msra.mxu0 0.0
    %1461 = vmatpush.msra.mxu0 0.0
    %1462 = vmatpush.msra.mxu0 0.0
    %1463 = vmatpush.msra.mxu0 0.0
    %1464 = vmatpush.msra.mxu0 0.0
    %1465 = vmatpush.msra.mxu0 0.0
    %1466 = vmatpush.msra.mxu0 0.0
    %1467 = vmatpush.msra.mxu0 0.0
    %1468 = vmatpush.msra.mxu0 0.0
    %1469 = vmatpush.msra.mxu0 0.0
    %1470 = vmatpush.msra.mxu0 %v533
    %1471 = vmatpush.msra.mxu0 %v532
    %1472 = vmatpush.msra.mxu0 %v531
    %1473 = vmatpush.msra.mxu0 %v530
    %1474 = vmatmul.f32.gmra.mxu0 %v1456
    %v1475 = vpop.f32.mrf.mxu0
    %v1476 = vadd.f32 0.0, %v1475
    %1477 = vdwg.mxu0
    %v1478 = vadd.f32 %v1452, %v1476
    %v1479 = vxor.u32 %v1478, 2147483648
    %v1480 = vmul.f32 %v1479, 1.442695
    %v1481 = vpow.pop %v1480
    %v1482 = vadd.f32 %v1481, 1.0
    %v1483 = vrcp.pop %v1482
    %v1484 = vmul.f32 %v1482, %v1483
    %v1485 = vsub.f32 1.0, %v1484
    %v1486 = vmul.f32 %v1483, %v1485
    %v1487 = vadd.f32 %v1483, %v1486
    %vm1488 = vweird.f32 %v1482
    %vm1489 = vweird.f32 %v1483
    %vm1490 = vmor %vm1488, %vm1489
    %v1491 = vsel %vm1490, %v1483, %v1487
    %v1492 = vand.u32 2147483647, %v1482
    %vm1493 = vcmp.eq.f32.partialorder %v1492, 8.507059e+37
    %v1494 = vand.u32 %v1482, 2147483648
    %v1495 = vor.u32 1.1754944e-38, %v1494
    %v1496 = vsel %vm1493, %v1495, %v1491
    %v1497 = vmul.f32 1.0, %v1496
    %v1498 = vtanh.pop %v1478
    %v1499 = vmul.f32 %v1497, %v1278
    %1501 = vrot.lane.b32.xlu0 %v1498, 64
    %v1502 = vpop.permute.xlu0 %1501
    %v1504 = vmul.f32 %v1497, %v1502
    %1506 = vrot.lane.b32.xlu0 %v1504, 32
    %v1507 = vpop.permute.xlu0 %1506
    %v1509 = vadd.f32 %v1499, %v1507
    %v1510 = vtanh.pop %v1509
    %1512 = vrot.lane.b32.xlu0 %v1510, 64
    %v1513 = vpop.permute.xlu0 %1512
    %v1515 = vmul.f32 %v1497, %v1513
    %1517 = vrot.lane.b32.xlu0 %v1347, 32
    %v1518 = vpop.permute.xlu0 %1517
    %v1519 = vsel %vm138, %v1518, 0
    %1521 = vmatpush.msra.mxu0 0.0
    %1522 = vmatpush.msra.mxu0 0.0
    %1523 = vmatpush.msra.mxu0 0.0
    %1524 = vmatpush.msra.mxu0 0.0
    %1525 = vmatpush.msra.mxu0 0.0
    %1526 = vmatpush.msra.mxu0 0.0
    %1527 = vmatpush.msra.mxu0 0.0
    %1528 = vmatpush.msra.mxu0 0.0
    %1529 = vmatpush.msra.mxu0 0.0
    %1530 = vmatpush.msra.mxu0 0.0
    %1531 = vmatpush.msra.mxu0 0.0
    %1532 = vmatpush.msra.mxu0 0.0
    %1533 = vmatpush.msra.mxu0 %v137
    %1534 = vmatpush.msra.mxu0 %v136
    %1535 = vmatpush.msra.mxu0 %v135
    %1536 = vmatpush.msra.mxu0 %v134
    %1537 = vmatmul.f32.gmra.mxu0 %v1519
    %v1538 = vpop.f32.mrf.mxu0
    %v1539 = vadd.f32 0.0, %v1538
    %1540 = vdwg.mxu0
    %v1541 = vadd.f32 %v132, %v1539
    %v1542 = vxor.u32 %v1541, 2147483648
    %v1543 = vmul.f32 %v1542, 1.442695
    %v1544 = vpow.pop %v1543
    %v1545 = vadd.f32 %v1544, 1.0
    %v1546 = vrcp.pop %v1545
    %v1547 = vmul.f32 %v1545, %v1546
    %v1548 = vsub.f32 1.0, %v1547
    %v1549 = vmul.f32 %v1546, %v1548
    %v1550 = vadd.f32 %v1546, %v1549
    %vm1551 = vweird.f32 %v1545
    %vm1552 = vweird.f32 %v1546
    %vm1553 = vmor %vm1551, %vm1552
    %v1554 = vsel %vm1553, %v1546, %v1550
    %v1555 = vand.u32 2147483647, %v1545
    %vm1556 = vcmp.eq.f32.partialorder %v1555, 8.507059e+37
    %v1557 = vand.u32 %v1545, 2147483648
    %v1558 = vor.u32 1.1754944e-38, %v1557
    %v1559 = vsel %vm1556, %v1558, %v1554
    %v1560 = vmul.f32 1.0, %v1559
    %v1561 = vtanh.pop %v1541
    %v1562 = vmul.f32 %v1560, %v1341
    %1564 = vrot.lane.b32.xlu0 %v1561, 64
    %v1565 = vpop.permute.xlu0 %1564
    %v1567 = vmul.f32 %v1560, %v1565
    %1569 = vrot.lane.b32.xlu0 %v1567, 32
    %v1570 = vpop.permute.xlu0 %1569
    %v1572 = vadd.f32 %v1562, %v1570
    %v1573 = vtanh.pop %v1572
    %1575 = vrot.lane.b32.xlu0 %v1573, 64
    %v1576 = vpop.permute.xlu0 %1575
    %v1578 = vmul.f32 %v1560, %v1576
    %1579 = vmatpush.msra.mxu0 0.0
    %1580 = vmatpush.msra.mxu0 0.0
    %1581 = vmatpush.msra.mxu0 0.0
    %1582 = vmatpush.msra.mxu0 0.0
    %1583 = vmatpush.msra.mxu0 0.0
    %1584 = vmatpush.msra.mxu0 0.0
    %1585 = vmatpush.msra.mxu0 0.0
    %1586 = vmatpush.msra.mxu0 0.0
    %1587 = vmatpush.msra.mxu0 0.0
    %1588 = vmatpush.msra.mxu0 0.0
    %1589 = vmatpush.msra.mxu0 0.0
    %1590 = vmatpush.msra.mxu0 0.0
    %1591 = vmatpush.msra.mxu0 %v267
    %1592 = vmatpush.msra.mxu0 %v266
    %1593 = vmatpush.msra.mxu0 %v265
    %1594 = vmatpush.msra.mxu0 %v264
    %1595 = vmatmul.f32.gmra.mxu0 %v1519
    %v1596 = vpop.f32.mrf.mxu0
    %v1597 = vadd.f32 0.0, %v1596
    %1598 = vdwg.mxu0
    %v1599 = vadd.f32 %v289, %v1597
    %1601 = vrot.lane.b32.xlu0 %v1431, 32
    %v1602 = vpop.permute.xlu0 %1601
    %v1603 = vsel %vm138, %v1602, 0
    %1605 = vmatpush.msra.mxu0 0.0
    %1606 = vmatpush.msra.mxu0 0.0
    %1607 = vmatpush.msra.mxu0 0.0
    %1608 = vmatpush.msra.mxu0 0.0
    %1609 = vmatpush.msra.mxu0 0.0
    %1610 = vmatpush.msra.mxu0 0.0
    %1611 = vmatpush.msra.mxu0 0.0
    %1612 = vmatpush.msra.mxu0 0.0
    %1613 = vmatpush.msra.mxu0 0.0
    %1614 = vmatpush.msra.mxu0 0.0
    %1615 = vmatpush.msra.mxu0 0.0
    %1616 = vmatpush.msra.mxu0 0.0
    %1617 = vmatpush.msra.mxu0 %v295
    %1618 = vmatpush.msra.mxu0 %v294
    %1619 = vmatpush.msra.mxu0 %v293
    %1620 = vmatpush.msra.mxu0 %v292
    %1621 = vmatmul.f32.gmra.mxu0 %v1603
    %v1622 = vpop.f32.mrf.mxu0
    %v1623 = vadd.f32 0.0, %v1622
    %1624 = vdwg.mxu0
    %v1625 = vadd.f32 %v1599, %v1623
    %v1626 = vxor.u32 %v1625, 2147483648
    %v1627 = vmul.f32 %v1626, 1.442695
    %v1628 = vpow.pop %v1627
    %v1629 = vadd.f32 %v1628, 1.0
    %v1630 = vrcp.pop %v1629
    %v1631 = vmul.f32 %v1629, %v1630
    %v1632 = vsub.f32 1.0, %v1631
    %v1633 = vmul.f32 %v1630, %v1632
    %v1634 = vadd.f32 %v1630, %v1633
    %vm1635 = vweird.f32 %v1629
    %vm1636 = vweird.f32 %v1630
    %vm1637 = vmor %vm1635, %vm1636
    %v1638 = vsel %vm1637, %v1630, %v1634
    %v1639 = vand.u32 2147483647, %v1629
    %vm1640 = vcmp.eq.f32.partialorder %v1639, 8.507059e+37
    %v1641 = vand.u32 %v1629, 2147483648
    %v1642 = vor.u32 1.1754944e-38, %v1641
    %v1643 = vsel %vm1640, %v1642, %v1638
    %v1644 = vmul.f32 1.0, %v1643
    %v1645 = vtanh.pop %v1625
    %v1646 = vmul.f32 %v1644, %v1425
    %1648 = vrot.lane.b32.xlu0 %v1645, 64
    %v1649 = vpop.permute.xlu0 %1648
    %v1651 = vmul.f32 %v1644, %v1649
    %1653 = vrot.lane.b32.xlu0 %v1651, 32
    %v1654 = vpop.permute.xlu0 %1653
    %v1656 = vadd.f32 %v1646, %v1654
    %v1657 = vtanh.pop %v1656
    %1659 = vrot.lane.b32.xlu0 %v1657, 64
    %v1660 = vpop.permute.xlu0 %1659
    %v1662 = vmul.f32 %v1644, %v1660
    %1663 = vmatpush.msra.mxu0 0.0
    %1664 = vmatpush.msra.mxu0 0.0
    %1665 = vmatpush.msra.mxu0 0.0
    %1666 = vmatpush.msra.mxu0 0.0
    %1667 = vmatpush.msra.mxu0 0.0
    %1668 = vmatpush.msra.mxu0 0.0
    %1669 = vmatpush.msra.mxu0 0.0
    %1670 = vmatpush.msra.mxu0 0.0
    %1671 = vmatpush.msra.mxu0 0.0
    %1672 = vmatpush.msra.mxu0 0.0
    %1673 = vmatpush.msra.mxu0 0.0
    %1674 = vmatpush.msra.mxu0 0.0
    %1675 = vmatpush.msra.mxu0 %v505
    %1676 = vmatpush.msra.mxu0 %v504
    %1677 = vmatpush.msra.mxu0 %v503
    %1678 = vmatpush.msra.mxu0 %v502
    %1679 = vmatmul.f32.gmra.mxu0 %v1603
    %v1680 = vpop.f32.mrf.mxu0
    %v1681 = vadd.f32 0.0, %v1680
    %1682 = vdwg.mxu0
    %v1683 = vadd.f32 %v527, %v1681
    %1685 = vrot.lane.b32.xlu0 %v1515, 32
    %v1686 = vpop.permute.xlu0 %1685
    %v1687 = vsel %vm138, %v1686, 0
    %1689 = vmatpush.msra.mxu0 0.0
    %1690 = vmatpush.msra.mxu0 0.0
    %1691 = vmatpush.msra.mxu0 0.0
    %1692 = vmatpush.msra.mxu0 0.0
    %1693 = vmatpush.msra.mxu0 0.0
    %1694 = vmatpush.msra.mxu0 0.0
    %1695 = vmatpush.msra.mxu0 0.0
    %1696 = vmatpush.msra.mxu0 0.0
    %1697 = vmatpush.msra.mxu0 0.0
    %1698 = vmatpush.msra.mxu0 0.0
    %1699 = vmatpush.msra.mxu0 0.0
    %1700 = vmatpush.msra.mxu0 0.0
    %1701 = vmatpush.msra.mxu0 %v533
    %1702 = vmatpush.msra.mxu0 %v532
    %1703 = vmatpush.msra.mxu0 %v531
    %1704 = vmatpush.msra.mxu0 %v530
    %1705 = vmatmul.f32.gmra.mxu0 %v1687
    %v1706 = vpop.f32.mrf.mxu0
    %v1707 = vadd.f32 0.0, %v1706
    %1708 = vdwg.mxu0
    %v1709 = vadd.f32 %v1683, %v1707
    %v1710 = vxor.u32 %v1709, 2147483648
    %v1711 = vmul.f32 %v1710, 1.442695
    %v1712 = vpow.pop %v1711
    %v1713 = vadd.f32 %v1712, 1.0
    %v1714 = vrcp.pop %v1713
    %v1715 = vmul.f32 %v1713, %v1714
    %v1716 = vsub.f32 1.0, %v1715
    %v1717 = vmul.f32 %v1714, %v1716
    %v1718 = vadd.f32 %v1714, %v1717
    %vm1719 = vweird.f32 %v1713
    %vm1720 = vweird.f32 %v1714
    %vm1721 = vmor %vm1719, %vm1720
    %v1722 = vsel %vm1721, %v1714, %v1718
    %v1723 = vand.u32 2147483647, %v1713
    %vm1724 = vcmp.eq.f32.partialorder %v1723, 8.507059e+37
    %v1725 = vand.u32 %v1713, 2147483648
    %v1726 = vor.u32 1.1754944e-38, %v1725
    %v1727 = vsel %vm1724, %v1726, %v1722
    %v1728 = vmul.f32 1.0, %v1727
    %v1729 = vtanh.pop %v1709
    %v1730 = vmul.f32 %v1728, %v1509
    %1732 = vrot.lane.b32.xlu0 %v1729, 64
    %v1733 = vpop.permute.xlu0 %1732
    %v1735 = vmul.f32 %v1728, %v1733
    %1737 = vrot.lane.b32.xlu0 %v1735, 32
    %v1738 = vpop.permute.xlu0 %1737
    %v1740 = vadd.f32 %v1730, %v1738
    %v1741 = vtanh.pop %v1740
    %1743 = vrot.lane.b32.xlu0 %v1741, 64
    %v1744 = vpop.permute.xlu0 %1743
    %v1746 = vmul.f32 %v1728, %v1744
    %1748 = vrot.lane.b32.xlu0 %v1578, 32
    %v1749 = vpop.permute.xlu0 %1748
    %v1750 = vsel %vm138, %v1749, 0
    %1752 = vmatpush.msra.mxu0 0.0
    %1753 = vmatpush.msra.mxu0 0.0
    %1754 = vmatpush.msra.mxu0 0.0
    %1755 = vmatpush.msra.mxu0 0.0
    %1756 = vmatpush.msra.mxu0 0.0
    %1757 = vmatpush.msra.mxu0 0.0
    %1758 = vmatpush.msra.mxu0 0.0
    %1759 = vmatpush.msra.mxu0 0.0
    %1760 = vmatpush.msra.mxu0 0.0
    %1761 = vmatpush.msra.mxu0 0.0
    %1762 = vmatpush.msra.mxu0 0.0
    %1763 = vmatpush.msra.mxu0 0.0
    %1764 = vmatpush.msra.mxu0 %v267
    %1765 = vmatpush.msra.mxu0 %v266
    %1766 = vmatpush.msra.mxu0 %v265
    %1767 = vmatpush.msra.mxu0 %v264
    %1768 = vmatmul.f32.gmra.mxu0 %v1750
    %v1769 = vpop.f32.mrf.mxu0
    %v1770 = vadd.f32 0.0, %v1769
    %1771 = vdwg.mxu0
    %v1772 = vadd.f32 %v289, %v1770
    %1774 = vrot.lane.b32.xlu0 %v1662, 32
    %v1775 = vpop.permute.xlu0 %1774
    %v1776 = vsel %vm138, %v1775, 0
    %1778 = vmatpush.msra.mxu0 0.0
    %1779 = vmatpush.msra.mxu0 0.0
    %1780 = vmatpush.msra.mxu0 0.0
    %1781 = vmatpush.msra.mxu0 0.0
    %1782 = vmatpush.msra.mxu0 0.0
    %1783 = vmatpush.msra.mxu0 0.0
    %1784 = vmatpush.msra.mxu0 0.0
    %1785 = vmatpush.msra.mxu0 0.0
    %1786 = vmatpush.msra.mxu0 0.0
    %1787 = vmatpush.msra.mxu0 0.0
    %1788 = vmatpush.msra.mxu0 0.0
    %1789 = vmatpush.msra.mxu0 0.0
    %1790 = vmatpush.msra.mxu0 %v295
    %1791 = vmatpush.msra.mxu0 %v294
    %1792 = vmatpush.msra.mxu0 %v293
    %1793 = vmatpush.msra.mxu0 %v292
    %1794 = vmatmul.f32.gmra.mxu0 %v1776
    %v1795 = vpop.f32.mrf.mxu0
    %v1796 = vadd.f32 0.0, %v1795
    %1797 = vdwg.mxu0
    %v1798 = vadd.f32 %v1772, %v1796
    %v1799 = vxor.u32 %v1798, 2147483648
    %v1800 = vmul.f32 %v1799, 1.442695
    %v1801 = vpow.pop %v1800
    %v1802 = vadd.f32 %v1801, 1.0
    %v1803 = vrcp.pop %v1802
    %v1804 = vmul.f32 %v1802, %v1803
    %v1805 = vsub.f32 1.0, %v1804
    %v1806 = vmul.f32 %v1803, %v1805
    %v1807 = vadd.f32 %v1803, %v1806
    %vm1808 = vweird.f32 %v1802
    %vm1809 = vweird.f32 %v1803
    %vm1810 = vmor %vm1808, %vm1809
    %v1811 = vsel %vm1810, %v1803, %v1807
    %v1812 = vand.u32 2147483647, %v1802
    %vm1813 = vcmp.eq.f32.partialorder %v1812, 8.507059e+37
    %v1814 = vand.u32 %v1802, 2147483648
    %v1815 = vor.u32 1.1754944e-38, %v1814
    %v1816 = vsel %vm1813, %v1815, %v1811
    %v1817 = vmul.f32 1.0, %v1816
    %v1818 = vtanh.pop %v1798
    %v1819 = vmul.f32 %v1817, %v1656
    %1821 = vrot.lane.b32.xlu0 %v1818, 64
    %v1822 = vpop.permute.xlu0 %1821
    %v1824 = vmul.f32 %v1817, %v1822
    %1826 = vrot.lane.b32.xlu0 %v1824, 32
    %v1827 = vpop.permute.xlu0 %1826
    %v1829 = vadd.f32 %v1819, %v1827
    %v1830 = vtanh.pop %v1829
    %1832 = vrot.lane.b32.xlu0 %v1830, 64
    %v1833 = vpop.permute.xlu0 %1832
    %v1835 = vmul.f32 %v1817, %v1833
    %1836 = vmatpush.msra.mxu0 0.0
    %1837 = vmatpush.msra.mxu0 0.0
    %1838 = vmatpush.msra.mxu0 0.0
    %1839 = vmatpush.msra.mxu0 0.0
    %1840 = vmatpush.msra.mxu0 0.0
    %1841 = vmatpush.msra.mxu0 0.0
    %1842 = vmatpush.msra.mxu0 0.0
    %1843 = vmatpush.msra.mxu0 0.0
    %1844 = vmatpush.msra.mxu0 0.0
    %1845 = vmatpush.msra.mxu0 0.0
    %1846 = vmatpush.msra.mxu0 0.0
    %1847 = vmatpush.msra.mxu0 0.0
    %1848 = vmatpush.msra.mxu0 %v505
    %1849 = vmatpush.msra.mxu0 %v504
    %1850 = vmatpush.msra.mxu0 %v503
    %1851 = vmatpush.msra.mxu0 %v502
    %1852 = vmatmul.f32.gmra.mxu0 %v1776
    %v1853 = vpop.f32.mrf.mxu0
    %v1854 = vadd.f32 0.0, %v1853
    %1855 = vdwg.mxu0
    %v1856 = vadd.f32 %v527, %v1854
    %1858 = vrot.lane.b32.xlu0 %v1746, 32
    %v1859 = vpop.permute.xlu0 %1858
    %v1860 = vsel %vm138, %v1859, 0
    %1862 = vmatpush.msra.mxu0 0.0
    %1863 = vmatpush.msra.mxu0 0.0
    %1864 = vmatpush.msra.mxu0 0.0
    %1865 = vmatpush.msra.mxu0 0.0
    %1866 = vmatpush.msra.mxu0 0.0
    %1867 = vmatpush.msra.mxu0 0.0
    %1868 = vmatpush.msra.mxu0 0.0
    %1869 = vmatpush.msra.mxu0 0.0
    %1870 = vmatpush.msra.mxu0 0.0
    %1871 = vmatpush.msra.mxu0 0.0
    %1872 = vmatpush.msra.mxu0 0.0
    %1873 = vmatpush.msra.mxu0 0.0
    %1874 = vmatpush.msra.mxu0 %v533
    %1875 = vmatpush.msra.mxu0 %v532
    %1876 = vmatpush.msra.mxu0 %v531
    %1877 = vmatpush.msra.mxu0 %v530
    %1878 = vmatmul.f32.gmra.mxu0 %v1860
    %v1879 = vpop.f32.mrf.mxu0
    %v1880 = vadd.f32 0.0, %v1879
    %1881 = vdwg.mxu0
    %v1882 = vadd.f32 %v1856, %v1880
    %v1883 = vxor.u32 %v1882, 2147483648
    %v1884 = vmul.f32 %v1883, 1.442695
    %v1885 = vpow.pop %v1884
    %v1886 = vadd.f32 %v1885, 1.0
    %v1887 = vrcp.pop %v1886
    %v1888 = vmul.f32 %v1886, %v1887
    %v1889 = vsub.f32 1.0, %v1888
    %v1890 = vmul.f32 %v1887, %v1889
    %v1891 = vadd.f32 %v1887, %v1890
    %vm1892 = vweird.f32 %v1886
    %vm1893 = vweird.f32 %v1887
    %vm1894 = vmor %vm1892, %vm1893
    %v1895 = vsel %vm1894, %v1887, %v1891
    %v1896 = vand.u32 2147483647, %v1886
    %vm1897 = vcmp.eq.f32.partialorder %v1896, 8.507059e+37
    %v1898 = vand.u32 %v1886, 2147483648
    %v1899 = vor.u32 1.1754944e-38, %v1898
    %v1900 = vsel %vm1897, %v1899, %v1895
    %v1901 = vmul.f32 1.0, %v1900
    %v1902 = vtanh.pop %v1882
    %v1903 = vmul.f32 %v1901, %v1740
    %1905 = vrot.lane.b32.xlu0 %v1902, 64
    %v1906 = vpop.permute.xlu0 %1905
    %v1908 = vmul.f32 %v1901, %v1906
    %1910 = vrot.lane.b32.xlu0 %v1908, 32
    %v1911 = vpop.permute.xlu0 %1910
    %v1913 = vadd.f32 %v1903, %v1911
    %v1914 = vtanh.pop %v1913
    %1916 = vrot.lane.b32.xlu0 %v1914, 64
    %v1917 = vpop.permute.xlu0 %1916
    %v1919 = vmul.f32 %v1901, %v1917
    %1921 = vrot.lane.b32.xlu0 %v1835, 32
    %v1922 = vpop.permute.xlu0 %1921
    %v1923 = vsel %vm138, %v1922, 0
    %1925 = vmatpush.msra.mxu0 0.0
    %1926 = vmatpush.msra.mxu0 0.0
    %1927 = vmatpush.msra.mxu0 0.0
    %1928 = vmatpush.msra.mxu0 0.0
    %1929 = vmatpush.msra.mxu0 0.0
    %1930 = vmatpush.msra.mxu0 0.0
    %1931 = vmatpush.msra.mxu0 0.0
    %1932 = vmatpush.msra.mxu0 0.0
    %1933 = vmatpush.msra.mxu0 0.0
    %1934 = vmatpush.msra.mxu0 0.0
    %1935 = vmatpush.msra.mxu0 0.0
    %1936 = vmatpush.msra.mxu0 0.0
    %1937 = vmatpush.msra.mxu0 %v505
    %1938 = vmatpush.msra.mxu0 %v504
    %1939 = vmatpush.msra.mxu0 %v503
    %1940 = vmatpush.msra.mxu0 %v502
    %1941 = vmatmul.f32.gmra.mxu0 %v1923
    %v1942 = vpop.f32.mrf.mxu0
    %v1943 = vadd.f32 0.0, %v1942
    %1944 = vdwg.mxu0
    %v1945 = vadd.f32 %v527, %v1943
    %1947 = vrot.lane.b32.xlu0 %v1919, 32
    %v1948 = vpop.permute.xlu0 %1947
    %v1949 = vsel %vm138, %v1948, 0
    %1951 = vmatpush.msra.mxu0 0.0
    %1952 = vmatpush.msra.mxu0 0.0
    %1953 = vmatpush.msra.mxu0 0.0
    %1954 = vmatpush.msra.mxu0 0.0
    %1955 = vmatpush.msra.mxu0 0.0
    %1956 = vmatpush.msra.mxu0 0.0
    %1957 = vmatpush.msra.mxu0 0.0
    %1958 = vmatpush.msra.mxu0 0.0
    %1959 = vmatpush.msra.mxu0 0.0
    %1960 = vmatpush.msra.mxu0 0.0
    %1961 = vmatpush.msra.mxu0 0.0
    %1962 = vmatpush.msra.mxu0 0.0
    %1963 = vmatpush.msra.mxu0 %v533
    %1964 = vmatpush.msra.mxu0 %v532
    %1965 = vmatpush.msra.mxu0 %v531
    %1966 = vmatpush.msra.mxu0 %v530
    %1967 = vmatmul.f32.gmra.mxu0 %v1949
    %v1968 = vpop.f32.mrf.mxu0
    %v1969 = vadd.f32 0.0, %v1968
    %1970 = vdwg.mxu0
    %v1971 = vadd.f32 %v1945, %v1969
    %v1972 = vxor.u32 %v1971, 2147483648
    %v1973 = vmul.f32 %v1972, 1.442695
    %v1974 = vpow.pop %v1973
    %v1975 = vadd.f32 %v1974, 1.0
    %v1976 = vrcp.pop %v1975
    %v1977 = vmul.f32 %v1975, %v1976
    %v1978 = vsub.f32 1.0, %v1977
    %v1979 = vmul.f32 %v1976, %v1978
    %v1980 = vadd.f32 %v1976, %v1979
    %vm1981 = vweird.f32 %v1975
    %vm1982 = vweird.f32 %v1976
    %vm1983 = vmor %vm1981, %vm1982
    %v1984 = vsel %vm1983, %v1976, %v1980
    %v1985 = vand.u32 2147483647, %v1975
    %vm1986 = vcmp.eq.f32.partialorder %v1985, 8.507059e+37
    %v1987 = vand.u32 %v1975, 2147483648
    %v1988 = vor.u32 1.1754944e-38, %v1987
    %v1989 = vsel %vm1986, %v1988, %v1984
    %v1990 = vmul.f32 1.0, %v1989
    %v1991 = vtanh.pop %v1971
    %v1992 = vmul.f32 %v1990, %v1913
    %1994 = vrot.lane.b32.xlu0 %v1991, 64
    %v1995 = vpop.permute.xlu0 %1994
    %v1997 = vmul.f32 %v1990, %v1995
    %1999 = vrot.lane.b32.xlu0 %v1997, 32
    %v2000 = vpop.permute.xlu0 %1999
    %v2002 = vadd.f32 %v1992, %v2000
    %v2003 = vtanh.pop %v2002
    %2005 = vrot.lane.b32.xlu0 %v2003, 64
    %v2006 = vpop.permute.xlu0 %2005
    %v2008 = vmul.f32 %v1990, %v2006
    %2010 = vrot.lane.b32.xlu0 %v822, 64
    %v2011 = vpop.permute.xlu0 %2010
    %2013 = vrot.lane.b32.xlu0 %v1053, 96
    %v2014 = vpop.permute.xlu0 %2013
    %2017 = vrot.lane.b32.xlu0 %v1746, 64
    %v2018 = vpop.permute.xlu0 %2017
    %2020 = vrot.lane.b32.xlu0 %v1919, 96
    %v2021 = vpop.permute.xlu0 %2020
    %v2023 = vsel %vm138, %v762, %v2011
    %vm2024 = vcmask 523264
    %v2025 = vsel %vm2024, %v2023, %v2014
    %vm2026 = vcmask 785408
    %v2027 = vsel %vm2026, %v2025, %v1284
    %v2028 = vsel %vm138, %v1686, %v2018
    %v2029 = vsel %vm2024, %v2028, %v2021
    %v2030 = vsel %vm2026, %v2029, %v2008
    %2031 = vst [vmem:[%s10] sm:$0xff] %v2027
    %2032 = vst [vmem:[%s10 + $0x8] sm:$0xff] %v2030
    %2034 = vst.msk [vmem:[%s11] sm:$0xff] %vm138, %v1749
    %2036 = vrot.lane.b32.xlu0 %v1572, 96
    %v2037 = vpop.permute.xlu0 %2036
    %2039 = vst.msk [vmem:[%s12] sm:$0xff] %vm138, %v2037
    %s2041 = scalar_lea.vmem %s11, 8
    %2042 = vst.msk [vmem:[%s2041] sm:$0xff] %vm138, %v1922
    %2044 = vrot.lane.b32.xlu0 %v1829, 96
    %v2045 = vpop.permute.xlu0 %2044
    %s2047 = scalar_lea.vmem %s12, 8
    %2048 = vst.msk [vmem:[%s2047] sm:$0xff] %vm138, %v2045
    %2050 = vrot.lane.b32.xlu0 %v2008, 32
    %v2051 = vpop.permute.xlu0 %2050
    %s2053 = scalar_lea.vmem %s11, 16
    %2054 = vst.msk [vmem:[%s2053] sm:$0xff] %vm138, %v2051
    %2056 = vrot.lane.b32.xlu0 %v2002, 96
    %v2057 = vpop.permute.xlu0 %2056
    %s2059 = scalar_lea.vmem %s12, 16
    %2060 = vst.msk [vmem:[%s2059] sm:$0xff] %vm138, %v2057
    // Predicated region
    $region46: #{encoder_forward.1} parent=1 // pred_check
      _
    $region47: #{encoder_forward.1} parent=1 // pred_check_branch
      %2062 = sbr.rel (0) target = $region49
    $region48: #{encoder_forward.1} parent=1 // pred_region
      _
    $region49: #{encoder_forward.1} parent=1 // pred_fallthru
      _
    // Predicated region
    $region50: #{encoder_forward.1} parent=1 // pred_check
      _
    $region51: #{encoder_forward.1} parent=1 // pred_check_branch
      %2064 = sbr.rel (0) target = $region53
    $region52: #{encoder_forward.1} parent=1 // pred_region
      _
    $region53: #{encoder_forward.1} parent=1 // pred_fallthru
      _
    // Predicated region
    $region54: #{encoder_forward.1} parent=1 // pred_check
      _
    $region55: #{encoder_forward.1} parent=1 // pred_check_branch
      %2066 = sbr.rel (0) target = $region57
    $region56: #{encoder_forward.1} parent=1 // pred_region
      _
    $region57: #{encoder_forward.1} parent=1 // pred_fallthru
      _
    // Predicated region
    $region58: #{encoder_forward.1} parent=1 // pred_check
      _
    $region59: #{encoder_forward.1} parent=1 // pred_check_branch
      %2068 = sbr.rel (0) target = $region61
    $region60: #{encoder_forward.1} parent=1 // pred_region
      _
    $region61: #{encoder_forward.1} parent=1 // pred_fallthru
      _
    // Predicated region
    $region62: #{encoder_forward.1} parent=1 // pred_check
      _
    $region63: #{encoder_forward.1} parent=1 // pred_check_branch
      %2070 = sbr.rel (0) target = $region65
    $region64: #{encoder_forward.1} parent=1 // pred_region
      _
    $region65: #{encoder_forward.1} parent=1 // pred_fallthru
      _
    // Predicated region
    $region66: #{encoder_forward.1} parent=1 // pred_check
      _
    $region67: #{encoder_forward.1} parent=1 // pred_check_branch
      %2072 = sbr.rel (0) target = $region69
    $region68: #{encoder_forward.1} parent=1 // pred_region
      _
    $region69: #{encoder_forward.1} parent=1 // pred_fallthru
      _
    %2073 = vsyncpa [#allocation3], 1

</llo_original>
